<compile_context>
chip_gen: v6e
topology: v6e:2x2x1
jax: 0.10.0
libtpu: 0.0.40
codegen_flags: <defaults>
</compile_context>

<pallas_src>
import functools

import jax
import jax.numpy as jnp
from jax import lax
from jax.experimental import pallas as pl
from jax.experimental.pallas import tpu as pltpu


# ---------------------------------------------------------------------------
# Static-shape helpers
# ---------------------------------------------------------------------------
def _round_up(n, m):
    return ((n + m - 1) // m) * m


def _vmem_limit(need_bytes):
    """Explicit scoped-VMEM request: 2x the block footprint, clamped to a range
    valid on every generation (v5e scoped default is only 16 MiB; v7x physical
    VMEM is 64 MiB)."""
    return int(min(max(2 * int(need_bytes), 32 * 1024 * 1024), 64 * 1024 * 1024))


def _row_tile(m, cap=512):
    """Largest multiple-of-16 divisor of m that is <= cap (m is a multiple of 16)."""
    if m <= cap:
        return m
    best = 16
    for t in range(16, cap + 1, 16):
        if m % t == 0:
            best = t
    return best


def _time_tile(s, cap=16):
    """Timesteps per recurrent grid step.  Time-major blocks put t_inner on the
    leading (untiled) block axis, so any divisor of s is layout-clean; cap ~16
    keeps the gi/out blocks comfortably inside v7x's 64 MiB VMEM."""
    if s <= cap:
        return s
    for t in range(cap, 0, -1):
        if s % t == 0:
            return t
    return 1


def _batch_tile(bp, cap=256):
    """Batch-block size (bp is a multiple of 16).  Prefer >= 2 blocks when the
    padded batch allows it so the leading 'parallel' grid axis can shard across
    v7x's two TensorCores; cap at 256 to fill the 256-row MXU on v6e/v7x."""
    if bp < 32:
        return bp
    limit = min(cap, bp // 2)
    best = 16
    for t in range(16, limit + 1, 16):
        if bp % t == 0:
            best = t
    return best


def _single_buffered(block_shape, index_map):
    """BlockSpec for constant-index blocks: single-buffered (halves their VMEM
    footprint).  Falls back to the default spec if this jax build does not
    expose pipeline_mode."""
    try:
        return pl.BlockSpec(block_shape, index_map, pipeline_mode=pl.Buffered(1))
    except TypeError:  # older API without pipeline_mode
        return pl.BlockSpec(block_shape, index_map)


# ---------------------------------------------------------------------------
# Pallas kernels
# ---------------------------------------------------------------------------
def _input_proj_kernel(x_ref, wi_ref, bi_ref, gi_ref):
    """Gi = x @ [Wir|Wiz|Win] + fused biases for a tile of (time*batch) rows.
    bf16 operands, f32 accumulation, bf16 output (halves the HBM round trip)."""
    acc = jnp.dot(x_ref[...], wi_ref[...], preferred_element_type=jnp.float32)
    gi_ref[...] = (acc + bi_ref[...]).astype(gi_ref.dtype)


def _gru_recurrent_kernel(gi_ref, wh_ref, bhn_ref, out_ref, h_scr, *,
                          t_inner, hidden):
    """GRU recurrence over a time-major (t_inner, bb, .) block.
    Grid = (batch blocks [parallel], time blocks [arbitrary]).

    PyTorch gate equations (gate order r, z, n):
        r = sigmoid(Wir x + bir + Whr h + bhr)
        z = sigmoid(Wiz x + biz + Whz h + bhz)
        n = tanh  (Win x + bin + r * (Whn h + bhn))
        h = (1 - z) * n + z * h_prev        (computed as n + z*(h_prev - n))
    gi already contains Wi x + (bir+bhr | biz+bhz | bin); bhn stays separate
    because it sits inside the r-gated term.
    """
    t = pl.program_id(1)

    @pl.when(t == 0)
    def _():
        h_scr[...] = jnp.zeros_like(h_scr)            # h0 = zeros per batch block

    H = hidden
    bb = h_scr.shape[0]
    wh = wh_ref[...]                                  # bf16 (H, 3H) [Whr|Whz|Whn]
    bhn = jnp.broadcast_to(bhn_ref[...], (bb, H))     # hoisted: broadcast once

    def step(i, h):
        gi = gi_ref[i]                                # bf16 (bb, 3H), lane-dense
        gh = jnp.dot(h.astype(jnp.bfloat16), wh,
                     preferred_element_type=jnp.float32)            # f32 (bb, 3H)
        r = jax.nn.sigmoid(gi[:, 0 * H:1 * H].astype(jnp.float32)
                           + gh[:, 0 * H:1 * H])
        z = jax.nn.sigmoid(gi[:, 1 * H:2 * H].astype(jnp.float32)
                           + gh[:, 1 * H:2 * H])
        n = jnp.tanh(gi[:, 2 * H:3 * H].astype(jnp.float32)
                     + r * (gh[:, 2 * H:3 * H] + bhn))
        h_new = n + z * (h - n)
        out_ref[i] = h_new.astype(out_ref.dtype)      # (bb, H) time-major store
        return h_new

    # Bounded unroll keeps vreg pressure in check at large bb*t_inner.
    h = lax.fori_loop(0, t_inner, step, h_scr[...], unroll=min(t_inner, 8))
    h_scr[...] = h


def _fc_kernel(x_ref, w_ref, b_ref, o_ref):
    """Tiled FC: reduction grid over timesteps; f32 accumulation into the
    resident output block, initialized with the bias at step 0."""
    t = pl.program_id(0)

    @pl.when(t == 0)
    def _():
        o_ref[...] = jnp.broadcast_to(b_ref[...], o_ref.shape)

    o_ref[...] += jnp.dot(x_ref[0], w_ref[0],
                          preferred_element_type=jnp.float32)


# ---------------------------------------------------------------------------
# Wrappers
# ---------------------------------------------------------------------------
def input_proj(x2, wi, bi):
    """x2: (M, Din) bf16, wi: (Din, 3H) bf16, bi: (1, 3H) f32 -> (M, 3H) bf16."""
    m, d = x2.shape
    g = wi.shape[1]
    tm = _row_tile(m)
    vmem = _vmem_limit(2 * (tm * d * 2 + tm * g * 2) + d * g * 2 + g * 4)
    return pl.pallas_call(
        _input_proj_kernel,
        out_shape=jax.ShapeDtypeStruct((m, g), jnp.bfloat16),
        grid=(m // tm,),
        in_specs=[pl.BlockSpec((tm, d), lambda i: (i, 0)),
                  _single_buffered((d, g), lambda i: (0, 0)),
                  _single_buffered((1, g), lambda i: (0, 0))],
        out_specs=pl.BlockSpec((tm, g), lambda i: (i, 0)),
        compiler_params=pltpu.CompilerParams(
            dimension_semantics=("parallel",),
            vmem_limit_bytes=vmem),
    )(x2, wi, bi)


def gru_layer(x_tm, wi, wh, bi, bhn):
    """x_tm: (S, Bp, Din) time-major bf16 -> (S, Bp, Hp) time-major bf16."""
    s, bp, d_in = x_tm.shape
    hp = wh.shape[0]
    g = 3 * hp

    # 1) Hoisted input projections for ALL timesteps (off the serial path).
    gi = input_proj(x_tm.reshape(s * bp, d_in), wi, bi).reshape(s, bp, g)

    # 2) Serial recurrence, t_inner timesteps per grid step.
    t_inner = _time_tile(s)
    bb = _batch_tile(bp)
    kernel = functools.partial(_gru_recurrent_kernel,
                               t_inner=t_inner, hidden=hp)
    vmem = _vmem_limit(2 * (t_inner * bb * g * 2)        # gi blocks (double buffered)
                       + 2 * (t_inner * bb * hp * 2)     # out blocks
                       + hp * g * 2 + hp * 4             # wh + bhn (single buffered)
                       + bb * hp * 4)                    # h scratch
    return pl.pallas_call(
        kernel,
        out_shape=jax.ShapeDtypeStruct((s, bp, hp), jnp.bfloat16),
        grid=(bp // bb, s // t_inner),
        in_specs=[pl.BlockSpec((t_inner, bb, g), lambda b, t: (t, b, 0)),
                  _single_buffered((hp, g), lambda b, t: (0, 0)),
                  _single_buffered((1, hp), lambda b, t: (0, 0))],
        out_specs=pl.BlockSpec((t_inner, bb, hp), lambda b, t: (t, b, 0)),
        scratch_shapes=[pltpu.VMEM((bb, hp), jnp.float32)],
        compiler_params=pltpu.CompilerParams(
            # batch blocks are independent (megacore-shardable on v7x);
            # time carries the hidden state and must stay sequential.
            dimension_semantics=("parallel", "arbitrary"),
            vmem_limit_bytes=vmem),
    )(gi, wh, bhn)


def fc(h_tm, fw, fb):
    """h_tm: (S, Bp, Hp) bf16, fw: (S, Hp, Cp) bf16, fb: (1, Cp) f32 -> (Bp, Cp) f32.
    Reduction grid over S (Hp-row chunks of the S*Hp contraction) so neither the
    flattened activation nor the full FC weight is ever resident in VMEM."""
    s, bp, hp = h_tm.shape
    cp = fw.shape[2]
    vmem = _vmem_limit(2 * (bp * hp * 2 + hp * cp * 2) + bp * cp * 4 + cp * 4)
    # TODO(synk): add a parallel grid over Cp when num_classes is large (> ~512).
    return pl.pallas_call(
        _fc_kernel,
        out_shape=jax.ShapeDtypeStruct((bp, cp), jnp.float32),
        grid=(s,),
        in_specs=[pl.BlockSpec((1, bp, hp), lambda t: (t, 0, 0)),
                  pl.BlockSpec((1, hp, cp), lambda t: (t, 0, 0)),
                  _single_buffered((1, cp), lambda t: (0, 0))],
        out_specs=pl.BlockSpec((bp, cp), lambda t: (0, 0)),
        compiler_params=pltpu.CompilerParams(
            dimension_semantics=("arbitrary",),
            vmem_limit_bytes=vmem),
    )(h_tm, fw, fb)


# ---------------------------------------------------------------------------
# Parameter fusion + padding (zero padding is mathematically exact here)
# ---------------------------------------------------------------------------
def _prep_layer(p, d_in, hp):
    """Fuse per-gate weights into [r|z|n] column blocks, zero-pad to
    (d_in, 3*hp) / (hp, 3*hp) and cast weights to bf16 (biases stay f32).
    Padded hidden units stay identically zero through the recurrence."""
    def pad2(w, r, c):
        return jnp.pad(w, ((0, r - w.shape[0]), (0, c - w.shape[1])))
    wi = jnp.concatenate([pad2(p["wir"], d_in, hp),
                          pad2(p["wiz"], d_in, hp),
                          pad2(p["win"], d_in, hp)], axis=1).astype(jnp.bfloat16)
    wh = jnp.concatenate([pad2(p["whr"], hp, hp),
                          pad2(p["whz"], hp, hp),
                          pad2(p["whn"], hp, hp)], axis=1).astype(jnp.bfloat16)
    bi = jnp.concatenate([pad2(p["br"], 1, hp),
                          pad2(p["bz"], 1, hp),
                          pad2(p["bin"], 1, hp)], axis=1)        # f32
    bhn = pad2(p["bhn"], 1, hp)                                  # f32
    return wi, wh, bi, bhn


def gru_model_forward(x, layer_params, fc_w, fc_b):
    """Full module forward: stacked GRU layers -> flatten -> Linear."""
    b, s, _ = x.shape
    h_logical = layer_params[0]["whr"].shape[0]
    c = fc_w.shape[1]

    bp = _round_up(b, 16)            # sublane padding (bf16 packs 16 rows / vreg)
    hp = _round_up(h_logical, 128)   # lane padding
    cp = _round_up(c, 128)

    # Time-major (S, Bp, D) bf16 activations: every per-step slice inside the
    # recurrence is a naturally tiled (bb, H) block and layers chain transposeless.
    h = jnp.swapaxes(x, 0, 1)
    h = jnp.pad(h, ((0, 0), (0, bp - b), (0, 0))).astype(jnp.bfloat16)

    for p in layer_params:
        d_in = h.shape[-1]           # D for layer 0, Hp afterwards
        wi, wh, bi, bhn = _prep_layer(p, d_in, hp)
        h = gru_layer(h, wi, wh, bi, bhn)

    # FC over the flattened (t, h) axis, expressed as a sum over timesteps so the
    # time-major layout feeds it directly.  fc_w rows are ordered t*H + h, so
    # reshape to (S, H, C), zero-pad the padded hidden rows / class cols, cast.
    fw = jnp.pad(fc_w.reshape(s, h_logical, c),
                 ((0, 0), (0, hp - h_logical), (0, cp - c))).astype(jnp.bfloat16)
    fb = jnp.pad(fc_b, ((0, 0), (0, cp - c)))
    out = fc(h, fw, fb)
    return out[:b, :c]


# ---------------------------------------------------------------------------
# Deterministic parameter init (PyTorch-style U(-1/sqrt(H), 1/sqrt(H)))
# ---------------------------------------------------------------------------
def init_params(key, num_classes, input_size, hidden_size, num_layers, seq_length):
    k = 1.0 / jnp.sqrt(hidden_size)
    layer_params = []
    for layer in range(num_layers):
        d_in = input_size if layer == 0 else hidden_size
        key, *ks = jax.random.split(key, 11)
        u = lambda kk, shape: jax.random.uniform(kk, shape, jnp.float32, -k, k)
        p = {
            "wir": u(ks[0], (d_in, hidden_size)),
            "wiz": u(ks[1], (d_in, hidden_size)),
            "win": u(ks[2], (d_in, hidden_size)),
            "whr": u(ks[3], (hidden_size, hidden_size)),
            "whz": u(ks[4], (hidden_size, hidden_size)),
            "whn": u(ks[5], (hidden_size, hidden_size)),
            # combined r/z biases (bir+bhr, biz+bhz); n biases kept separate
            "br": u(ks[6], (1, hidden_size)) + u(ks[7], (1, hidden_size)),
            "bz": u(ks[8], (1, hidden_size)) + u(ks[9], (1, hidden_size)),
        }
        key, k1, k2 = jax.random.split(key, 3)
        p["bin"] = u(k1, (1, hidden_size))
        p["bhn"] = u(k2, (1, hidden_size))
        layer_params.append(p)

    key, k1, k2 = jax.random.split(key, 3)
    kf = 1.0 / jnp.sqrt(hidden_size * seq_length)
    fc_w = jax.random.uniform(k1, (hidden_size * seq_length, num_classes),
                              jnp.float32, -kf, kf)
    fc_b = jax.random.uniform(k2, (1, num_classes), jnp.float32, -kf, kf)
    return layer_params, fc_w, fc_b


# ---------------------------------------------------------------------------
# Pure-JAX f32 reference (same math, unpadded) for a correctness check
# ---------------------------------------------------------------------------
def reference_forward(x, layer_params, fc_w, fc_b):
    h_seq = x
    for p in layer_params:
        B = h_seq.shape[0]
        H = p["whr"].shape[0]

        def step(h_prev, x_t):
            r = jax.nn.sigmoid(x_t @ p["wir"] + h_prev @ p["whr"] + p["br"])
            z = jax.nn.sigmoid(x_t @ p["wiz"] + h_prev @ p["whz"] + p["bz"])
            n = jnp.tanh(x_t @ p["win"] + p["bin"]
                         + r * (h_prev @ p["whn"] + p["bhn"]))
            h = (1.0 - z) * n + z * h_prev
            return h, h

        h0 = jnp.zeros((B, H), jnp.float32)
        _, outs = jax.lax.scan(step, h0, jnp.swapaxes(h_seq, 0, 1))
        h_seq = jnp.swapaxes(outs, 0, 1)
    flat = h_seq.reshape(h_seq.shape[0], -1)
    return flat @ fc_w + fc_b


# ---------------------------------------------------------------------------
if __name__ == "__main__":
    # Small shapes consistent with the module's forward (batch_first GRU + FC).
    batch = 2
    input_size = 4
    hidden_size = 32
    num_layers = 2
    seq_length = 8
    num_classes = 5

    key = jax.random.PRNGKey(0)
    key, kx = jax.random.split(key)
    x = jax.random.normal(kx, (batch, seq_length, input_size), jnp.float32)

    layer_params, fc_w, fc_b = init_params(
        key, num_classes, input_size, hidden_size, num_layers, seq_length)

    fwd = jax.jit(gru_model_forward)
    out = jax.block_until_ready(fwd(x, layer_params, fc_w, fc_b))

    ref = reference_forward(x, layer_params, fc_w, fc_b)
    assert out.shape == (batch, num_classes)
    max_err = float(jnp.max(jnp.abs(out - ref)))
    # bf16 weights/activations on the MXU -> loosened tolerance vs the f32 reference.
    assert jnp.allclose(out, ref, atol=2e-2, rtol=2e-2), \
        f"mismatch vs reference (max abs err {max_err})"

    print("KERNEL_OK")
</pallas_src>

<mosaic_0001>
module attributes {stable_mosaic.version = 11 : i64} {
  func.func @_input_proj_kernel(%arg0: i32, %arg1: memref<128x128xbf16, #tpu.memory_space<vmem>>, %arg2: memref<128x384xbf16, #tpu.memory_space<vmem>>, %arg3: memref<1x384xf32, #tpu.memory_space<vmem>>, %arg4: memref<128x384xbf16, #tpu.memory_space<vmem>>) attributes {dimension_semantics = [#tpu.dimension_semantics<parallel>], iteration_bounds = array<i64: 1>, scalar_prefetch = 0 : i64, scratch_operands = 0 : i64, tpu.core_type = #tpu.core_type<tc>, window_params = [{transform_indices = @transform_0, window_bounds = array<i64: 128, 128>}, {pipeline_mode = #tpu.pipeline_mode<synchronous>, transform_indices = @transform_1, window_bounds = array<i64: 128, 384>}, {pipeline_mode = #tpu.pipeline_mode<synchronous>, transform_indices = @transform_2, window_bounds = array<i64: 1, 384>}, {transform_indices = @transform_3, window_bounds = array<i64: 128, 384>}]} {
    %c0 = arith.constant 0 : index
    %c0_0 = arith.constant 0 : index
    %0 = vector.load %arg1[%c0, %c0_0] : memref<128x128xbf16, #tpu.memory_space<vmem>>, vector<128x128xbf16>
    %c0_1 = arith.constant 0 : index
    %c0_2 = arith.constant 0 : index
    %1 = vector.load %arg2[%c0_1, %c0_2] : memref<128x384xbf16, #tpu.memory_space<vmem>>, vector<128x384xbf16>
    %cst = arith.constant dense<0.000000e+00> : vector<128x384xf32>
    %2 = tpu.matmul %0, %1, %cst {dimension_numbers = #tpu.dot_dimension_numbers<[1], [0], [0], [1], [0, 0, 1, 1], [], []>} : vector<128x128xbf16>, vector<128x384xbf16>, vector<128x384xf32> -> vector<128x384xf32>
    %c0_3 = arith.constant 0 : index
    %c0_4 = arith.constant 0 : index
    %3 = vector.load %arg3[%c0_3, %c0_4] : memref<1x384xf32, #tpu.memory_space<vmem>>, vector<1x384xf32>
    %4 = vector.broadcast %3 : vector<1x384xf32> to vector<128x384xf32>
    %5 = arith.addf %2, %4 : vector<128x384xf32>
    %6 = arith.truncf %5 : vector<128x384xf32> to vector<128x384xbf16>
    %c0_5 = arith.constant 0 : index
    %c0_6 = arith.constant 0 : index
    %7 = vector.load %arg4[%c0_5, %c0_6] : memref<128x384xbf16, #tpu.memory_space<vmem>>, vector<128x384xbf16>
    tpu.vector_store %arg4[%c0_5, %c0_6], %6 {strides = array<i32>} : memref<128x384xbf16, #tpu.memory_space<vmem>>, vector<128x384xbf16>,
    return
  }
  func.func @transform_0(%arg0: i32) -> (i32, i32) {
    %c0_i32 = arith.constant 0 : i32
    %c0_i32_0 = arith.constant 0 : i32
    return %arg0, %c0_i32 : i32, i32
  }
  func.func @transform_1(%arg0: i32) -> (i32, i32) {
    %c0_i32 = arith.constant 0 : i32
    %c0_i32_0 = arith.constant 0 : i32
    %c0_i32_1 = arith.constant 0 : i32
    return %c0_i32, %c0_i32_0 : i32, i32
  }
  func.func @transform_2(%arg0: i32) -> (i32, i32) {
    %c0_i32 = arith.constant 0 : i32
    %c0_i32_0 = arith.constant 0 : i32
    %c0_i32_1 = arith.constant 0 : i32
    return %c0_i32, %c0_i32_0 : i32, i32
  }
  func.func @transform_3(%arg0: i32) -> (i32, i32) {
    %c0_i32 = arith.constant 0 : i32
    %c0_i32_0 = arith.constant 0 : i32
    return %arg0, %c0_i32 : i32, i32
  }
}

module attributes {stable_mosaic.version = 11 : i64} {
  func.func @_input_proj_kernel(%arg0: i32, %arg1: memref<128x4xbf16, #tpu.memory_space<vmem>>, %arg2: memref<4x384xbf16, #tpu.memory_space<vmem>>, %arg3: memref<1x384xf32, #tpu.memory_space<vmem>>, %arg4: memref<128x384xbf16, #tpu.memory_space<vmem>>) attributes {dimension_semantics = [#tpu.dimension_semantics<parallel>], iteration_bounds = array<i64: 1>, scalar_prefetch = 0 : i64, scratch_operands = 0 : i64, tpu.core_type = #tpu.core_type<tc>, window_params = [{transform_indices = @transform_0, window_bounds = array<i64: 128, 4>}, {pipeline_mode = #tpu.pipeline_mode<synchronous>, transform_indices = @transform_1, window_bounds = array<i64: 4, 384>}, {pipeline_mode = #tpu.pipeline_mode<synchronous>, transform_indices = @transform_2, window_bounds = array<i64: 1, 384>}, {transform_indices = @transform_3, window_bounds = array<i64: 128, 384>}]} {
    %c0 = arith.constant 0 : index
    %c0_0 = arith.constant 0 : index
    %0 = vector.load %arg1[%c0, %c0_0] : memref<128x4xbf16, #tpu.memory_space<vmem>>, vector<128x4xbf16>
    %c0_1 = arith.constant 0 : index
    %c0_2 = arith.constant 0 : index
    %1 = vector.load %arg2[%c0_1, %c0_2] : memref<4x384xbf16, #tpu.memory_space<vmem>>, vector<4x384xbf16>
    %cst = arith.constant dense<0.000000e+00> : vector<128x384xf32>
    %2 = tpu.matmul %0, %1, %cst {dimension_numbers = #tpu.dot_dimension_numbers<[1], [0], [0], [1], [0, 0, 1, 1], [], []>} : vector<128x4xbf16>, vector<4x384xbf16>, vector<128x384xf32> -> vector<128x384xf32>
    %c0_3 = arith.constant 0 : index
    %c0_4 = arith.constant 0 : index
    %3 = vector.load %arg3[%c0_3, %c0_4] : memref<1x384xf32, #tpu.memory_space<vmem>>, vector<1x384xf32>
    %4 = vector.broadcast %3 : vector<1x384xf32> to vector<128x384xf32>
    %5 = arith.addf %2, %4 : vector<128x384xf32>
    %6 = arith.truncf %5 : vector<128x384xf32> to vector<128x384xbf16>
    %c0_5 = arith.constant 0 : index
    %c0_6 = arith.constant 0 : index
    %7 = vector.load %arg4[%c0_5, %c0_6] : memref<128x384xbf16, #tpu.memory_space<vmem>>, vector<128x384xbf16>
    tpu.vector_store %arg4[%c0_5, %c0_6], %6 {strides = array<i32>} : memref<128x384xbf16, #tpu.memory_space<vmem>>, vector<128x384xbf16>,
    return
  }
  func.func @transform_0(%arg0: i32) -> (i32, i32) {
    %c0_i32 = arith.constant 0 : i32
    %c0_i32_0 = arith.constant 0 : i32
    return %arg0, %c0_i32 : i32, i32
  }
  func.func @transform_1(%arg0: i32) -> (i32, i32) {
    %c0_i32 = arith.constant 0 : i32
    %c0_i32_0 = arith.constant 0 : i32
    %c0_i32_1 = arith.constant 0 : i32
    return %c0_i32, %c0_i32_0 : i32, i32
  }
  func.func @transform_2(%arg0: i32) -> (i32, i32) {
    %c0_i32 = arith.constant 0 : i32
    %c0_i32_0 = arith.constant 0 : i32
    %c0_i32_1 = arith.constant 0 : i32
    return %c0_i32, %c0_i32_0 : i32, i32
  }
  func.func @transform_3(%arg0: i32) -> (i32, i32) {
    %c0_i32 = arith.constant 0 : i32
    %c0_i32_0 = arith.constant 0 : i32
    return %arg0, %c0_i32 : i32, i32
  }
}

module attributes {stable_mosaic.version = 11 : i64} {
  func.func @_gru_recurrent_kernel(%arg0: i32, %arg1: i32, %arg2: memref<8x16x384xbf16, #tpu.memory_space<vmem>>, %arg3: memref<128x384xbf16, #tpu.memory_space<vmem>>, %arg4: memref<1x128xf32, #tpu.memory_space<vmem>>, %arg5: memref<8x16x128xbf16, #tpu.memory_space<vmem>>, %arg6: memref<16x128xf32, #tpu.memory_space<vmem>>) attributes {dimension_semantics = [#tpu.dimension_semantics<parallel>, #tpu.dimension_semantics<arbitrary>], iteration_bounds = array<i64: 1, 1>, scalar_prefetch = 0 : i64, scratch_operands = 1 : i64, tpu.core_type = #tpu.core_type<tc>, window_params = [{transform_indices = @transform_0, window_bounds = array<i64: 8, 16, 384>}, {pipeline_mode = #tpu.pipeline_mode<synchronous>, transform_indices = @transform_1, window_bounds = array<i64: 128, 384>}, {pipeline_mode = #tpu.pipeline_mode<synchronous>, transform_indices = @transform_2, window_bounds = array<i64: 1, 128>}, {transform_indices = @transform_3, window_bounds = array<i64: 8, 16, 128>}]} {
    %c0_i32 = arith.constant 0 : i32
    %0 = arith.cmpi eq, %arg1, %c0_i32 : i32
    %1 = arith.extui %0 : i1 to i32
    %c0_i32_0 = arith.constant 0 : i32
    %2 = arith.cmpi ne, %1, %c0_i32_0 : i32
    scf.if %2 {
      %cst_64 = arith.constant 0.000000e+00 : f32
      %313 = vector.broadcast %cst_64 : f32 to vector<16x128xf32>
      %c0_65 = arith.constant 0 : index
      %c0_66 = arith.constant 0 : index
      %314 = vector.load %arg6[%c0_65, %c0_66] : memref<16x128xf32, #tpu.memory_space<vmem>>, vector<16x128xf32>
      tpu.vector_store %arg6[%c0_65, %c0_66], %313 {strides = array<i32>} : memref<16x128xf32, #tpu.memory_space<vmem>>, vector<16x128xf32>,
    } else {
    }
    %c0 = arith.constant 0 : index
    %c0_1 = arith.constant 0 : index
    %3 = vector.load %arg3[%c0, %c0_1] : memref<128x384xbf16, #tpu.memory_space<vmem>>, vector<128x384xbf16>
    %c0_2 = arith.constant 0 : index
    %c0_3 = arith.constant 0 : index
    %4 = vector.load %arg4[%c0_2, %c0_3] : memref<1x128xf32, #tpu.memory_space<vmem>>, vector<1x128xf32>
    %5 = vector.shape_cast %4 : vector<1x128xf32> to vector<1x128xf32>
    %6 = vector.broadcast %5 : vector<1x128xf32> to vector<16x128xf32>
    %c0_4 = arith.constant 0 : index
    %c0_5 = arith.constant 0 : index
    %7 = vector.load %arg6[%c0_4, %c0_5] : memref<16x128xf32, #tpu.memory_space<vmem>>, vector<16x128xf32>
    %c0_i32_6 = arith.constant 0 : i32
    %8 = arith.index_cast %c0_i32_6 : i32 to index
    %c0_7 = arith.constant 0 : index
    %c0_8 = arith.constant 0 : index
    %9 = vector.load %arg2[%8, %c0_7, %c0_8] : memref<8x16x384xbf16, #tpu.memory_space<vmem>>, vector<1x16x384xbf16>
    %10 = vector.shape_cast %9 : vector<1x16x384xbf16> to vector<16x384xbf16>
    %11 = arith.truncf %7 : vector<16x128xf32> to vector<16x128xbf16>
    %cst = arith.constant dense<0.000000e+00> : vector<16x384xf32>
    %12 = tpu.matmul %11, %3, %cst {dimension_numbers = #tpu.dot_dimension_numbers<[1], [0], [0], [1], [0, 0, 1, 1], [], []>} : vector<16x128xbf16>, vector<128x384xbf16>, vector<16x384xf32> -> vector<16x384xf32>
    %13 = vector.extract_strided_slice %10 {offsets = [0, 0], sizes = [16, 128], strides = [1, 1]} : vector<16x384xbf16> to vector<16x128xbf16>
    %14 = arith.extf %13 : vector<16x128xbf16> to vector<16x128xf32>
    %15 = vector.extract_strided_slice %12 {offsets = [0, 0], sizes = [16, 128], strides = [1, 1]} : vector<16x384xf32> to vector<16x128xf32>
    %16 = arith.addf %14, %15 : vector<16x128xf32>
    %17 = arith.negf %16 : vector<16x128xf32>
    %18 = math.exp %17 : vector<16x128xf32>
    %cst_9 = arith.constant 1.000000e+00 : f32
    %19 = vector.broadcast %cst_9 : f32 to vector<16x128xf32>
    %20 = arith.addf %19, %18 : vector<16x128xf32>
    %21 = arith.divf %19, %20 : vector<16x128xf32>
    %22 = vector.extract_strided_slice %10 {offsets = [0, 128], sizes = [16, 128], strides = [1, 1]} : vector<16x384xbf16> to vector<16x128xbf16>
    %23 = arith.extf %22 : vector<16x128xbf16> to vector<16x128xf32>
    %24 = vector.extract_strided_slice %12 {offsets = [0, 128], sizes = [16, 128], strides = [1, 1]} : vector<16x384xf32> to vector<16x128xf32>
    %25 = arith.addf %23, %24 : vector<16x128xf32>
    %26 = arith.negf %25 : vector<16x128xf32>
    %27 = math.exp %26 : vector<16x128xf32>
    %cst_10 = arith.constant 1.000000e+00 : f32
    %28 = vector.broadcast %cst_10 : f32 to vector<16x128xf32>
    %29 = arith.addf %28, %27 : vector<16x128xf32>
    %30 = arith.divf %28, %29 : vector<16x128xf32>
    %31 = vector.extract_strided_slice %10 {offsets = [0, 256], sizes = [16, 128], strides = [1, 1]} : vector<16x384xbf16> to vector<16x128xbf16>
    %32 = arith.extf %31 : vector<16x128xbf16> to vector<16x128xf32>
    %33 = vector.extract_strided_slice %12 {offsets = [0, 256], sizes = [16, 128], strides = [1, 1]} : vector<16x384xf32> to vector<16x128xf32>
    %34 = arith.addf %33, %6 : vector<16x128xf32>
    %35 = arith.mulf %21, %34 : vector<16x128xf32>
    %36 = arith.addf %32, %35 : vector<16x128xf32>
    %37 = math.tanh %36 : vector<16x128xf32>
    %38 = arith.subf %7, %37 : vector<16x128xf32>
    %39 = arith.mulf %30, %38 : vector<16x128xf32>
    %40 = arith.addf %37, %39 : vector<16x128xf32>
    %41 = arith.truncf %40 : vector<16x128xf32> to vector<16x128xbf16>
    %42 = arith.index_cast %c0_i32_6 : i32 to index
    %c0_11 = arith.constant 0 : index
    %c0_12 = arith.constant 0 : index
    %43 = vector.load %arg5[%42, %c0_11, %c0_12] : memref<8x16x128xbf16, #tpu.memory_space<vmem>>, vector<1x16x128xbf16>
    %44 = vector.shape_cast %43 : vector<1x16x128xbf16> to vector<16x128xbf16>
    %45 = vector.shape_cast %41 : vector<16x128xbf16> to vector<1x16x128xbf16>
    tpu.vector_store %arg5[%42, %c0_11, %c0_12], %45 {strides = array<i32>} : memref<8x16x128xbf16, #tpu.memory_space<vmem>>, vector<1x16x128xbf16>,
    %c1_i32 = arith.constant 1 : i32
    %46 = arith.index_cast %c1_i32 : i32 to index
    %c0_13 = arith.constant 0 : index
    %c0_14 = arith.constant 0 : index
    %47 = vector.load %arg2[%46, %c0_13, %c0_14] : memref<8x16x384xbf16, #tpu.memory_space<vmem>>, vector<1x16x384xbf16>
    %48 = vector.shape_cast %47 : vector<1x16x384xbf16> to vector<16x384xbf16>
    %49 = arith.truncf %40 : vector<16x128xf32> to vector<16x128xbf16>
    %cst_15 = arith.constant dense<0.000000e+00> : vector<16x384xf32>
    %50 = tpu.matmul %49, %3, %cst_15 {dimension_numbers = #tpu.dot_dimension_numbers<[1], [0], [0], [1], [0, 0, 1, 1], [], []>} : vector<16x128xbf16>, vector<128x384xbf16>, vector<16x384xf32> -> vector<16x384xf32>
    %51 = vector.extract_strided_slice %48 {offsets = [0, 0], sizes = [16, 128], strides = [1, 1]} : vector<16x384xbf16> to vector<16x128xbf16>
    %52 = arith.extf %51 : vector<16x128xbf16> to vector<16x128xf32>
    %53 = vector.extract_strided_slice %50 {offsets = [0, 0], sizes = [16, 128], strides = [1, 1]} : vector<16x384xf32> to vector<16x128xf32>
    %54 = arith.addf %52, %53 : vector<16x128xf32>
    %55 = arith.negf %54 : vector<16x128xf32>
    %56 = math.exp %55 : vector<16x128xf32>
    %cst_16 = arith.constant 1.000000e+00 : f32
    %57 = vector.broadcast %cst_16 : f32 to vector<16x128xf32>
    %58 = arith.addf %57, %56 : vector<16x128xf32>
    %59 = arith.divf %57, %58 : vector<16x128xf32>
    %60 = vector.extract_strided_slice %48 {offsets = [0, 128], sizes = [16, 128], strides = [1, 1]} : vector<16x384xbf16> to vector<16x128xbf16>
    %61 = arith.extf %60 : vector<16x128xbf16> to vector<16x128xf32>
    %62 = vector.extract_strided_slice %50 {offsets = [0, 128], sizes = [16, 128], strides = [1, 1]} : vector<16x384xf32> to vector<16x128xf32>
    %63 = arith.addf %61, %62 : vector<16x128xf32>
    %64 = arith.negf %63 : vector<16x128xf32>
    %65 = math.exp %64 : vector<16x128xf32>
    %cst_17 = arith.constant 1.000000e+00 : f32
    %66 = vector.broadcast %cst_17 : f32 to vector<16x128xf32>
    %67 = arith.addf %66, %65 : vector<16x128xf32>
    %68 = arith.divf %66, %67 : vector<16x128xf32>
    %69 = vector.extract_strided_slice %48 {offsets = [0, 256], sizes = [16, 128], strides = [1, 1]} : vector<16x384xbf16> to vector<16x128xbf16>
    %70 = arith.extf %69 : vector<16x128xbf16> to vector<16x128xf32>
    %71 = vector.extract_strided_slice %50 {offsets = [0, 256], sizes = [16, 128], strides = [1, 1]} : vector<16x384xf32> to vector<16x128xf32>
    %72 = arith.addf %71, %6 : vector<16x128xf32>
    %73 = arith.mulf %59, %72 : vector<16x128xf32>
    %74 = arith.addf %70, %73 : vector<16x128xf32>
    %75 = math.tanh %74 : vector<16x128xf32>
    %76 = arith.subf %40, %75 : vector<16x128xf32>
    %77 = arith.mulf %68, %76 : vector<16x128xf32>
    %78 = arith.addf %75, %77 : vector<16x128xf32>
    %79 = arith.truncf %78 : vector<16x128xf32> to vector<16x128xbf16>
    %80 = arith.index_cast %c1_i32 : i32 to index
    %c0_18 = arith.constant 0 : index
    %c0_19 = arith.constant 0 : index
    %81 = vector.load %arg5[%80, %c0_18, %c0_19] : memref<8x16x128xbf16, #tpu.memory_space<vmem>>, vector<1x16x128xbf16>
    %82 = vector.shape_cast %81 : vector<1x16x128xbf16> to vector<16x128xbf16>
    %83 = vector.shape_cast %79 : vector<16x128xbf16> to vector<1x16x128xbf16>
    tpu.vector_store %arg5[%80, %c0_18, %c0_19], %83 {strides = array<i32>} : memref<8x16x128xbf16, #tpu.memory_space<vmem>>, vector<1x16x128xbf16>,
    %c2_i32 = arith.constant 2 : i32
    %84 = arith.index_cast %c2_i32 : i32 to index
    %c0_20 = arith.constant 0 : index
    %c0_21 = arith.constant 0 : index
    %85 = vector.load %arg2[%84, %c0_20, %c0_21] : memref<8x16x384xbf16, #tpu.memory_space<vmem>>, vector<1x16x384xbf16>
    %86 = vector.shape_cast %85 : vector<1x16x384xbf16> to vector<16x384xbf16>
    %87 = arith.truncf %78 : vector<16x128xf32> to vector<16x128xbf16>
    %cst_22 = arith.constant dense<0.000000e+00> : vector<16x384xf32>
    %88 = tpu.matmul %87, %3, %cst_22 {dimension_numbers = #tpu.dot_dimension_numbers<[1], [0], [0], [1], [0, 0, 1, 1], [], []>} : vector<16x128xbf16>, vector<128x384xbf16>, vector<16x384xf32> -> vector<16x384xf32>
    %89 = vector.extract_strided_slice %86 {offsets = [0, 0], sizes = [16, 128], strides = [1, 1]} : vector<16x384xbf16> to vector<16x128xbf16>
    %90 = arith.extf %89 : vector<16x128xbf16> to vector<16x128xf32>
    %91 = vector.extract_strided_slice %88 {offsets = [0, 0], sizes = [16, 128], strides = [1, 1]} : vector<16x384xf32> to vector<16x128xf32>
    %92 = arith.addf %90, %91 : vector<16x128xf32>
    %93 = arith.negf %92 : vector<16x128xf32>
    %94 = math.exp %93 : vector<16x128xf32>
    %cst_23 = arith.constant 1.000000e+00 : f32
    %95 = vector.broadcast %cst_23 : f32 to vector<16x128xf32>
    %96 = arith.addf %95, %94 : vector<16x128xf32>
    %97 = arith.divf %95, %96 : vector<16x128xf32>
    %98 = vector.extract_strided_slice %86 {offsets = [0, 128], sizes = [16, 128], strides = [1, 1]} : vector<16x384xbf16> to vector<16x128xbf16>
    %99 = arith.extf %98 : vector<16x128xbf16> to vector<16x128xf32>
    %100 = vector.extract_strided_slice %88 {offsets = [0, 128], sizes = [16, 128], strides = [1, 1]} : vector<16x384xf32> to vector<16x128xf32>
    %101 = arith.addf %99, %100 : vector<16x128xf32>
    %102 = arith.negf %101 : vector<16x128xf32>
    %103 = math.exp %102 : vector<16x128xf32>
    %cst_24 = arith.constant 1.000000e+00 : f32
    %104 = vector.broadcast %cst_24 : f32 to vector<16x128xf32>
    %105 = arith.addf %104, %103 : vector<16x128xf32>
    %106 = arith.divf %104, %105 : vector<16x128xf32>
    %107 = vector.extract_strided_slice %86 {offsets = [0, 256], sizes = [16, 128], strides = [1, 1]} : vector<16x384xbf16> to vector<16x128xbf16>
    %108 = arith.extf %107 : vector<16x128xbf16> to vector<16x128xf32>
    %109 = vector.extract_strided_slice %88 {offsets = [0, 256], sizes = [16, 128], strides = [1, 1]} : vector<16x384xf32> to vector<16x128xf32>
    %110 = arith.addf %109, %6 : vector<16x128xf32>
    %111 = arith.mulf %97, %110 : vector<16x128xf32>
    %112 = arith.addf %108, %111 : vector<16x128xf32>
    %113 = math.tanh %112 : vector<16x128xf32>
    %114 = arith.subf %78, %113 : vector<16x128xf32>
    %115 = arith.mulf %106, %114 : vector<16x128xf32>
    %116 = arith.addf %113, %115 : vector<16x128xf32>
    %117 = arith.truncf %116 : vector<16x128xf32> to vector<16x128xbf16>
    %118 = arith.index_cast %c2_i32 : i32 to index
    %c0_25 = arith.constant 0 : index
    %c0_26 = arith.constant 0 : index
    %119 = vector.load %arg5[%118, %c0_25, %c0_26] : memref<8x16x128xbf16, #tpu.memory_space<vmem>>, vector<1x16x128xbf16>
    %120 = vector.shape_cast %119 : vector<1x16x128xbf16> to vector<16x128xbf16>
    %121 = vector.shape_cast %117 : vector<16x128xbf16> to vector<1x16x128xbf16>
    tpu.vector_store %arg5[%118, %c0_25, %c0_26], %121 {strides = array<i32>} : memref<8x16x128xbf16, #tpu.memory_space<vmem>>, vector<1x16x128xbf16>,
    %c3_i32 = arith.constant 3 : i32
    %122 = arith.index_cast %c3_i32 : i32 to index
    %c0_27 = arith.constant 0 : index
    %c0_28 = arith.constant 0 : index
    %123 = vector.load %arg2[%122, %c0_27, %c0_28] : memref<8x16x384xbf16, #tpu.memory_space<vmem>>, vector<1x16x384xbf16>
    %124 = vector.shape_cast %123 : vector<1x16x384xbf16> to vector<16x384xbf16>
    %125 = arith.truncf %116 : vector<16x128xf32> to vector<16x128xbf16>
    %cst_29 = arith.constant dense<0.000000e+00> : vector<16x384xf32>
    %126 = tpu.matmul %125, %3, %cst_29 {dimension_numbers = #tpu.dot_dimension_numbers<[1], [0], [0], [1], [0, 0, 1, 1], [], []>} : vector<16x128xbf16>, vector<128x384xbf16>, vector<16x384xf32> -> vector<16x384xf32>
    %127 = vector.extract_strided_slice %124 {offsets = [0, 0], sizes = [16, 128], strides = [1, 1]} : vector<16x384xbf16> to vector<16x128xbf16>
    %128 = arith.extf %127 : vector<16x128xbf16> to vector<16x128xf32>
    %129 = vector.extract_strided_slice %126 {offsets = [0, 0], sizes = [16, 128], strides = [1, 1]} : vector<16x384xf32> to vector<16x128xf32>
    %130 = arith.addf %128, %129 : vector<16x128xf32>
    %131 = arith.negf %130 : vector<16x128xf32>
    %132 = math.exp %131 : vector<16x128xf32>
    %cst_30 = arith.constant 1.000000e+00 : f32
    %133 = vector.broadcast %cst_30 : f32 to vector<16x128xf32>
    %134 = arith.addf %133, %132 : vector<16x128xf32>
    %135 = arith.divf %133, %134 : vector<16x128xf32>
    %136 = vector.extract_strided_slice %124 {offsets = [0, 128], sizes = [16, 128], strides = [1, 1]} : vector<16x384xbf16> to vector<16x128xbf16>
    %137 = arith.extf %136 : vector<16x128xbf16> to vector<16x128xf32>
    %138 = vector.extract_strided_slice %126 {offsets = [0, 128], sizes = [16, 128], strides = [1, 1]} : vector<16x384xf32> to vector<16x128xf32>
    %139 = arith.addf %137, %138 : vector<16x128xf32>
    %140 = arith.negf %139 : vector<16x128xf32>
    %141 = math.exp %140 : vector<16x128xf32>
    %cst_31 = arith.constant 1.000000e+00 : f32
    %142 = vector.broadcast %cst_31 : f32 to vector<16x128xf32>
    %143 = arith.addf %142, %141 : vector<16x128xf32>
    %144 = arith.divf %142, %143 : vector<16x128xf32>
    %145 = vector.extract_strided_slice %124 {offsets = [0, 256], sizes = [16, 128], strides = [1, 1]} : vector<16x384xbf16> to vector<16x128xbf16>
    %146 = arith.extf %145 : vector<16x128xbf16> to vector<16x128xf32>
    %147 = vector.extract_strided_slice %126 {offsets = [0, 256], sizes = [16, 128], strides = [1, 1]} : vector<16x384xf32> to vector<16x128xf32>
    %148 = arith.addf %147, %6 : vector<16x128xf32>
    %149 = arith.mulf %135, %148 : vector<16x128xf32>
    %150 = arith.addf %146, %149 : vector<16x128xf32>
    %151 = math.tanh %150 : vector<16x128xf32>
    %152 = arith.subf %116, %151 : vector<16x128xf32>
    %153 = arith.mulf %144, %152 : vector<16x128xf32>
    %154 = arith.addf %151, %153 : vector<16x128xf32>
    %155 = arith.truncf %154 : vector<16x128xf32> to vector<16x128xbf16>
    %156 = arith.index_cast %c3_i32 : i32 to index
    %c0_32 = arith.constant 0 : index
    %c0_33 = arith.constant 0 : index
    %157 = vector.load %arg5[%156, %c0_32, %c0_33] : memref<8x16x128xbf16, #tpu.memory_space<vmem>>, vector<1x16x128xbf16>
    %158 = vector.shape_cast %157 : vector<1x16x128xbf16> to vector<16x128xbf16>
    %159 = vector.shape_cast %155 : vector<16x128xbf16> to vector<1x16x128xbf16>
    tpu.vector_store %arg5[%156, %c0_32, %c0_33], %159 {strides = array<i32>} : memref<8x16x128xbf16, #tpu.memory_space<vmem>>, vector<1x16x128xbf16>,
    %c4_i32 = arith.constant 4 : i32
    %160 = arith.index_cast %c4_i32 : i32 to index
    %c0_34 = arith.constant 0 : index
    %c0_35 = arith.constant 0 : index
    %161 = vector.load %arg2[%160, %c0_34, %c0_35] : memref<8x16x384xbf16, #tpu.memory_space<vmem>>, vector<1x16x384xbf16>
    %162 = vector.shape_cast %161 : vector<1x16x384xbf16> to vector<16x384xbf16>
    %163 = arith.truncf %154 : vector<16x128xf32> to vector<16x128xbf16>
    %cst_36 = arith.constant dense<0.000000e+00> : vector<16x384xf32>
    %164 = tpu.matmul %163, %3, %cst_36 {dimension_numbers = #tpu.dot_dimension_numbers<[1], [0], [0], [1], [0, 0, 1, 1], [], []>} : vector<16x128xbf16>, vector<128x384xbf16>, vector<16x384xf32> -> vector<16x384xf32>
    %165 = vector.extract_strided_slice %162 {offsets = [0, 0], sizes = [16, 128], strides = [1, 1]} : vector<16x384xbf16> to vector<16x128xbf16>
    %166 = arith.extf %165 : vector<16x128xbf16> to vector<16x128xf32>
    %167 = vector.extract_strided_slice %164 {offsets = [0, 0], sizes = [16, 128], strides = [1, 1]} : vector<16x384xf32> to vector<16x128xf32>
    %168 = arith.addf %166, %167 : vector<16x128xf32>
    %169 = arith.negf %168 : vector<16x128xf32>
    %170 = math.exp %169 : vector<16x128xf32>
    %cst_37 = arith.constant 1.000000e+00 : f32
    %171 = vector.broadcast %cst_37 : f32 to vector<16x128xf32>
    %172 = arith.addf %171, %170 : vector<16x128xf32>
    %173 = arith.divf %171, %172 : vector<16x128xf32>
    %174 = vector.extract_strided_slice %162 {offsets = [0, 128], sizes = [16, 128], strides = [1, 1]} : vector<16x384xbf16> to vector<16x128xbf16>
    %175 = arith.extf %174 : vector<16x128xbf16> to vector<16x128xf32>
    %176 = vector.extract_strided_slice %164 {offsets = [0, 128], sizes = [16, 128], strides = [1, 1]} : vector<16x384xf32> to vector<16x128xf32>
    %177 = arith.addf %175, %176 : vector<16x128xf32>
    %178 = arith.negf %177 : vector<16x128xf32>
    %179 = math.exp %178 : vector<16x128xf32>
    %cst_38 = arith.constant 1.000000e+00 : f32
    %180 = vector.broadcast %cst_38 : f32 to vector<16x128xf32>
    %181 = arith.addf %180, %179 : vector<16x128xf32>
    %182 = arith.divf %180, %181 : vector<16x128xf32>
    %183 = vector.extract_strided_slice %162 {offsets = [0, 256], sizes = [16, 128], strides = [1, 1]} : vector<16x384xbf16> to vector<16x128xbf16>
    %184 = arith.extf %183 : vector<16x128xbf16> to vector<16x128xf32>
    %185 = vector.extract_strided_slice %164 {offsets = [0, 256], sizes = [16, 128], strides = [1, 1]} : vector<16x384xf32> to vector<16x128xf32>
    %186 = arith.addf %185, %6 : vector<16x128xf32>
    %187 = arith.mulf %173, %186 : vector<16x128xf32>
    %188 = arith.addf %184, %187 : vector<16x128xf32>
    %189 = math.tanh %188 : vector<16x128xf32>
    %190 = arith.subf %154, %189 : vector<16x128xf32>
    %191 = arith.mulf %182, %190 : vector<16x128xf32>
    %192 = arith.addf %189, %191 : vector<16x128xf32>
    %193 = arith.truncf %192 : vector<16x128xf32> to vector<16x128xbf16>
    %194 = arith.index_cast %c4_i32 : i32 to index
    %c0_39 = arith.constant 0 : index
    %c0_40 = arith.constant 0 : index
    %195 = vector.load %arg5[%194, %c0_39, %c0_40] : memref<8x16x128xbf16, #tpu.memory_space<vmem>>, vector<1x16x128xbf16>
    %196 = vector.shape_cast %195 : vector<1x16x128xbf16> to vector<16x128xbf16>
    %197 = vector.shape_cast %193 : vector<16x128xbf16> to vector<1x16x128xbf16>
    tpu.vector_store %arg5[%194, %c0_39, %c0_40], %197 {strides = array<i32>} : memref<8x16x128xbf16, #tpu.memory_space<vmem>>, vector<1x16x128xbf16>,
    %c5_i32 = arith.constant 5 : i32
    %198 = arith.index_cast %c5_i32 : i32 to index
    %c0_41 = arith.constant 0 : index
    %c0_42 = arith.constant 0 : index
    %199 = vector.load %arg2[%198, %c0_41, %c0_42] : memref<8x16x384xbf16, #tpu.memory_space<vmem>>, vector<1x16x384xbf16>
    %200 = vector.shape_cast %199 : vector<1x16x384xbf16> to vector<16x384xbf16>
    %201 = arith.truncf %192 : vector<16x128xf32> to vector<16x128xbf16>
    %cst_43 = arith.constant dense<0.000000e+00> : vector<16x384xf32>
    %202 = tpu.matmul %201, %3, %cst_43 {dimension_numbers = #tpu.dot_dimension_numbers<[1], [0], [0], [1], [0, 0, 1, 1], [], []>} : vector<16x128xbf16>, vector<128x384xbf16>, vector<16x384xf32> -> vector<16x384xf32>
    %203 = vector.extract_strided_slice %200 {offsets = [0, 0], sizes = [16, 128], strides = [1, 1]} : vector<16x384xbf16> to vector<16x128xbf16>
    %204 = arith.extf %203 : vector<16x128xbf16> to vector<16x128xf32>
    %205 = vector.extract_strided_slice %202 {offsets = [0, 0], sizes = [16, 128], strides = [1, 1]} : vector<16x384xf32> to vector<16x128xf32>
    %206 = arith.addf %204, %205 : vector<16x128xf32>
    %207 = arith.negf %206 : vector<16x128xf32>
    %208 = math.exp %207 : vector<16x128xf32>
    %cst_44 = arith.constant 1.000000e+00 : f32
    %209 = vector.broadcast %cst_44 : f32 to vector<16x128xf32>
    %210 = arith.addf %209, %208 : vector<16x128xf32>
    %211 = arith.divf %209, %210 : vector<16x128xf32>
    %212 = vector.extract_strided_slice %200 {offsets = [0, 128], sizes = [16, 128], strides = [1, 1]} : vector<16x384xbf16> to vector<16x128xbf16>
    %213 = arith.extf %212 : vector<16x128xbf16> to vector<16x128xf32>
    %214 = vector.extract_strided_slice %202 {offsets = [0, 128], sizes = [16, 128], strides = [1, 1]} : vector<16x384xf32> to vector<16x128xf32>
    %215 = arith.addf %213, %214 : vector<16x128xf32>
    %216 = arith.negf %215 : vector<16x128xf32>
    %217 = math.exp %216 : vector<16x128xf32>
    %cst_45 = arith.constant 1.000000e+00 : f32
    %218 = vector.broadcast %cst_45 : f32 to vector<16x128xf32>
    %219 = arith.addf %218, %217 : vector<16x128xf32>
    %220 = arith.divf %218, %219 : vector<16x128xf32>
    %221 = vector.extract_strided_slice %200 {offsets = [0, 256], sizes = [16, 128], strides = [1, 1]} : vector<16x384xbf16> to vector<16x128xbf16>
    %222 = arith.extf %221 : vector<16x128xbf16> to vector<16x128xf32>
    %223 = vector.extract_strided_slice %202 {offsets = [0, 256], sizes = [16, 128], strides = [1, 1]} : vector<16x384xf32> to vector<16x128xf32>
    %224 = arith.addf %223, %6 : vector<16x128xf32>
    %225 = arith.mulf %211, %224 : vector<16x128xf32>
    %226 = arith.addf %222, %225 : vector<16x128xf32>
    %227 = math.tanh %226 : vector<16x128xf32>
    %228 = arith.subf %192, %227 : vector<16x128xf32>
    %229 = arith.mulf %220, %228 : vector<16x128xf32>
    %230 = arith.addf %227, %229 : vector<16x128xf32>
    %231 = arith.truncf %230 : vector<16x128xf32> to vector<16x128xbf16>
    %232 = arith.index_cast %c5_i32 : i32 to index
    %c0_46 = arith.constant 0 : index
    %c0_47 = arith.constant 0 : index
    %233 = vector.load %arg5[%232, %c0_46, %c0_47] : memref<8x16x128xbf16, #tpu.memory_space<vmem>>, vector<1x16x128xbf16>
    %234 = vector.shape_cast %233 : vector<1x16x128xbf16> to vector<16x128xbf16>
    %235 = vector.shape_cast %231 : vector<16x128xbf16> to vector<1x16x128xbf16>
    tpu.vector_store %arg5[%232, %c0_46, %c0_47], %235 {strides = array<i32>} : memref<8x16x128xbf16, #tpu.memory_space<vmem>>, vector<1x16x128xbf16>,
    %c6_i32 = arith.constant 6 : i32
    %236 = arith.index_cast %c6_i32 : i32 to index
    %c0_48 = arith.constant 0 : index
    %c0_49 = arith.constant 0 : index
    %237 = vector.load %arg2[%236, %c0_48, %c0_49] : memref<8x16x384xbf16, #tpu.memory_space<vmem>>, vector<1x16x384xbf16>
    %238 = vector.shape_cast %237 : vector<1x16x384xbf16> to vector<16x384xbf16>
    %239 = arith.truncf %230 : vector<16x128xf32> to vector<16x128xbf16>
    %cst_50 = arith.constant dense<0.000000e+00> : vector<16x384xf32>
    %240 = tpu.matmul %239, %3, %cst_50 {dimension_numbers = #tpu.dot_dimension_numbers<[1], [0], [0], [1], [0, 0, 1, 1], [], []>} : vector<16x128xbf16>, vector<128x384xbf16>, vector<16x384xf32> -> vector<16x384xf32>
    %241 = vector.extract_strided_slice %238 {offsets = [0, 0], sizes = [16, 128], strides = [1, 1]} : vector<16x384xbf16> to vector<16x128xbf16>
    %242 = arith.extf %241 : vector<16x128xbf16> to vector<16x128xf32>
    %243 = vector.extract_strided_slice %240 {offsets = [0, 0], sizes = [16, 128], strides = [1, 1]} : vector<16x384xf32> to vector<16x128xf32>
    %244 = arith.addf %242, %243 : vector<16x128xf32>
    %245 = arith.negf %244 : vector<16x128xf32>
    %246 = math.exp %245 : vector<16x128xf32>
    %cst_51 = arith.constant 1.000000e+00 : f32
    %247 = vector.broadcast %cst_51 : f32 to vector<16x128xf32>
    %248 = arith.addf %247, %246 : vector<16x128xf32>
    %249 = arith.divf %247, %248 : vector<16x128xf32>
    %250 = vector.extract_strided_slice %238 {offsets = [0, 128], sizes = [16, 128], strides = [1, 1]} : vector<16x384xbf16> to vector<16x128xbf16>
    %251 = arith.extf %250 : vector<16x128xbf16> to vector<16x128xf32>
    %252 = vector.extract_strided_slice %240 {offsets = [0, 128], sizes = [16, 128], strides = [1, 1]} : vector<16x384xf32> to vector<16x128xf32>
    %253 = arith.addf %251, %252 : vector<16x128xf32>
    %254 = arith.negf %253 : vector<16x128xf32>
    %255 = math.exp %254 : vector<16x128xf32>
    %cst_52 = arith.constant 1.000000e+00 : f32
    %256 = vector.broadcast %cst_52 : f32 to vector<16x128xf32>
    %257 = arith.addf %256, %255 : vector<16x128xf32>
    %258 = arith.divf %256, %257 : vector<16x128xf32>
    %259 = vector.extract_strided_slice %238 {offsets = [0, 256], sizes = [16, 128], strides = [1, 1]} : vector<16x384xbf16> to vector<16x128xbf16>
    %260 = arith.extf %259 : vector<16x128xbf16> to vector<16x128xf32>
    %261 = vector.extract_strided_slice %240 {offsets = [0, 256], sizes = [16, 128], strides = [1, 1]} : vector<16x384xf32> to vector<16x128xf32>
    %262 = arith.addf %261, %6 : vector<16x128xf32>
    %263 = arith.mulf %249, %262 : vector<16x128xf32>
    %264 = arith.addf %260, %263 : vector<16x128xf32>
    %265 = math.tanh %264 : vector<16x128xf32>
    %266 = arith.subf %230, %265 : vector<16x128xf32>
    %267 = arith.mulf %258, %266 : vector<16x128xf32>
    %268 = arith.addf %265, %267 : vector<16x128xf32>
    %269 = arith.truncf %268 : vector<16x128xf32> to vector<16x128xbf16>
    %270 = arith.index_cast %c6_i32 : i32 to index
    %c0_53 = arith.constant 0 : index
    %c0_54 = arith.constant 0 : index
    %271 = vector.load %arg5[%270, %c0_53, %c0_54] : memref<8x16x128xbf16, #tpu.memory_space<vmem>>, vector<1x16x128xbf16>
    %272 = vector.shape_cast %271 : vector<1x16x128xbf16> to vector<16x128xbf16>
    %273 = vector.shape_cast %269 : vector<16x128xbf16> to vector<1x16x128xbf16>
    tpu.vector_store %arg5[%270, %c0_53, %c0_54], %273 {strides = array<i32>} : memref<8x16x128xbf16, #tpu.memory_space<vmem>>, vector<1x16x128xbf16>,
    %c7_i32 = arith.constant 7 : i32
    %274 = arith.index_cast %c7_i32 : i32 to index
    %c0_55 = arith.constant 0 : index
    %c0_56 = arith.constant 0 : index
    %275 = vector.load %arg2[%274, %c0_55, %c0_56] : memref<8x16x384xbf16, #tpu.memory_space<vmem>>, vector<1x16x384xbf16>
    %276 = vector.shape_cast %275 : vector<1x16x384xbf16> to vector<16x384xbf16>
    %277 = arith.truncf %268 : vector<16x128xf32> to vector<16x128xbf16>
    %cst_57 = arith.constant dense<0.000000e+00> : vector<16x384xf32>
    %278 = tpu.matmul %277, %3, %cst_57 {dimension_numbers = #tpu.dot_dimension_numbers<[1], [0], [0], [1], [0, 0, 1, 1], [], []>} : vector<16x128xbf16>, vector<128x384xbf16>, vector<16x384xf32> -> vector<16x384xf32>
    %279 = vector.extract_strided_slice %276 {offsets = [0, 0], sizes = [16, 128], strides = [1, 1]} : vector<16x384xbf16> to vector<16x128xbf16>
    %280 = arith.extf %279 : vector<16x128xbf16> to vector<16x128xf32>
    %281 = vector.extract_strided_slice %278 {offsets = [0, 0], sizes = [16, 128], strides = [1, 1]} : vector<16x384xf32> to vector<16x128xf32>
    %282 = arith.addf %280, %281 : vector<16x128xf32>
    %283 = arith.negf %282 : vector<16x128xf32>
    %284 = math.exp %283 : vector<16x128xf32>
    %cst_58 = arith.constant 1.000000e+00 : f32
    %285 = vector.broadcast %cst_58 : f32 to vector<16x128xf32>
    %286 = arith.addf %285, %284 : vector<16x128xf32>
    %287 = arith.divf %285, %286 : vector<16x128xf32>
    %288 = vector.extract_strided_slice %276 {offsets = [0, 128], sizes = [16, 128], strides = [1, 1]} : vector<16x384xbf16> to vector<16x128xbf16>
    %289 = arith.extf %288 : vector<16x128xbf16> to vector<16x128xf32>
    %290 = vector.extract_strided_slice %278 {offsets = [0, 128], sizes = [16, 128], strides = [1, 1]} : vector<16x384xf32> to vector<16x128xf32>
    %291 = arith.addf %289, %290 : vector<16x128xf32>
    %292 = arith.negf %291 : vector<16x128xf32>
    %293 = math.exp %292 : vector<16x128xf32>
    %cst_59 = arith.constant 1.000000e+00 : f32
    %294 = vector.broadcast %cst_59 : f32 to vector<16x128xf32>
    %295 = arith.addf %294, %293 : vector<16x128xf32>
    %296 = arith.divf %294, %295 : vector<16x128xf32>
    %297 = vector.extract_strided_slice %276 {offsets = [0, 256], sizes = [16, 128], strides = [1, 1]} : vector<16x384xbf16> to vector<16x128xbf16>
    %298 = arith.extf %297 : vector<16x128xbf16> to vector<16x128xf32>
    %299 = vector.extract_strided_slice %278 {offsets = [0, 256], sizes = [16, 128], strides = [1, 1]} : vector<16x384xf32> to vector<16x128xf32>
    %300 = arith.addf %299, %6 : vector<16x128xf32>
    %301 = arith.mulf %287, %300 : vector<16x128xf32>
    %302 = arith.addf %298, %301 : vector<16x128xf32>
    %303 = math.tanh %302 : vector<16x128xf32>
    %304 = arith.subf %268, %303 : vector<16x128xf32>
    %305 = arith.mulf %296, %304 : vector<16x128xf32>
    %306 = arith.addf %303, %305 : vector<16x128xf32>
    %307 = arith.truncf %306 : vector<16x128xf32> to vector<16x128xbf16>
    %308 = arith.index_cast %c7_i32 : i32 to index
    %c0_60 = arith.constant 0 : index
    %c0_61 = arith.constant 0 : index
    %309 = vector.load %arg5[%308, %c0_60, %c0_61] : memref<8x16x128xbf16, #tpu.memory_space<vmem>>, vector<1x16x128xbf16>
    %310 = vector.shape_cast %309 : vector<1x16x128xbf16> to vector<16x128xbf16>
    %311 = vector.shape_cast %307 : vector<16x128xbf16> to vector<1x16x128xbf16>
    tpu.vector_store %arg5[%308, %c0_60, %c0_61], %311 {strides = array<i32>} : memref<8x16x128xbf16, #tpu.memory_space<vmem>>, vector<1x16x128xbf16>,
    %c8_i32 = arith.constant 8 : i32
    %c0_62 = arith.constant 0 : index
    %c0_63 = arith.constant 0 : index
    %312 = vector.load %arg6[%c0_62, %c0_63] : memref<16x128xf32, #tpu.memory_space<vmem>>, vector<16x128xf32>
    tpu.vector_store %arg6[%c0_62, %c0_63], %306 {strides = array<i32>} : memref<16x128xf32, #tpu.memory_space<vmem>>, vector<16x128xf32>,
    return
  }
  func.func @transform_0(%arg0: i32, %arg1: i32) -> (i32, i32, i32) {
    %c0_i32 = arith.constant 0 : i32
    %c0_i32_0 = arith.constant 0 : i32
    return %arg1, %arg0, %c0_i32 : i32, i32, i32
  }
  func.func @transform_1(%arg0: i32, %arg1: i32) -> (i32, i32) {
    %c0_i32 = arith.constant 0 : i32
    %c0_i32_0 = arith.constant 0 : i32
    %c0_i32_1 = arith.constant 0 : i32
    return %c0_i32, %c0_i32_0 : i32, i32
  }
  func.func @transform_2(%arg0: i32, %arg1: i32) -> (i32, i32) {
    %c0_i32 = arith.constant 0 : i32
    %c0_i32_0 = arith.constant 0 : i32
    %c0_i32_1 = arith.constant 0 : i32
    return %c0_i32, %c0_i32_0 : i32, i32
  }
  func.func @transform_3(%arg0: i32, %arg1: i32) -> (i32, i32, i32) {
    %c0_i32 = arith.constant 0 : i32
    %c0_i32_0 = arith.constant 0 : i32
    return %arg1, %arg0, %c0_i32 : i32, i32, i32
  }
}

module attributes {stable_mosaic.version = 11 : i64} {
  func.func @_fc_kernel(%arg0: i32, %arg1: memref<1x16x128xbf16, #tpu.memory_space<vmem>>, %arg2: memref<1x128x128xbf16, #tpu.memory_space<vmem>>, %arg3: memref<1x128xf32, #tpu.memory_space<vmem>>, %arg4: memref<16x128xf32, #tpu.memory_space<vmem>>) attributes {dimension_semantics = [#tpu.dimension_semantics<arbitrary>], iteration_bounds = array<i64: 8>, scalar_prefetch = 0 : i64, scratch_operands = 0 : i64, tpu.core_type = #tpu.core_type<tc>, window_params = [{transform_indices = @transform_0, window_bounds = array<i64: 1, 16, 128>}, {transform_indices = @transform_1, window_bounds = array<i64: 1, 128, 128>}, {pipeline_mode = #tpu.pipeline_mode<synchronous>, transform_indices = @transform_2, window_bounds = array<i64: 1, 128>}, {pipeline_mode = #tpu.pipeline_mode<synchronous>, transform_indices = @transform_3, window_bounds = array<i64: 16, 128>}]} {
    %c0_i32 = arith.constant 0 : i32
    %0 = arith.cmpi eq, %arg0, %c0_i32 : i32
    %1 = arith.extui %0 : i1 to i32
    %c0_i32_0 = arith.constant 0 : i32
    %2 = arith.cmpi ne, %1, %c0_i32_0 : i32
    scf.if %2 {
      %c0_10 = arith.constant 0 : index
      %c0_11 = arith.constant 0 : index
      %11 = vector.load %arg3[%c0_10, %c0_11] : memref<1x128xf32, #tpu.memory_space<vmem>>, vector<1x128xf32>
      %12 = vector.shape_cast %11 : vector<1x128xf32> to vector<1x128xf32>
      %13 = vector.broadcast %12 : vector<1x128xf32> to vector<16x128xf32>
      %c0_12 = arith.constant 0 : index
      %c0_13 = arith.constant 0 : index
      %14 = vector.load %arg4[%c0_12, %c0_13] : memref<16x128xf32, #tpu.memory_space<vmem>>, vector<16x128xf32>
      tpu.vector_store %arg4[%c0_12, %c0_13], %13 {strides = array<i32>} : memref<16x128xf32, #tpu.memory_space<vmem>>, vector<16x128xf32>,
    } else {
    }
    %c0 = arith.constant 0 : index
    %c0_1 = arith.constant 0 : index
    %3 = vector.load %arg4[%c0, %c0_1] : memref<16x128xf32, #tpu.memory_space<vmem>>, vector<16x128xf32>
    %c0_2 = arith.constant 0 : index
    %c0_3 = arith.constant 0 : index
    %c0_4 = arith.constant 0 : index
    %4 = vector.load %arg1[%c0_2, %c0_3, %c0_4] : memref<1x16x128xbf16, #tpu.memory_space<vmem>>, vector<1x16x128xbf16>
    %5 = vector.shape_cast %4 : vector<1x16x128xbf16> to vector<16x128xbf16>
    %c0_5 = arith.constant 0 : index
    %c0_6 = arith.constant 0 : index
    %c0_7 = arith.constant 0 : index
    %6 = vector.load %arg2[%c0_5, %c0_6, %c0_7] : memref<1x128x128xbf16, #tpu.memory_space<vmem>>, vector<1x128x128xbf16>
    %7 = vector.shape_cast %6 : vector<1x128x128xbf16> to vector<128x128xbf16>
    %cst = arith.constant dense<0.000000e+00> : vector<16x128xf32>
    %8 = tpu.matmul %5, %7, %cst {dimension_numbers = #tpu.dot_dimension_numbers<[1], [0], [0], [1], [0, 0, 1, 1], [], []>} : vector<16x128xbf16>, vector<128x128xbf16>, vector<16x128xf32> -> vector<16x128xf32>
    %9 = arith.addf %3, %8 : vector<16x128xf32>
    %c0_8 = arith.constant 0 : index
    %c0_9 = arith.constant 0 : index
    %10 = vector.load %arg4[%c0_8, %c0_9] : memref<16x128xf32, #tpu.memory_space<vmem>>, vector<16x128xf32>
    tpu.vector_store %arg4[%c0_8, %c0_9], %9 {strides = array<i32>} : memref<16x128xf32, #tpu.memory_space<vmem>>, vector<16x128xf32>,
    return
  }
  func.func @transform_0(%arg0: i32) -> (i32, i32, i32) {
    %c0_i32 = arith.constant 0 : i32
    %c0_i32_0 = arith.constant 0 : i32
    %c0_i32_1 = arith.constant 0 : i32
    return %arg0, %c0_i32, %c0_i32_0 : i32, i32, i32
  }
  func.func @transform_1(%arg0: i32) -> (i32, i32, i32) {
    %c0_i32 = arith.constant 0 : i32
    %c0_i32_0 = arith.constant 0 : i32
    %c0_i32_1 = arith.constant 0 : i32
    return %arg0, %c0_i32, %c0_i32_0 : i32, i32, i32
  }
  func.func @transform_2(%arg0: i32) -> (i32, i32) {
    %c0_i32 = arith.constant 0 : i32
    %c0_i32_0 = arith.constant 0 : i32
    %c0_i32_1 = arith.constant 0 : i32
    return %c0_i32, %c0_i32_0 : i32, i32
  }
  func.func @transform_3(%arg0: i32) -> (i32, i32) {
    %c0_i32 = arith.constant 0 : i32
    %c0_i32_0 = arith.constant 0 : i32
    %c0_i32_1 = arith.constant 0 : i32
    return %c0_i32, %c0_i32_0 : i32, i32
  }
}

</mosaic_0001>

<llo_original>
// kernel: gru_model_forward.5
$region0: #{gru_model_forward.5}
  #allocation0 [shape = 'u32[]', space=smem, size = 0x4, offset = 0x4, fixed_abs, tag = 'smem constant byte address 0x4 - core index']
  #allocation1 [shape = 'u32[144,128]{1,0:T(1,128)}', space=vmem, size = 0x12000, scoped, tag = 'internal scratch']
  %s0 = inlined_call_operand.vmem [shape: bf16[128,4], index: 0, kind: input, shape index: {}]
  %s1 = inlined_call_operand.vmem [shape: bf16[4,384], index: 1, kind: input, shape index: {}]
  %s2 = inlined_call_operand.vmem [shape: f32[1,384], index: 2, kind: input, shape index: {}]
  %s3 = inlined_call_operand.vmem [shape: bf16[128,384], index: 3, kind: output, shape index: {}]
  %s4 = sld [smem:[#allocation0]]
  $region22: #{gru_model_forward.5} parent=0
    _
  %s6 = ssub.s32 1, %s4
  %s7 = scalar_select 0, %s6, %s4
  // Predicated region
  $region2: #{gru_model_forward.5} parent=0 // pred_check
    _
  $region3: #{gru_model_forward.5} parent=0 // pred_check_branch
    %9 = sbr.rel (0) target = $region5
  $region4: #{gru_model_forward.5} parent=0 // pred_region
    _
  $region5: #{gru_model_forward.5} parent=0 // pred_fallthru
    _
  // Predicated region
  $region6: #{gru_model_forward.5} parent=0 // pred_check
    _
  $region7: #{gru_model_forward.5} parent=0 // pred_check_branch
    %11 = sbr.rel (0) target = $region9
  $region8: #{gru_model_forward.5} parent=0 // pred_region
    _
  $region9: #{gru_model_forward.5} parent=0 // pred_fallthru
    _
  // Predicated region
  $region10: #{gru_model_forward.5} parent=0 // pred_check
    _
  $region11: #{gru_model_forward.5} parent=0 // pred_check_branch
    %13 = sbr.rel (0) target = $region13
  $region12: #{gru_model_forward.5} parent=0 // pred_region
    _
  $region13: #{gru_model_forward.5} parent=0 // pred_fallthru
    _
  %v15 = vld [vmem:[%s0] sm:$0xf]
  %v16 = vld [vmem:[%s0 + $0x4] sm:$0xf]
  %v17 = vld [vmem:[%s0 + $0x8] sm:$0xf]
  %v18 = vld [vmem:[%s0 + $0xc] sm:$0xf]
  %v19 = vld [vmem:[%s0 + $0x10] sm:$0xf]
  %v20 = vld [vmem:[%s0 + $0x14] sm:$0xf]
  %v21 = vld [vmem:[%s0 + $0x18] sm:$0xf]
  %v22 = vld [vmem:[%s0 + $0x1c] sm:$0xf]
  %v23 = vld [vmem:[%s0 + $0x20] sm:$0xf]
  %v24 = vld [vmem:[%s0 + $0x24] sm:$0xf]
  %v25 = vld [vmem:[%s0 + $0x28] sm:$0xf]
  %v26 = vld [vmem:[%s0 + $0x2c] sm:$0xf]
  %v27 = vld [vmem:[%s0 + $0x30] sm:$0xf]
  %v28 = vld [vmem:[%s0 + $0x34] sm:$0xf]
  %v29 = vld [vmem:[%s0 + $0x38] sm:$0xf]
  %v30 = vld [vmem:[%s0 + $0x3c] sm:$0xf]
  %v31 = vld [vmem:[%s1] sm:$0x3f]
  %v32 = vld [vmem:[%s2] sm:$0x7]
  %v34 = vlaneseq
  %v35 = vshrl.u32 %v34, 7
  %v36 = vsub.s32 0, %v35
  %v37 = vrot.slane %v32, %v36
  %v38 = vlaneseq
  %v39 = vshrl.u32 %v38, 7
  %v40 = vsub.s32 1, %v39
  %v41 = vrot.slane %v32, %v40
  %v42 = vlaneseq
  %v43 = vshrl.u32 %v42, 7
  %v44 = vsub.s32 2, %v43
  %v45 = vrot.slane %v32, %v44
  %v65 = vunpack.c.l.b16 %v15
  %v66 = vunpack.c.l.b16 %v16
  %v67 = vunpack.c.l.b16 %v17
  %v68 = vunpack.c.l.b16 %v18
  %v69 = vunpack.c.l.b16 %v19
  %v70 = vunpack.c.l.b16 %v20
  %v71 = vunpack.c.l.b16 %v21
  %v72 = vunpack.c.l.b16 %v22
  %v73 = vunpack.c.l.b16 %v23
  %v74 = vunpack.c.l.b16 %v24
  %v75 = vunpack.c.l.b16 %v25
  %v76 = vunpack.c.l.b16 %v26
  %v77 = vunpack.c.l.b16 %v27
  %v78 = vunpack.c.l.b16 %v28
  %v79 = vunpack.c.l.b16 %v29
  %v80 = vunpack.c.l.b16 %v30
  %v81 = vpack.c.b16 %v66, %v65
  %v82 = vpack.c.b16 %v68, %v67
  %v83 = vpack.c.b16 %v70, %v69
  %v84 = vpack.c.b16 %v72, %v71
  %v85 = vpack.c.b16 %v74, %v73
  %v86 = vpack.c.b16 %v76, %v75
  %v87 = vpack.c.b16 %v78, %v77
  %v88 = vpack.c.b16 %v80, %v79
  %v90 = vcombine.high %v31, %v31
  %v92 = vunpack.c.l.s4 1983009808
  %v93 = vunpack.c.0.s8 %v92
  %v94 = vlaneseq
  %v95 = vshrl.u32 %v94, 7
  %v96 = vsub.s32 %v93, %v95
  %v97 = vrot.slane %v31, %v96
  %v99 = vunpack.c.l.s4 1983009808
  %v100 = vunpack.c.0.s8 %v99
  %v101 = vlaneseq
  %v102 = vshrl.u32 %v101, 7
  %v103 = vsub.s32 %v100, %v102
  %v104 = vrot.slane %v90, %v103
  %v105 = vcombine.high %v97, %v97
  %vm106 = vcmask 31744
  %v108 = vsel %vm106, %v81, 0
  %v111 = vsel %vm106, %v82, 0
  %v114 = vsel %vm106, %v83, 0
  %v117 = vsel %vm106, %v84, 0
  %v120 = vsel %vm106, %v85, 0
  %v123 = vsel %vm106, %v86, 0
  %v126 = vsel %vm106, %v87, 0
  %v129 = vsel %vm106, %v88, 0
  %vm131 = vcmask 1041408
  %v133 = vsel %vm131, %v97, 0
  %v136 = vsel %vm131, %v105, 0
  %v139 = vsel %vm131, %v104, 0
  %141 = vmatprep.subr.bf16.mxu0 0
  %142 = vmatpush1.bf16.msra.mxu0 0
  %143 = vmatprep.subr.bf16.mxu0 0
  %144 = vmatpush1.bf16.msra.mxu0 0
  %145 = vmatprep.subr.bf16.mxu0 0
  %146 = vmatpush1.bf16.msra.mxu0 0
  %147 = vmatprep.subr.bf16.mxu0 0
  %148 = vmatpush1.bf16.msra.mxu0 0
  %149 = vmatprep.subr.bf16.mxu0 0
  %150 = vmatpush1.bf16.msra.mxu0 0
  %151 = vmatprep.subr.bf16.mxu0 0
  %152 = vmatpush1.bf16.msra.mxu0 0
  %153 = vmatprep.subr.bf16.mxu0 0
  %154 = vmatpush1.bf16.msra.mxu0 0
  %155 = vmatprep.subr.bf16.mxu0 %v136
  %156 = vmatpush1.bf16.msra.mxu0 %v133
  %157 = vmatprep.subr.bf16.mxu0 0
  %158 = vmatpush2.bf16.msra.mxu0 0
  %159 = vmatprep.subr.bf16.mxu0 0
  %160 = vmatpush2.bf16.msra.mxu0 0
  %161 = vmatprep.subr.bf16.mxu0 0
  %162 = vmatpush2.bf16.msra.mxu0 0
  %163 = vmatprep.subr.bf16.mxu0 0
  %164 = vmatpush2.bf16.msra.mxu0 0
  %165 = vmatprep.subr.bf16.mxu0 0
  %166 = vmatpush2.bf16.msra.mxu0 0
  %167 = vmatprep.subr.bf16.mxu0 0
  %168 = vmatpush2.bf16.msra.mxu0 0
  %169 = vmatprep.subr.bf16.mxu0 0
  %170 = vmatpush2.bf16.msra.mxu0 0
  %171 = vmatprep.subr.bf16.mxu0 0
  %172 = vmatpush2.bf16.msra.mxu0 0
  %173 = vmatprep.mubr.bf16.mxu0 0
  %174 = vmatmul.mubr.bf16.gmra.mxu0 %v108
  %v175 = vpop.f32.mrf.mxu0
  %v176 = vadd.f32 %v37, %v175
  %v177 = vpop.f32.mrf.mxu0
  %v178 = vadd.f32 %v41, %v177
  %v179 = vpop.f32.mrf.mxu0
  %v180 = vadd.f32 %v37, %v179
  %v181 = vpop.f32.mrf.mxu0
  %v182 = vadd.f32 %v41, %v181
  %183 = vmatprep.mubr.bf16.mxu0 0
  %184 = vmatmul.mubr.bf16.gmra.mxu0 %v111
  %v185 = vpop.f32.mrf.mxu0
  %v186 = vadd.f32 %v37, %v185
  %v187 = vpop.f32.mrf.mxu0
  %v188 = vadd.f32 %v41, %v187
  %v189 = vpop.f32.mrf.mxu0
  %v190 = vadd.f32 %v37, %v189
  %v191 = vpop.f32.mrf.mxu0
  %v192 = vadd.f32 %v41, %v191
  %193 = vmatprep.mubr.bf16.mxu0 0
  %194 = vmatmul.mubr.bf16.gmra.mxu0 %v114
  %v195 = vpop.f32.mrf.mxu0
  %v196 = vadd.f32 %v37, %v195
  %v197 = vpop.f32.mrf.mxu0
  %v198 = vadd.f32 %v41, %v197
  %v199 = vpop.f32.mrf.mxu0
  %v200 = vadd.f32 %v37, %v199
  %v201 = vpop.f32.mrf.mxu0
  %v202 = vadd.f32 %v41, %v201
  %203 = vmatprep.mubr.bf16.mxu0 0
  %204 = vmatmul.mubr.bf16.gmra.mxu0 %v117
  %v205 = vpop.f32.mrf.mxu0
  %v206 = vadd.f32 %v37, %v205
  %v207 = vpop.f32.mrf.mxu0
  %v208 = vadd.f32 %v41, %v207
  %v209 = vpop.f32.mrf.mxu0
  %v210 = vadd.f32 %v37, %v209
  %v211 = vpop.f32.mrf.mxu0
  %v212 = vadd.f32 %v41, %v211
  %213 = vmatprep.mubr.bf16.mxu0 0
  %214 = vmatmul.mubr.bf16.gmra.mxu0 %v120
  %v215 = vpop.f32.mrf.mxu0
  %v216 = vadd.f32 %v37, %v215
  %v217 = vpop.f32.mrf.mxu0
  %v218 = vadd.f32 %v41, %v217
  %v219 = vpop.f32.mrf.mxu0
  %v220 = vadd.f32 %v37, %v219
  %v221 = vpop.f32.mrf.mxu0
  %v222 = vadd.f32 %v41, %v221
  %223 = vmatprep.mubr.bf16.mxu0 0
  %224 = vmatmul.mubr.bf16.gmra.mxu0 %v123
  %v225 = vpop.f32.mrf.mxu0
  %v226 = vadd.f32 %v37, %v225
  %v227 = vpop.f32.mrf.mxu0
  %v228 = vadd.f32 %v41, %v227
  %v229 = vpop.f32.mrf.mxu0
  %v230 = vadd.f32 %v37, %v229
  %v231 = vpop.f32.mrf.mxu0
  %v232 = vadd.f32 %v41, %v231
  %233 = vmatprep.mubr.bf16.mxu0 0
  %234 = vmatmul.mubr.bf16.gmra.mxu0 %v126
  %v235 = vpop.f32.mrf.mxu0
  %v236 = vadd.f32 %v37, %v235
  %v237 = vpop.f32.mrf.mxu0
  %v238 = vadd.f32 %v41, %v237
  %v239 = vpop.f32.mrf.mxu0
  %v240 = vadd.f32 %v37, %v239
  %v241 = vpop.f32.mrf.mxu0
  %v242 = vadd.f32 %v41, %v241
  %243 = vmatprep.mubr.bf16.mxu0 0
  %244 = vmatmul.mubr.bf16.gmra.mxu0 %v129
  %v245 = vpop.f32.mrf.mxu0
  %v246 = vadd.f32 %v37, %v245
  %v247 = vpop.f32.mrf.mxu0
  %v248 = vadd.f32 %v41, %v247
  %v249 = vpop.f32.mrf.mxu0
  %v250 = vadd.f32 %v37, %v249
  %v251 = vpop.f32.mrf.mxu0
  %v252 = vadd.f32 %v41, %v251
  %253 = vdwg.mxu0
  %254 = vmatprep.subr.bf16.mxu0 0
  %255 = vmatpush1.bf16.msra.mxu0 0
  %256 = vmatprep.subr.bf16.mxu0 0
  %257 = vmatpush1.bf16.msra.mxu0 0
  %258 = vmatprep.subr.bf16.mxu0 0
  %259 = vmatpush1.bf16.msra.mxu0 0
  %260 = vmatprep.subr.bf16.mxu0 0
  %261 = vmatpush1.bf16.msra.mxu0 0
  %262 = vmatprep.subr.bf16.mxu0 0
  %263 = vmatpush1.bf16.msra.mxu0 0
  %264 = vmatprep.subr.bf16.mxu0 0
  %265 = vmatpush1.bf16.msra.mxu0 0
  %266 = vmatprep.subr.bf16.mxu0 0
  %267 = vmatpush1.bf16.msra.mxu0 0
  %268 = vmatprep.subr.bf16.mxu0 0
  %269 = vmatpush1.bf16.msra.mxu0 %v139
  %270 = vmatprep.subr.bf16.mxu0 0
  %271 = vmatpush2.bf16.msra.mxu0 0
  %272 = vmatprep.subr.bf16.mxu0 0
  %273 = vmatpush2.bf16.msra.mxu0 0
  %274 = vmatprep.subr.bf16.mxu0 0
  %275 = vmatpush2.bf16.msra.mxu0 0
  %276 = vmatprep.subr.bf16.mxu0 0
  %277 = vmatpush2.bf16.msra.mxu0 0
  %278 = vmatprep.subr.bf16.mxu0 0
  %279 = vmatpush2.bf16.msra.mxu0 0
  %280 = vmatprep.subr.bf16.mxu0 0
  %281 = vmatpush2.bf16.msra.mxu0 0
  %282 = vmatprep.subr.bf16.mxu0 0
  %283 = vmatpush2.bf16.msra.mxu0 0
  %284 = vmatprep.subr.bf16.mxu0 0
  %285 = vmatpush2.bf16.msra.mxu0 0
  %286 = vmatprep.mubr.bf16.mxu0 0
  %287 = vmatmul.mubr.bf16.gmra.mxu0 %v108
  %v288 = vpop.f32.mrf.mxu0
  %v289 = vadd.f32 %v45, %v288
  %v290 = vpop.f32.mrf.mxu0
  %v291 = vpop.f32.mrf.mxu0
  %v292 = vadd.f32 %v45, %v291
  %v293 = vpop.f32.mrf.mxu0
  %294 = vmatprep.mubr.bf16.mxu0 0
  %295 = vmatmul.mubr.bf16.gmra.mxu0 %v111
  %v296 = vpop.f32.mrf.mxu0
  %v297 = vadd.f32 %v45, %v296
  %v298 = vpop.f32.mrf.mxu0
  %v299 = vpop.f32.mrf.mxu0
  %v300 = vadd.f32 %v45, %v299
  %v301 = vpop.f32.mrf.mxu0
  %302 = vmatprep.mubr.bf16.mxu0 0
  %303 = vmatmul.mubr.bf16.gmra.mxu0 %v114
  %v304 = vpop.f32.mrf.mxu0
  %v305 = vadd.f32 %v45, %v304
  %v306 = vpop.f32.mrf.mxu0
  %v307 = vpop.f32.mrf.mxu0
  %v308 = vadd.f32 %v45, %v307
  %v309 = vpop.f32.mrf.mxu0
  %310 = vmatprep.mubr.bf16.mxu0 0
  %311 = vmatmul.mubr.bf16.gmra.mxu0 %v117
  %v312 = vpop.f32.mrf.mxu0
  %v313 = vadd.f32 %v45, %v312
  %v314 = vpop.f32.mrf.mxu0
  %v315 = vpop.f32.mrf.mxu0
  %v316 = vadd.f32 %v45, %v315
  %v317 = vpop.f32.mrf.mxu0
  %318 = vmatprep.mubr.bf16.mxu0 0
  %319 = vmatmul.mubr.bf16.gmra.mxu0 %v120
  %v320 = vpop.f32.mrf.mxu0
  %v321 = vadd.f32 %v45, %v320
  %v322 = vpop.f32.mrf.mxu0
  %v323 = vpop.f32.mrf.mxu0
  %v324 = vadd.f32 %v45, %v323
  %v325 = vpop.f32.mrf.mxu0
  %326 = vmatprep.mubr.bf16.mxu0 0
  %327 = vmatmul.mubr.bf16.gmra.mxu0 %v123
  %v328 = vpop.f32.mrf.mxu0
  %v329 = vadd.f32 %v45, %v328
  %v330 = vpop.f32.mrf.mxu0
  %v331 = vpop.f32.mrf.mxu0
  %v332 = vadd.f32 %v45, %v331
  %v333 = vpop.f32.mrf.mxu0
  %334 = vmatprep.mubr.bf16.mxu0 0
  %335 = vmatmul.mubr.bf16.gmra.mxu0 %v126
  %v336 = vpop.f32.mrf.mxu0
  %v337 = vadd.f32 %v45, %v336
  %v338 = vpop.f32.mrf.mxu0
  %v339 = vpop.f32.mrf.mxu0
  %v340 = vadd.f32 %v45, %v339
  %v341 = vpop.f32.mrf.mxu0
  %342 = vmatprep.mubr.bf16.mxu0 0
  %343 = vmatmul.mubr.bf16.gmra.mxu0 %v129
  %v344 = vpop.f32.mrf.mxu0
  %v345 = vadd.f32 %v45, %v344
  %v346 = vpop.f32.mrf.mxu0
  %v347 = vpop.f32.mrf.mxu0
  %v348 = vadd.f32 %v45, %v347
  %v349 = vpop.f32.mrf.mxu0
  %350 = vdwg.mxu0
  %v351 = vpack.c.bf16 %v180, %v176
  %v352 = vpack.c.bf16 %v182, %v178
  %v353 = vpack.c.bf16 %v292, %v289
  %v354 = vpack.c.bf16 %v190, %v186
  %v355 = vpack.c.bf16 %v192, %v188
  %v356 = vpack.c.bf16 %v300, %v297
  %v357 = vpack.c.bf16 %v200, %v196
  %v358 = vpack.c.bf16 %v202, %v198
  %v359 = vpack.c.bf16 %v308, %v305
  %v360 = vpack.c.bf16 %v210, %v206
  %v361 = vpack.c.bf16 %v212, %v208
  %v362 = vpack.c.bf16 %v316, %v313
  %v363 = vpack.c.bf16 %v220, %v216
  %v364 = vpack.c.bf16 %v222, %v218
  %v365 = vpack.c.bf16 %v324, %v321
  %v366 = vpack.c.bf16 %v230, %v226
  %v367 = vpack.c.bf16 %v232, %v228
  %v368 = vpack.c.bf16 %v332, %v329
  %v369 = vpack.c.bf16 %v240, %v236
  %v370 = vpack.c.bf16 %v242, %v238
  %v371 = vpack.c.bf16 %v340, %v337
  %v372 = vpack.c.bf16 %v250, %v246
  %v373 = vpack.c.bf16 %v252, %v248
  %v374 = vpack.c.bf16 %v348, %v345
  %v399 = vunpack.c.l.b16 %v351
  %v400 = vunpack.c.l.b16 %v352
  %v401 = vunpack.c.l.b16 %v353
  %v402 = vunpack.c.h.b16 %v351
  %v403 = vunpack.c.h.b16 %v352
  %v404 = vunpack.c.h.b16 %v353
  %v405 = vunpack.c.l.b16 %v354
  %v406 = vunpack.c.l.b16 %v355
  %v407 = vunpack.c.l.b16 %v356
  %v408 = vunpack.c.h.b16 %v354
  %v409 = vunpack.c.h.b16 %v355
  %v410 = vunpack.c.h.b16 %v356
  %v411 = vunpack.c.l.b16 %v357
  %v412 = vunpack.c.l.b16 %v358
  %v413 = vunpack.c.l.b16 %v359
  %v414 = vunpack.c.h.b16 %v357
  %v415 = vunpack.c.h.b16 %v358
  %v416 = vunpack.c.h.b16 %v359
  %v417 = vunpack.c.l.b16 %v360
  %v418 = vunpack.c.l.b16 %v361
  %v419 = vunpack.c.l.b16 %v362
  %v420 = vunpack.c.h.b16 %v360
  %v421 = vunpack.c.h.b16 %v361
  %v422 = vunpack.c.h.b16 %v362
  %v423 = vunpack.c.l.b16 %v363
  %v424 = vunpack.c.l.b16 %v364
  %v425 = vunpack.c.l.b16 %v365
  %v426 = vunpack.c.h.b16 %v363
  %v427 = vunpack.c.h.b16 %v364
  %v428 = vunpack.c.h.b16 %v365
  %v429 = vunpack.c.l.b16 %v366
  %v430 = vunpack.c.l.b16 %v367
  %v431 = vunpack.c.l.b16 %v368
  %v432 = vunpack.c.h.b16 %v366
  %v433 = vunpack.c.h.b16 %v367
  %v434 = vunpack.c.h.b16 %v368
  %v435 = vunpack.c.l.b16 %v369
  %v436 = vunpack.c.l.b16 %v370
  %v437 = vunpack.c.l.b16 %v371
  %v438 = vunpack.c.h.b16 %v369
  %v439 = vunpack.c.h.b16 %v370
  %v440 = vunpack.c.h.b16 %v371
  %v441 = vunpack.c.l.b16 %v372
  %v442 = vunpack.c.l.b16 %v373
  %v443 = vunpack.c.l.b16 %v374
  %v444 = vunpack.c.h.b16 %v372
  %v445 = vunpack.c.h.b16 %v373
  %v446 = vunpack.c.h.b16 %v374
  %v447 = vpack.c.b16 %v400, %v399
  %v448 = vpack.c.b16 %v401, %v401
  %v449 = vpack.c.b16 %v403, %v402
  %v450 = vpack.c.b16 %v404, %v404
  %v451 = vpack.c.b16 %v406, %v405
  %v452 = vpack.c.b16 %v407, %v407
  %v453 = vpack.c.b16 %v409, %v408
  %v454 = vpack.c.b16 %v410, %v410
  %v455 = vpack.c.b16 %v412, %v411
  %v456 = vpack.c.b16 %v413, %v413
  %v457 = vpack.c.b16 %v415, %v414
  %v458 = vpack.c.b16 %v416, %v416
  %v459 = vpack.c.b16 %v418, %v417
  %v460 = vpack.c.b16 %v419, %v419
  %v461 = vpack.c.b16 %v421, %v420
  %v462 = vpack.c.b16 %v422, %v422
  %v463 = vpack.c.b16 %v424, %v423
  %v464 = vpack.c.b16 %v425, %v425
  %v465 = vpack.c.b16 %v427, %v426
  %v466 = vpack.c.b16 %v428, %v428
  %v467 = vpack.c.b16 %v430, %v429
  %v468 = vpack.c.b16 %v431, %v431
  %v469 = vpack.c.b16 %v433, %v432
  %v470 = vpack.c.b16 %v434, %v434
  %v471 = vpack.c.b16 %v436, %v435
  %v472 = vpack.c.b16 %v437, %v437
  %v473 = vpack.c.b16 %v439, %v438
  %v474 = vpack.c.b16 %v440, %v440
  %v475 = vpack.c.b16 %v442, %v441
  %v476 = vpack.c.b16 %v443, %v443
  %v477 = vpack.c.b16 %v445, %v444
  %v478 = vpack.c.b16 %v446, %v446
  %511 = vst [vmem:[%s3] sm:$0xff] %v447
  %512 = vst [vmem:[%s3 + $0x8] sm:$0xf] %v448
  %513 = vst [vmem:[%s3 + $0xc] sm:$0xff] %v449
  %514 = vst [vmem:[%s3 + $0x14] sm:$0xf] %v450
  %515 = vst [vmem:[%s3 + $0x18] sm:$0xff] %v451
  %516 = vst [vmem:[%s3 + $0x20] sm:$0xf] %v452
  %517 = vst [vmem:[%s3 + $0x24] sm:$0xff] %v453
  %518 = vst [vmem:[%s3 + $0x2c] sm:$0xf] %v454
  %519 = vst [vmem:[%s3 + $0x30] sm:$0xff] %v455
  %520 = vst [vmem:[%s3 + $0x38] sm:$0xf] %v456
  %521 = vst [vmem:[%s3 + $0x3c] sm:$0xff] %v457
  %522 = vst [vmem:[%s3 + $0x44] sm:$0xf] %v458
  %523 = vst [vmem:[%s3 + $0x48] sm:$0xff] %v459
  %524 = vst [vmem:[%s3 + $0x50] sm:$0xf] %v460
  %525 = vst [vmem:[%s3 + $0x54] sm:$0xff] %v461
  %526 = vst [vmem:[%s3 + $0x5c] sm:$0xf] %v462
  %527 = vst [vmem:[%s3 + $0x60] sm:$0xff] %v463
  %528 = vst [vmem:[%s3 + $0x68] sm:$0xf] %v464
  %529 = vst [vmem:[%s3 + $0x6c] sm:$0xff] %v465
  %530 = vst [vmem:[%s3 + $0x74] sm:$0xf] %v466
  %531 = vst [vmem:[%s3 + $0x78] sm:$0xff] %v467
  %532 = vst [vmem:[%s3 + $0x80] sm:$0xf] %v468
  %533 = vst [vmem:[%s3 + $0x84] sm:$0xff] %v469
  %534 = vst [vmem:[%s3 + $0x8c] sm:$0xf] %v470
  %535 = vst [vmem:[%s3 + $0x90] sm:$0xff] %v471
  %536 = vst [vmem:[%s3 + $0x98] sm:$0xf] %v472
  %537 = vst [vmem:[%s3 + $0x9c] sm:$0xff] %v473
  %538 = vst [vmem:[%s3 + $0xa4] sm:$0xf] %v474
  %539 = vst [vmem:[%s3 + $0xa8] sm:$0xff] %v475
  %540 = vst [vmem:[%s3 + $0xb0] sm:$0xf] %v476
  %541 = vst [vmem:[%s3 + $0xb4] sm:$0xff] %v477
  %542 = vst [vmem:[%s3 + $0xbc] sm:$0xf] %v478
  // Predicated region
  $region14: #{gru_model_forward.5} parent=0 // pred_check
    _
  $region15: #{gru_model_forward.5} parent=0 // pred_check_branch
    %544 = sbr.rel (0) target = $region17
  $region16: #{gru_model_forward.5} parent=0 // pred_region
    _
  $region17: #{gru_model_forward.5} parent=0 // pred_fallthru
    _
  // Predicated region
  $region18: #{gru_model_forward.5} parent=0 // pred_check
    _
  $region19: #{gru_model_forward.5} parent=0 // pred_check_branch
    %546 = sbr.rel (0) target = $region21
  $region20: #{gru_model_forward.5} parent=0 // pred_region
    _
  $region21: #{gru_model_forward.5} parent=0 // pred_fallthru
    _

// kernel: gru_model_forward.7
$region0: #{gru_model_forward.7}
  #allocation0 [shape = 'u32[]', space=smem, size = 0x4, offset = 0x4, fixed_abs, tag = 'smem constant byte address 0x4 - core index']
  #allocation1 [shape = 'u32[144,128]{1,0:T(1,128)}', space=vmem, size = 0x12000, scoped, tag = 'internal scratch']
  %s0 = inlined_call_operand.vmem [shape: bf16[128,128], index: 0, kind: input, shape index: {}]
  %s1 = inlined_call_operand.vmem [shape: bf16[128,384], index: 1, kind: input, shape index: {}]
  %s2 = inlined_call_operand.vmem [shape: f32[1,384], index: 2, kind: input, shape index: {}]
  %s3 = inlined_call_operand.vmem [shape: bf16[128,384], index: 3, kind: output, shape index: {}]
  %s4 = sld [smem:[#allocation0]]
  $region22: #{gru_model_forward.7} parent=0
    _
  %s6 = ssub.s32 1, %s4
  %s7 = scalar_select 0, %s6, %s4
  // Predicated region
  $region2: #{gru_model_forward.7} parent=0 // pred_check
    _
  $region3: #{gru_model_forward.7} parent=0 // pred_check_branch
    %9 = sbr.rel (0) target = $region5
  $region4: #{gru_model_forward.7} parent=0 // pred_region
    _
  $region5: #{gru_model_forward.7} parent=0 // pred_fallthru
    _
  // Predicated region
  $region6: #{gru_model_forward.7} parent=0 // pred_check
    _
  $region7: #{gru_model_forward.7} parent=0 // pred_check_branch
    %11 = sbr.rel (0) target = $region9
  $region8: #{gru_model_forward.7} parent=0 // pred_region
    _
  $region9: #{gru_model_forward.7} parent=0 // pred_fallthru
    _
  // Predicated region
  $region10: #{gru_model_forward.7} parent=0 // pred_check
    _
  $region11: #{gru_model_forward.7} parent=0 // pred_check_branch
    %13 = sbr.rel (0) target = $region13
  $region12: #{gru_model_forward.7} parent=0 // pred_region
    _
  $region13: #{gru_model_forward.7} parent=0 // pred_fallthru
    _
  %v15 = vld [vmem:[%s0] sm:$0xf]
  %v16 = vld [vmem:[%s0 + $0x4] sm:$0xf]
  %v17 = vld [vmem:[%s0 + $0x8] sm:$0xf]
  %v18 = vld [vmem:[%s0 + $0xc] sm:$0xf]
  %v19 = vld [vmem:[%s0 + $0x10] sm:$0xf]
  %v20 = vld [vmem:[%s0 + $0x14] sm:$0xf]
  %v21 = vld [vmem:[%s0 + $0x18] sm:$0xf]
  %v22 = vld [vmem:[%s0 + $0x1c] sm:$0xf]
  %v23 = vld [vmem:[%s0 + $0x20] sm:$0xf]
  %v24 = vld [vmem:[%s0 + $0x24] sm:$0xf]
  %v25 = vld [vmem:[%s0 + $0x28] sm:$0xf]
  %v26 = vld [vmem:[%s0 + $0x2c] sm:$0xf]
  %v27 = vld [vmem:[%s0 + $0x30] sm:$0xf]
  %v28 = vld [vmem:[%s0 + $0x34] sm:$0xf]
  %v29 = vld [vmem:[%s0 + $0x38] sm:$0xf]
  %v30 = vld [vmem:[%s0 + $0x3c] sm:$0xf]
  %v31 = vld [vmem:[%s1] sm:$0xff]
  %v32 = vld [vmem:[%s1 + $0x8] sm:$0xf]
  %v33 = vld [vmem:[%s1 + $0xc] sm:$0xff]
  %v34 = vld [vmem:[%s1 + $0x14] sm:$0xf]
  %v35 = vld [vmem:[%s1 + $0x18] sm:$0xff]
  %v36 = vld [vmem:[%s1 + $0x20] sm:$0xf]
  %v37 = vld [vmem:[%s1 + $0x24] sm:$0xff]
  %v38 = vld [vmem:[%s1 + $0x2c] sm:$0xf]
  %v39 = vld [vmem:[%s1 + $0x30] sm:$0xff]
  %v40 = vld [vmem:[%s1 + $0x38] sm:$0xf]
  %v41 = vld [vmem:[%s1 + $0x3c] sm:$0xff]
  %v42 = vld [vmem:[%s1 + $0x44] sm:$0xf]
  %v43 = vld [vmem:[%s1 + $0x48] sm:$0xff]
  %v44 = vld [vmem:[%s1 + $0x50] sm:$0xf]
  %v45 = vld [vmem:[%s1 + $0x54] sm:$0xff]
  %v46 = vld [vmem:[%s1 + $0x5c] sm:$0xf]
  %v47 = vld [vmem:[%s1 + $0x60] sm:$0xff]
  %v48 = vld [vmem:[%s1 + $0x68] sm:$0xf]
  %v49 = vld [vmem:[%s1 + $0x6c] sm:$0xff]
  %v50 = vld [vmem:[%s1 + $0x74] sm:$0xf]
  %v51 = vld [vmem:[%s1 + $0x78] sm:$0xff]
  %v52 = vld [vmem:[%s1 + $0x80] sm:$0xf]
  %v53 = vld [vmem:[%s1 + $0x84] sm:$0xff]
  %v54 = vld [vmem:[%s1 + $0x8c] sm:$0xf]
  %v55 = vld [vmem:[%s1 + $0x90] sm:$0xff]
  %v56 = vld [vmem:[%s1 + $0x98] sm:$0xf]
  %v57 = vld [vmem:[%s1 + $0x9c] sm:$0xff]
  %v58 = vld [vmem:[%s1 + $0xa4] sm:$0xf]
  %v59 = vld [vmem:[%s1 + $0xa8] sm:$0xff]
  %v60 = vld [vmem:[%s1 + $0xb0] sm:$0xf]
  %v61 = vld [vmem:[%s1 + $0xb4] sm:$0xff]
  %v62 = vld [vmem:[%s1 + $0xbc] sm:$0xf]
  %v63 = vld [vmem:[%s2] sm:$0x7]
  %v65 = vlaneseq
  %v66 = vshrl.u32 %v65, 7
  %v67 = vsub.s32 0, %v66
  %v68 = vrot.slane %v63, %v67
  %v69 = vlaneseq
  %v70 = vshrl.u32 %v69, 7
  %v71 = vsub.s32 1, %v70
  %v72 = vrot.slane %v63, %v71
  %v73 = vlaneseq
  %v74 = vshrl.u32 %v73, 7
  %v75 = vsub.s32 2, %v74
  %v76 = vrot.slane %v63, %v75
  %v96 = vunpack.c.l.b16 %v15
  %v97 = vunpack.c.l.b16 %v16
  %v98 = vunpack.c.l.b16 %v17
  %v99 = vunpack.c.l.b16 %v18
  %v100 = vunpack.c.l.b16 %v19
  %v101 = vunpack.c.l.b16 %v20
  %v102 = vunpack.c.l.b16 %v21
  %v103 = vunpack.c.l.b16 %v22
  %v104 = vunpack.c.l.b16 %v23
  %v105 = vunpack.c.l.b16 %v24
  %v106 = vunpack.c.l.b16 %v25
  %v107 = vunpack.c.l.b16 %v26
  %v108 = vunpack.c.l.b16 %v27
  %v109 = vunpack.c.l.b16 %v28
  %v110 = vunpack.c.l.b16 %v29
  %v111 = vunpack.c.l.b16 %v30
  %v112 = vpack.c.b16 %v97, %v96
  %v113 = vpack.c.b16 %v99, %v98
  %v114 = vpack.c.b16 %v101, %v100
  %v115 = vpack.c.b16 %v103, %v102
  %v116 = vpack.c.b16 %v105, %v104
  %v117 = vpack.c.b16 %v107, %v106
  %v118 = vpack.c.b16 %v109, %v108
  %v119 = vpack.c.b16 %v111, %v110
  %v160 = vunpack.c.l.b16 %v31
  %v161 = vunpack.c.h.b16 %v31
  %v162 = vunpack.c.l.b16 %v32
  %v163 = vunpack.c.l.b16 %v33
  %v164 = vunpack.c.h.b16 %v33
  %v165 = vunpack.c.l.b16 %v34
  %v166 = vunpack.c.l.b16 %v35
  %v167 = vunpack.c.h.b16 %v35
  %v168 = vunpack.c.l.b16 %v36
  %v169 = vunpack.c.l.b16 %v37
  %v170 = vunpack.c.h.b16 %v37
  %v171 = vunpack.c.l.b16 %v38
  %v172 = vunpack.c.l.b16 %v39
  %v173 = vunpack.c.h.b16 %v39
  %v174 = vunpack.c.l.b16 %v40
  %v175 = vunpack.c.l.b16 %v41
  %v176 = vunpack.c.h.b16 %v41
  %v177 = vunpack.c.l.b16 %v42
  %v178 = vunpack.c.l.b16 %v43
  %v179 = vunpack.c.h.b16 %v43
  %v180 = vunpack.c.l.b16 %v44
  %v181 = vunpack.c.l.b16 %v45
  %v182 = vunpack.c.h.b16 %v45
  %v183 = vunpack.c.l.b16 %v46
  %v184 = vunpack.c.l.b16 %v47
  %v185 = vunpack.c.h.b16 %v47
  %v186 = vunpack.c.l.b16 %v48
  %v187 = vunpack.c.l.b16 %v49
  %v188 = vunpack.c.h.b16 %v49
  %v189 = vunpack.c.l.b16 %v50
  %v190 = vunpack.c.l.b16 %v51
  %v191 = vunpack.c.h.b16 %v51
  %v192 = vunpack.c.l.b16 %v52
  %v193 = vunpack.c.l.b16 %v53
  %v194 = vunpack.c.h.b16 %v53
  %v195 = vunpack.c.l.b16 %v54
  %v196 = vunpack.c.l.b16 %v55
  %v197 = vunpack.c.h.b16 %v55
  %v198 = vunpack.c.l.b16 %v56
  %v199 = vunpack.c.l.b16 %v57
  %v200 = vunpack.c.h.b16 %v57
  %v201 = vunpack.c.l.b16 %v58
  %v202 = vunpack.c.l.b16 %v59
  %v203 = vunpack.c.h.b16 %v59
  %v204 = vunpack.c.l.b16 %v60
  %v205 = vunpack.c.l.b16 %v61
  %v206 = vunpack.c.h.b16 %v61
  %v207 = vunpack.c.l.b16 %v62
  %v208 = vpack.c.b16 %v163, %v160
  %v209 = vpack.c.b16 %v164, %v161
  %v210 = vpack.c.b16 %v165, %v162
  %v211 = vpack.c.b16 %v169, %v166
  %v212 = vpack.c.b16 %v170, %v167
  %v213 = vpack.c.b16 %v171, %v168
  %v214 = vpack.c.b16 %v175, %v172
  %v215 = vpack.c.b16 %v176, %v173
  %v216 = vpack.c.b16 %v177, %v174
  %v217 = vpack.c.b16 %v181, %v178
  %v218 = vpack.c.b16 %v182, %v179
  %v219 = vpack.c.b16 %v183, %v180
  %v220 = vpack.c.b16 %v187, %v184
  %v221 = vpack.c.b16 %v188, %v185
  %v222 = vpack.c.b16 %v189, %v186
  %v223 = vpack.c.b16 %v193, %v190
  %v224 = vpack.c.b16 %v194, %v191
  %v225 = vpack.c.b16 %v195, %v192
  %v226 = vpack.c.b16 %v199, %v196
  %v227 = vpack.c.b16 %v200, %v197
  %v228 = vpack.c.b16 %v201, %v198
  %v229 = vpack.c.b16 %v205, %v202
  %v230 = vpack.c.b16 %v206, %v203
  %v231 = vpack.c.b16 %v207, %v204
  %256 = vmatprep.subr.bf16.mxu0 %v230
  %257 = vmatpush1.bf16.msra.mxu0 %v229
  %258 = vmatprep.subr.bf16.mxu0 %v227
  %259 = vmatpush1.bf16.msra.mxu0 %v226
  %260 = vmatprep.subr.bf16.mxu0 %v224
  %261 = vmatpush1.bf16.msra.mxu0 %v223
  %262 = vmatprep.subr.bf16.mxu0 %v221
  %263 = vmatpush1.bf16.msra.mxu0 %v220
  %264 = vmatprep.subr.bf16.mxu0 %v218
  %265 = vmatpush1.bf16.msra.mxu0 %v217
  %266 = vmatprep.subr.bf16.mxu0 %v215
  %267 = vmatpush1.bf16.msra.mxu0 %v214
  %268 = vmatprep.subr.bf16.mxu0 %v212
  %269 = vmatpush1.bf16.msra.mxu0 %v211
  %270 = vmatprep.subr.bf16.mxu0 %v209
  %271 = vmatpush1.bf16.msra.mxu0 %v208
  %272 = vmatprep.subr.bf16.mxu0 0
  %273 = vmatpush2.bf16.msra.mxu0 0
  %274 = vmatprep.subr.bf16.mxu0 0
  %275 = vmatpush2.bf16.msra.mxu0 0
  %276 = vmatprep.subr.bf16.mxu0 0
  %277 = vmatpush2.bf16.msra.mxu0 0
  %278 = vmatprep.subr.bf16.mxu0 0
  %279 = vmatpush2.bf16.msra.mxu0 0
  %280 = vmatprep.subr.bf16.mxu0 0
  %281 = vmatpush2.bf16.msra.mxu0 0
  %282 = vmatprep.subr.bf16.mxu0 0
  %283 = vmatpush2.bf16.msra.mxu0 0
  %284 = vmatprep.subr.bf16.mxu0 0
  %285 = vmatpush2.bf16.msra.mxu0 0
  %286 = vmatprep.subr.bf16.mxu0 0
  %287 = vmatpush2.bf16.msra.mxu0 0
  %288 = vmatprep.mubr.bf16.mxu0 0
  %289 = vmatmul.mubr.bf16.gmra.mxu0 %v112
  %v290 = vpop.f32.mrf.mxu0
  %v291 = vadd.f32 %v68, %v290
  %v292 = vpop.f32.mrf.mxu0
  %v293 = vadd.f32 %v72, %v292
  %v294 = vpop.f32.mrf.mxu0
  %v295 = vadd.f32 %v68, %v294
  %v296 = vpop.f32.mrf.mxu0
  %v297 = vadd.f32 %v72, %v296
  %298 = vmatprep.mubr.bf16.mxu0 0
  %299 = vmatmul.mubr.bf16.gmra.mxu0 %v113
  %v300 = vpop.f32.mrf.mxu0
  %v301 = vadd.f32 %v68, %v300
  %v302 = vpop.f32.mrf.mxu0
  %v303 = vadd.f32 %v72, %v302
  %v304 = vpop.f32.mrf.mxu0
  %v305 = vadd.f32 %v68, %v304
  %v306 = vpop.f32.mrf.mxu0
  %v307 = vadd.f32 %v72, %v306
  %308 = vmatprep.mubr.bf16.mxu0 0
  %309 = vmatmul.mubr.bf16.gmra.mxu0 %v114
  %v310 = vpop.f32.mrf.mxu0
  %v311 = vadd.f32 %v68, %v310
  %v312 = vpop.f32.mrf.mxu0
  %v313 = vadd.f32 %v72, %v312
  %v314 = vpop.f32.mrf.mxu0
  %v315 = vadd.f32 %v68, %v314
  %v316 = vpop.f32.mrf.mxu0
  %v317 = vadd.f32 %v72, %v316
  %318 = vmatprep.mubr.bf16.mxu0 0
  %319 = vmatmul.mubr.bf16.gmra.mxu0 %v115
  %v320 = vpop.f32.mrf.mxu0
  %v321 = vadd.f32 %v68, %v320
  %v322 = vpop.f32.mrf.mxu0
  %v323 = vadd.f32 %v72, %v322
  %v324 = vpop.f32.mrf.mxu0
  %v325 = vadd.f32 %v68, %v324
  %v326 = vpop.f32.mrf.mxu0
  %v327 = vadd.f32 %v72, %v326
  %328 = vmatprep.mubr.bf16.mxu0 0
  %329 = vmatmul.mubr.bf16.gmra.mxu0 %v116
  %v330 = vpop.f32.mrf.mxu0
  %v331 = vadd.f32 %v68, %v330
  %v332 = vpop.f32.mrf.mxu0
  %v333 = vadd.f32 %v72, %v332
  %v334 = vpop.f32.mrf.mxu0
  %v335 = vadd.f32 %v68, %v334
  %v336 = vpop.f32.mrf.mxu0
  %v337 = vadd.f32 %v72, %v336
  %338 = vmatprep.mubr.bf16.mxu0 0
  %339 = vmatmul.mubr.bf16.gmra.mxu0 %v117
  %v340 = vpop.f32.mrf.mxu0
  %v341 = vadd.f32 %v68, %v340
  %v342 = vpop.f32.mrf.mxu0
  %v343 = vadd.f32 %v72, %v342
  %v344 = vpop.f32.mrf.mxu0
  %v345 = vadd.f32 %v68, %v344
  %v346 = vpop.f32.mrf.mxu0
  %v347 = vadd.f32 %v72, %v346
  %348 = vmatprep.mubr.bf16.mxu0 0
  %349 = vmatmul.mubr.bf16.gmra.mxu0 %v118
  %v350 = vpop.f32.mrf.mxu0
  %v351 = vadd.f32 %v68, %v350
  %v352 = vpop.f32.mrf.mxu0
  %v353 = vadd.f32 %v72, %v352
  %v354 = vpop.f32.mrf.mxu0
  %v355 = vadd.f32 %v68, %v354
  %v356 = vpop.f32.mrf.mxu0
  %v357 = vadd.f32 %v72, %v356
  %358 = vmatprep.mubr.bf16.mxu0 0
  %359 = vmatmul.mubr.bf16.gmra.mxu0 %v119
  %v360 = vpop.f32.mrf.mxu0
  %v361 = vadd.f32 %v68, %v360
  %v362 = vpop.f32.mrf.mxu0
  %v363 = vadd.f32 %v72, %v362
  %v364 = vpop.f32.mrf.mxu0
  %v365 = vadd.f32 %v68, %v364
  %v366 = vpop.f32.mrf.mxu0
  %v367 = vadd.f32 %v72, %v366
  %368 = vdwg.mxu0
  %369 = vmatprep.subr.bf16.mxu0 0
  %370 = vmatpush1.bf16.msra.mxu0 %v231
  %371 = vmatprep.subr.bf16.mxu0 0
  %372 = vmatpush1.bf16.msra.mxu0 %v228
  %373 = vmatprep.subr.bf16.mxu0 0
  %374 = vmatpush1.bf16.msra.mxu0 %v225
  %375 = vmatprep.subr.bf16.mxu0 0
  %376 = vmatpush1.bf16.msra.mxu0 %v222
  %377 = vmatprep.subr.bf16.mxu0 0
  %378 = vmatpush1.bf16.msra.mxu0 %v219
  %379 = vmatprep.subr.bf16.mxu0 0
  %380 = vmatpush1.bf16.msra.mxu0 %v216
  %381 = vmatprep.subr.bf16.mxu0 0
  %382 = vmatpush1.bf16.msra.mxu0 %v213
  %383 = vmatprep.subr.bf16.mxu0 0
  %384 = vmatpush1.bf16.msra.mxu0 %v210
  %385 = vmatprep.subr.bf16.mxu0 0
  %386 = vmatpush2.bf16.msra.mxu0 0
  %387 = vmatprep.subr.bf16.mxu0 0
  %388 = vmatpush2.bf16.msra.mxu0 0
  %389 = vmatprep.subr.bf16.mxu0 0
  %390 = vmatpush2.bf16.msra.mxu0 0
  %391 = vmatprep.subr.bf16.mxu0 0
  %392 = vmatpush2.bf16.msra.mxu0 0
  %393 = vmatprep.subr.bf16.mxu0 0
  %394 = vmatpush2.bf16.msra.mxu0 0
  %395 = vmatprep.subr.bf16.mxu0 0
  %396 = vmatpush2.bf16.msra.mxu0 0
  %397 = vmatprep.subr.bf16.mxu0 0
  %398 = vmatpush2.bf16.msra.mxu0 0
  %399 = vmatprep.subr.bf16.mxu0 0
  %400 = vmatpush2.bf16.msra.mxu0 0
  %401 = vmatprep.mubr.bf16.mxu0 0
  %402 = vmatmul.mubr.bf16.gmra.mxu0 %v112
  %v403 = vpop.f32.mrf.mxu0
  %v404 = vadd.f32 %v76, %v403
  %v405 = vpop.f32.mrf.mxu0
  %v406 = vpop.f32.mrf.mxu0
  %v407 = vadd.f32 %v76, %v406
  %v408 = vpop.f32.mrf.mxu0
  %409 = vmatprep.mubr.bf16.mxu0 0
  %410 = vmatmul.mubr.bf16.gmra.mxu0 %v113
  %v411 = vpop.f32.mrf.mxu0
  %v412 = vadd.f32 %v76, %v411
  %v413 = vpop.f32.mrf.mxu0
  %v414 = vpop.f32.mrf.mxu0
  %v415 = vadd.f32 %v76, %v414
  %v416 = vpop.f32.mrf.mxu0
  %417 = vmatprep.mubr.bf16.mxu0 0
  %418 = vmatmul.mubr.bf16.gmra.mxu0 %v114
  %v419 = vpop.f32.mrf.mxu0
  %v420 = vadd.f32 %v76, %v419
  %v421 = vpop.f32.mrf.mxu0
  %v422 = vpop.f32.mrf.mxu0
  %v423 = vadd.f32 %v76, %v422
  %v424 = vpop.f32.mrf.mxu0
  %425 = vmatprep.mubr.bf16.mxu0 0
  %426 = vmatmul.mubr.bf16.gmra.mxu0 %v115
  %v427 = vpop.f32.mrf.mxu0
  %v428 = vadd.f32 %v76, %v427
  %v429 = vpop.f32.mrf.mxu0
  %v430 = vpop.f32.mrf.mxu0
  %v431 = vadd.f32 %v76, %v430
  %v432 = vpop.f32.mrf.mxu0
  %433 = vmatprep.mubr.bf16.mxu0 0
  %434 = vmatmul.mubr.bf16.gmra.mxu0 %v116
  %v435 = vpop.f32.mrf.mxu0
  %v436 = vadd.f32 %v76, %v435
  %v437 = vpop.f32.mrf.mxu0
  %v438 = vpop.f32.mrf.mxu0
  %v439 = vadd.f32 %v76, %v438
  %v440 = vpop.f32.mrf.mxu0
  %441 = vmatprep.mubr.bf16.mxu0 0
  %442 = vmatmul.mubr.bf16.gmra.mxu0 %v117
  %v443 = vpop.f32.mrf.mxu0
  %v444 = vadd.f32 %v76, %v443
  %v445 = vpop.f32.mrf.mxu0
  %v446 = vpop.f32.mrf.mxu0
  %v447 = vadd.f32 %v76, %v446
  %v448 = vpop.f32.mrf.mxu0
  %449 = vmatprep.mubr.bf16.mxu0 0
  %450 = vmatmul.mubr.bf16.gmra.mxu0 %v118
  %v451 = vpop.f32.mrf.mxu0
  %v452 = vadd.f32 %v76, %v451
  %v453 = vpop.f32.mrf.mxu0
  %v454 = vpop.f32.mrf.mxu0
  %v455 = vadd.f32 %v76, %v454
  %v456 = vpop.f32.mrf.mxu0
  %457 = vmatprep.mubr.bf16.mxu0 0
  %458 = vmatmul.mubr.bf16.gmra.mxu0 %v119
  %v459 = vpop.f32.mrf.mxu0
  %v460 = vadd.f32 %v76, %v459
  %v461 = vpop.f32.mrf.mxu0
  %v462 = vpop.f32.mrf.mxu0
  %v463 = vadd.f32 %v76, %v462
  %v464 = vpop.f32.mrf.mxu0
  %465 = vdwg.mxu0
  %v466 = vpack.c.bf16 %v295, %v291
  %v467 = vpack.c.bf16 %v297, %v293
  %v468 = vpack.c.bf16 %v407, %v404
  %v469 = vpack.c.bf16 %v305, %v301
  %v470 = vpack.c.bf16 %v307, %v303
  %v471 = vpack.c.bf16 %v415, %v412
  %v472 = vpack.c.bf16 %v315, %v311
  %v473 = vpack.c.bf16 %v317, %v313
  %v474 = vpack.c.bf16 %v423, %v420
  %v475 = vpack.c.bf16 %v325, %v321
  %v476 = vpack.c.bf16 %v327, %v323
  %v477 = vpack.c.bf16 %v431, %v428
  %v478 = vpack.c.bf16 %v335, %v331
  %v479 = vpack.c.bf16 %v337, %v333
  %v480 = vpack.c.bf16 %v439, %v436
  %v481 = vpack.c.bf16 %v345, %v341
  %v482 = vpack.c.bf16 %v347, %v343
  %v483 = vpack.c.bf16 %v447, %v444
  %v484 = vpack.c.bf16 %v355, %v351
  %v485 = vpack.c.bf16 %v357, %v353
  %v486 = vpack.c.bf16 %v455, %v452
  %v487 = vpack.c.bf16 %v365, %v361
  %v488 = vpack.c.bf16 %v367, %v363
  %v489 = vpack.c.bf16 %v463, %v460
  %v514 = vunpack.c.l.b16 %v466
  %v515 = vunpack.c.l.b16 %v467
  %v516 = vunpack.c.l.b16 %v468
  %v517 = vunpack.c.h.b16 %v466
  %v518 = vunpack.c.h.b16 %v467
  %v519 = vunpack.c.h.b16 %v468
  %v520 = vunpack.c.l.b16 %v469
  %v521 = vunpack.c.l.b16 %v470
  %v522 = vunpack.c.l.b16 %v471
  %v523 = vunpack.c.h.b16 %v469
  %v524 = vunpack.c.h.b16 %v470
  %v525 = vunpack.c.h.b16 %v471
  %v526 = vunpack.c.l.b16 %v472
  %v527 = vunpack.c.l.b16 %v473
  %v528 = vunpack.c.l.b16 %v474
  %v529 = vunpack.c.h.b16 %v472
  %v530 = vunpack.c.h.b16 %v473
  %v531 = vunpack.c.h.b16 %v474
  %v532 = vunpack.c.l.b16 %v475
  %v533 = vunpack.c.l.b16 %v476
  %v534 = vunpack.c.l.b16 %v477
  %v535 = vunpack.c.h.b16 %v475
  %v536 = vunpack.c.h.b16 %v476
  %v537 = vunpack.c.h.b16 %v477
  %v538 = vunpack.c.l.b16 %v478
  %v539 = vunpack.c.l.b16 %v479
  %v540 = vunpack.c.l.b16 %v480
  %v541 = vunpack.c.h.b16 %v478
  %v542 = vunpack.c.h.b16 %v479
  %v543 = vunpack.c.h.b16 %v480
  %v544 = vunpack.c.l.b16 %v481
  %v545 = vunpack.c.l.b16 %v482
  %v546 = vunpack.c.l.b16 %v483
  %v547 = vunpack.c.h.b16 %v481
  %v548 = vunpack.c.h.b16 %v482
  %v549 = vunpack.c.h.b16 %v483
  %v550 = vunpack.c.l.b16 %v484
  %v551 = vunpack.c.l.b16 %v485
  %v552 = vunpack.c.l.b16 %v486
  %v553 = vunpack.c.h.b16 %v484
  %v554 = vunpack.c.h.b16 %v485
  %v555 = vunpack.c.h.b16 %v486
  %v556 = vunpack.c.l.b16 %v487
  %v557 = vunpack.c.l.b16 %v488
  %v558 = vunpack.c.l.b16 %v489
  %v559 = vunpack.c.h.b16 %v487
  %v560 = vunpack.c.h.b16 %v488
  %v561 = vunpack.c.h.b16 %v489
  %v562 = vpack.c.b16 %v515, %v514
  %v563 = vpack.c.b16 %v516, %v516
  %v564 = vpack.c.b16 %v518, %v517
  %v565 = vpack.c.b16 %v519, %v519
  %v566 = vpack.c.b16 %v521, %v520
  %v567 = vpack.c.b16 %v522, %v522
  %v568 = vpack.c.b16 %v524, %v523
  %v569 = vpack.c.b16 %v525, %v525
  %v570 = vpack.c.b16 %v527, %v526
  %v571 = vpack.c.b16 %v528, %v528
  %v572 = vpack.c.b16 %v530, %v529
  %v573 = vpack.c.b16 %v531, %v531
  %v574 = vpack.c.b16 %v533, %v532
  %v575 = vpack.c.b16 %v534, %v534
  %v576 = vpack.c.b16 %v536, %v535
  %v577 = vpack.c.b16 %v537, %v537
  %v578 = vpack.c.b16 %v539, %v538
  %v579 = vpack.c.b16 %v540, %v540
  %v580 = vpack.c.b16 %v542, %v541
  %v581 = vpack.c.b16 %v543, %v543
  %v582 = vpack.c.b16 %v545, %v544
  %v583 = vpack.c.b16 %v546, %v546
  %v584 = vpack.c.b16 %v548, %v547
  %v585 = vpack.c.b16 %v549, %v549
  %v586 = vpack.c.b16 %v551, %v550
  %v587 = vpack.c.b16 %v552, %v552
  %v588 = vpack.c.b16 %v554, %v553
  %v589 = vpack.c.b16 %v555, %v555
  %v590 = vpack.c.b16 %v557, %v556
  %v591 = vpack.c.b16 %v558, %v558
  %v592 = vpack.c.b16 %v560, %v559
  %v593 = vpack.c.b16 %v561, %v561
  %626 = vst [vmem:[%s3] sm:$0xff] %v562
  %627 = vst [vmem:[%s3 + $0x8] sm:$0xf] %v563
  %628 = vst [vmem:[%s3 + $0xc] sm:$0xff] %v564
  %629 = vst [vmem:[%s3 + $0x14] sm:$0xf] %v565
  %630 = vst [vmem:[%s3 + $0x18] sm:$0xff] %v566
  %631 = vst [vmem:[%s3 + $0x20] sm:$0xf] %v567
  %632 = vst [vmem:[%s3 + $0x24] sm:$0xff] %v568
  %633 = vst [vmem:[%s3 + $0x2c] sm:$0xf] %v569
  %634 = vst [vmem:[%s3 + $0x30] sm:$0xff] %v570
  %635 = vst [vmem:[%s3 + $0x38] sm:$0xf] %v571
  %636 = vst [vmem:[%s3 + $0x3c] sm:$0xff] %v572
  %637 = vst [vmem:[%s3 + $0x44] sm:$0xf] %v573
  %638 = vst [vmem:[%s3 + $0x48] sm:$0xff] %v574
  %639 = vst [vmem:[%s3 + $0x50] sm:$0xf] %v575
  %640 = vst [vmem:[%s3 + $0x54] sm:$0xff] %v576
  %641 = vst [vmem:[%s3 + $0x5c] sm:$0xf] %v577
  %642 = vst [vmem:[%s3 + $0x60] sm:$0xff] %v578
  %643 = vst [vmem:[%s3 + $0x68] sm:$0xf] %v579
  %644 = vst [vmem:[%s3 + $0x6c] sm:$0xff] %v580
  %645 = vst [vmem:[%s3 + $0x74] sm:$0xf] %v581
  %646 = vst [vmem:[%s3 + $0x78] sm:$0xff] %v582
  %647 = vst [vmem:[%s3 + $0x80] sm:$0xf] %v583
  %648 = vst [vmem:[%s3 + $0x84] sm:$0xff] %v584
  %649 = vst [vmem:[%s3 + $0x8c] sm:$0xf] %v585
  %650 = vst [vmem:[%s3 + $0x90] sm:$0xff] %v586
  %651 = vst [vmem:[%s3 + $0x98] sm:$0xf] %v587
  %652 = vst [vmem:[%s3 + $0x9c] sm:$0xff] %v588
  %653 = vst [vmem:[%s3 + $0xa4] sm:$0xf] %v589
  %654 = vst [vmem:[%s3 + $0xa8] sm:$0xff] %v590
  %655 = vst [vmem:[%s3 + $0xb0] sm:$0xf] %v591
  %656 = vst [vmem:[%s3 + $0xb4] sm:$0xff] %v592
  %657 = vst [vmem:[%s3 + $0xbc] sm:$0xf] %v593
  // Predicated region
  $region14: #{gru_model_forward.7} parent=0 // pred_check
    _
  $region15: #{gru_model_forward.7} parent=0 // pred_check_branch
    %659 = sbr.rel (0) target = $region17
  $region16: #{gru_model_forward.7} parent=0 // pred_region
    _
  $region17: #{gru_model_forward.7} parent=0 // pred_fallthru
    _
  // Predicated region
  $region18: #{gru_model_forward.7} parent=0 // pred_check
    _
  $region19: #{gru_model_forward.7} parent=0 // pred_check_branch
    %661 = sbr.rel (0) target = $region21
  $region20: #{gru_model_forward.7} parent=0 // pred_region
    _
  $region21: #{gru_model_forward.7} parent=0 // pred_fallthru
    _

// kernel: gru_model_forward.6
$region0: #{gru_model_forward.6}
  #allocation0 [shape = 'u32[]', space=smem, size = 0x4, offset = 0x4, fixed_abs, tag = 'smem constant byte address 0x4 - core index']
  #allocation1 [shape = 'u32[144,128]{1,0:T(1,128)}', space=vmem, size = 0x12000, scoped, tag = 'internal scratch']
  #allocation2 [shape = 'f32[16,128]{1,0:T(8,128)}', space=vmem, size = 0x2000, scoped, tag = 'scratch operand']
  %s0 = inlined_call_operand.vmem [shape: bf16[8,16,384], index: 0, kind: input, shape index: {}]
  %s1 = inlined_call_operand.vmem [shape: bf16[128,384], index: 1, kind: input, shape index: {}]
  %s2 = inlined_call_operand.vmem [shape: f32[1,128], index: 2, kind: input, shape index: {}]
  %s3 = inlined_call_operand.vmem [shape: bf16[8,16,128], index: 3, kind: output, shape index: {}]
  %s4 = sld [smem:[#allocation0]]
  $region26: #{gru_model_forward.6} parent=0
    _
  %s6 = ssub.s32 1, %s4
  %s7 = scalar_select 0, %s6, %s4
  // Predicated region
  $region2: #{gru_model_forward.6} parent=0 // pred_check
    _
  $region3: #{gru_model_forward.6} parent=0 // pred_check_branch
    %9 = sbr.rel (0) target = $region5
  $region4: #{gru_model_forward.6} parent=0 // pred_region
    _
  $region5: #{gru_model_forward.6} parent=0 // pred_fallthru
    _
  // Predicated region
  $region6: #{gru_model_forward.6} parent=0 // pred_check
    _
  $region7: #{gru_model_forward.6} parent=0 // pred_check_branch
    %11 = sbr.rel (0) target = $region9
  $region8: #{gru_model_forward.6} parent=0 // pred_region
    _
  $region9: #{gru_model_forward.6} parent=0 // pred_fallthru
    _
  // Predicated region
  $region10: #{gru_model_forward.6} parent=0 // pred_check
    _
  $region11: #{gru_model_forward.6} parent=0 // pred_check_branch
    %13 = sbr.rel (0) target = $region13
  $region12: #{gru_model_forward.6} parent=0 // pred_region
    _
  $region13: #{gru_model_forward.6} parent=0 // pred_fallthru
    _
  %p15 = scmp.eq.s32.totalorder 0, 0
  // Predicated region
  $region14: #{gru_model_forward.6} parent=0 // pred_check
    %p16 = pneg %p15
  $region15: #{gru_model_forward.6} parent=0 // pred_check_branch
    %18 = sbr.rel (%p16) target = $region17
  $region16: #{gru_model_forward.6} parent=0 // pred_region
    %19 = vst [vmem:[#allocation2] sm:$0xff] 0.0
    %20 = vst [vmem:[#allocation2 + $0x8] sm:$0xff] 0.0
  $region17: #{gru_model_forward.6} parent=0 // pred_fallthru
    _
  %v21 = vld [vmem:[%s1] sm:$0xff]
  %v22 = vld [vmem:[%s1 + $0x8] sm:$0xf]
  %v23 = vld [vmem:[%s1 + $0xc] sm:$0xff]
  %v24 = vld [vmem:[%s1 + $0x14] sm:$0xf]
  %v25 = vld [vmem:[%s1 + $0x18] sm:$0xff]
  %v26 = vld [vmem:[%s1 + $0x20] sm:$0xf]
  %v27 = vld [vmem:[%s1 + $0x24] sm:$0xff]
  %v28 = vld [vmem:[%s1 + $0x2c] sm:$0xf]
  %v29 = vld [vmem:[%s1 + $0x30] sm:$0xff]
  %v30 = vld [vmem:[%s1 + $0x38] sm:$0xf]
  %v31 = vld [vmem:[%s1 + $0x3c] sm:$0xff]
  %v32 = vld [vmem:[%s1 + $0x44] sm:$0xf]
  %v33 = vld [vmem:[%s1 + $0x48] sm:$0xff]
  %v34 = vld [vmem:[%s1 + $0x50] sm:$0xf]
  %v35 = vld [vmem:[%s1 + $0x54] sm:$0xff]
  %v36 = vld [vmem:[%s1 + $0x5c] sm:$0xf]
  %v37 = vld [vmem:[%s1 + $0x60] sm:$0xff]
  %v38 = vld [vmem:[%s1 + $0x68] sm:$0xf]
  %v39 = vld [vmem:[%s1 + $0x6c] sm:$0xff]
  %v40 = vld [vmem:[%s1 + $0x74] sm:$0xf]
  %v41 = vld [vmem:[%s1 + $0x78] sm:$0xff]
  %v42 = vld [vmem:[%s1 + $0x80] sm:$0xf]
  %v43 = vld [vmem:[%s1 + $0x84] sm:$0xff]
  %v44 = vld [vmem:[%s1 + $0x8c] sm:$0xf]
  %v45 = vld [vmem:[%s1 + $0x90] sm:$0xff]
  %v46 = vld [vmem:[%s1 + $0x98] sm:$0xf]
  %v47 = vld [vmem:[%s1 + $0x9c] sm:$0xff]
  %v48 = vld [vmem:[%s1 + $0xa4] sm:$0xf]
  %v49 = vld [vmem:[%s1 + $0xa8] sm:$0xff]
  %v50 = vld [vmem:[%s1 + $0xb0] sm:$0xf]
  %v51 = vld [vmem:[%s1 + $0xb4] sm:$0xff]
  %v52 = vld [vmem:[%s1 + $0xbc] sm:$0xf]
  %v53 = vld [vmem:[%s2] sm:$0x1]
  %v55 = vlaneseq
  %v56 = vshrl.u32 %v55, 7
  %v57 = vsub.s32 0, %v56
  %v58 = vrot.slane %v53, %v57
  %v60 = vld [vmem:[#allocation2] sm:$0xff]
  %v61 = vld [vmem:[#allocation2 + $0x8] sm:$0xff]
  %v62 = vld [vmem:[%s0] sm:$0xff]
  %v63 = vld [vmem:[%s0 + $0x8] sm:$0xf]
  %v64 = vld [vmem:[%s0 + $0xc] sm:$0xff]
  %v65 = vld [vmem:[%s0 + $0x14] sm:$0xf]
  %v66 = vpack.c.bf16 %v61, %v60
  %v99 = vunpack.c.l.b16 %v21
  %v100 = vunpack.c.h.b16 %v21
  %v101 = vunpack.c.l.b16 %v22
  %v102 = vunpack.c.l.b16 %v23
  %v103 = vunpack.c.h.b16 %v23
  %v104 = vunpack.c.l.b16 %v24
  %v105 = vunpack.c.l.b16 %v25
  %v106 = vunpack.c.h.b16 %v25
  %v107 = vunpack.c.l.b16 %v26
  %v108 = vunpack.c.l.b16 %v27
  %v109 = vunpack.c.h.b16 %v27
  %v110 = vunpack.c.l.b16 %v28
  %v111 = vunpack.c.l.b16 %v29
  %v112 = vunpack.c.h.b16 %v29
  %v113 = vunpack.c.l.b16 %v30
  %v114 = vunpack.c.l.b16 %v31
  %v115 = vunpack.c.h.b16 %v31
  %v116 = vunpack.c.l.b16 %v32
  %v117 = vunpack.c.l.b16 %v33
  %v118 = vunpack.c.h.b16 %v33
  %v119 = vunpack.c.l.b16 %v34
  %v120 = vunpack.c.l.b16 %v35
  %v121 = vunpack.c.h.b16 %v35
  %v122 = vunpack.c.l.b16 %v36
  %v123 = vunpack.c.l.b16 %v37
  %v124 = vunpack.c.h.b16 %v37
  %v125 = vunpack.c.l.b16 %v38
  %v126 = vunpack.c.l.b16 %v39
  %v127 = vunpack.c.h.b16 %v39
  %v128 = vunpack.c.l.b16 %v40
  %v129 = vunpack.c.l.b16 %v41
  %v130 = vunpack.c.h.b16 %v41
  %v131 = vunpack.c.l.b16 %v42
  %v132 = vunpack.c.l.b16 %v43
  %v133 = vunpack.c.h.b16 %v43
  %v134 = vunpack.c.l.b16 %v44
  %v135 = vunpack.c.l.b16 %v45
  %v136 = vunpack.c.h.b16 %v45
  %v137 = vunpack.c.l.b16 %v46
  %v138 = vunpack.c.l.b16 %v47
  %v139 = vunpack.c.h.b16 %v47
  %v140 = vunpack.c.l.b16 %v48
  %v141 = vunpack.c.l.b16 %v49
  %v142 = vunpack.c.h.b16 %v49
  %v143 = vunpack.c.l.b16 %v50
  %v144 = vunpack.c.l.b16 %v51
  %v145 = vunpack.c.h.b16 %v51
  %v146 = vunpack.c.l.b16 %v52
  %v147 = vpack.c.b16 %v102, %v99
  %v148 = vpack.c.b16 %v103, %v100
  %v149 = vpack.c.b16 %v104, %v101
  %v150 = vpack.c.b16 %v108, %v105
  %v151 = vpack.c.b16 %v109, %v106
  %v152 = vpack.c.b16 %v110, %v107
  %v153 = vpack.c.b16 %v114, %v111
  %v154 = vpack.c.b16 %v115, %v112
  %v155 = vpack.c.b16 %v116, %v113
  %v156 = vpack.c.b16 %v120, %v117
  %v157 = vpack.c.b16 %v121, %v118
  %v158 = vpack.c.b16 %v122, %v119
  %v159 = vpack.c.b16 %v126, %v123
  %v160 = vpack.c.b16 %v127, %v124
  %v161 = vpack.c.b16 %v128, %v125
  %v162 = vpack.c.b16 %v132, %v129
  %v163 = vpack.c.b16 %v133, %v130
  %v164 = vpack.c.b16 %v134, %v131
  %v165 = vpack.c.b16 %v138, %v135
  %v166 = vpack.c.b16 %v139, %v136
  %v167 = vpack.c.b16 %v140, %v137
  %v168 = vpack.c.b16 %v144, %v141
  %v169 = vpack.c.b16 %v145, %v142
  %v170 = vpack.c.b16 %v146, %v143
  %195 = vmatprep.subr.bf16.mxu0 %v169
  %196 = vmatpush1.bf16.msra.mxu0 %v168
  %197 = vmatprep.subr.bf16.mxu0 %v166
  %198 = vmatpush1.bf16.msra.mxu0 %v165
  %199 = vmatprep.subr.bf16.mxu0 %v163
  %200 = vmatpush1.bf16.msra.mxu0 %v162
  %201 = vmatprep.subr.bf16.mxu0 %v160
  %202 = vmatpush1.bf16.msra.mxu0 %v159
  %203 = vmatprep.subr.bf16.mxu0 %v157
  %204 = vmatpush1.bf16.msra.mxu0 %v156
  %205 = vmatprep.subr.bf16.mxu0 %v154
  %206 = vmatpush1.bf16.msra.mxu0 %v153
  %207 = vmatprep.subr.bf16.mxu0 %v151
  %208 = vmatpush1.bf16.msra.mxu0 %v150
  %209 = vmatprep.subr.bf16.mxu0 %v148
  %210 = vmatpush1.bf16.msra.mxu0 %v147
  %211 = vmatprep.subr.bf16.mxu0 0
  %212 = vmatpush2.bf16.msra.mxu0 0
  %213 = vmatprep.subr.bf16.mxu0 0
  %214 = vmatpush2.bf16.msra.mxu0 0
  %215 = vmatprep.subr.bf16.mxu0 0
  %216 = vmatpush2.bf16.msra.mxu0 0
  %217 = vmatprep.subr.bf16.mxu0 0
  %218 = vmatpush2.bf16.msra.mxu0 0
  %219 = vmatprep.subr.bf16.mxu0 0
  %220 = vmatpush2.bf16.msra.mxu0 0
  %221 = vmatprep.subr.bf16.mxu0 0
  %222 = vmatpush2.bf16.msra.mxu0 0
  %223 = vmatprep.subr.bf16.mxu0 0
  %224 = vmatpush2.bf16.msra.mxu0 0
  %225 = vmatprep.subr.bf16.mxu0 0
  %226 = vmatpush2.bf16.msra.mxu0 0
  %227 = vmatprep.mubr.bf16.mxu0 0
  %228 = vmatmul.mubr.bf16.gmra.mxu0 %v66
  %v229 = vpop.f32.mrf.mxu0
  %v230 = vadd.f32 0.0, %v229
  %v231 = vpop.f32.mrf.mxu0
  %v232 = vadd.f32 0.0, %v231
  %v233 = vpop.f32.mrf.mxu0
  %v234 = vadd.f32 0.0, %v233
  %v235 = vpop.f32.mrf.mxu0
  %v236 = vadd.f32 0.0, %v235
  %237 = vdwg.mxu0
  %238 = vmatprep.subr.bf16.mxu0 0
  %239 = vmatpush1.bf16.msra.mxu0 %v170
  %240 = vmatprep.subr.bf16.mxu0 0
  %241 = vmatpush1.bf16.msra.mxu0 %v167
  %242 = vmatprep.subr.bf16.mxu0 0
  %243 = vmatpush1.bf16.msra.mxu0 %v164
  %244 = vmatprep.subr.bf16.mxu0 0
  %245 = vmatpush1.bf16.msra.mxu0 %v161
  %246 = vmatprep.subr.bf16.mxu0 0
  %247 = vmatpush1.bf16.msra.mxu0 %v158
  %248 = vmatprep.subr.bf16.mxu0 0
  %249 = vmatpush1.bf16.msra.mxu0 %v155
  %250 = vmatprep.subr.bf16.mxu0 0
  %251 = vmatpush1.bf16.msra.mxu0 %v152
  %252 = vmatprep.subr.bf16.mxu0 0
  %253 = vmatpush1.bf16.msra.mxu0 %v149
  %254 = vmatprep.subr.bf16.mxu0 0
  %255 = vmatpush2.bf16.msra.mxu0 0
  %256 = vmatprep.subr.bf16.mxu0 0
  %257 = vmatpush2.bf16.msra.mxu0 0
  %258 = vmatprep.subr.bf16.mxu0 0
  %259 = vmatpush2.bf16.msra.mxu0 0
  %260 = vmatprep.subr.bf16.mxu0 0
  %261 = vmatpush2.bf16.msra.mxu0 0
  %262 = vmatprep.subr.bf16.mxu0 0
  %263 = vmatpush2.bf16.msra.mxu0 0
  %264 = vmatprep.subr.bf16.mxu0 0
  %265 = vmatpush2.bf16.msra.mxu0 0
  %266 = vmatprep.subr.bf16.mxu0 0
  %267 = vmatpush2.bf16.msra.mxu0 0
  %268 = vmatprep.subr.bf16.mxu0 0
  %269 = vmatpush2.bf16.msra.mxu0 0
  %270 = vmatprep.mubr.bf16.mxu0 0
  %271 = vmatmul.mubr.bf16.gmra.mxu0 %v66
  %v272 = vpop.f32.mrf.mxu0
  %v273 = vadd.f32 0.0, %v272
  %v274 = vpop.f32.mrf.mxu0
  %v275 = vpop.f32.mrf.mxu0
  %v276 = vadd.f32 0.0, %v275
  %v277 = vpop.f32.mrf.mxu0
  %278 = vdwg.mxu0
  %v279 = vunpack.c.l.bf16 %v62
  %v280 = vunpack.c.l.bf16 %v64
  %v281 = vadd.f32 %v279, %v230
  %v282 = vadd.f32 %v280, %v234
  %v283 = vxor.u32 %v281, 2147483648
  %v284 = vxor.u32 %v282, 2147483648
  %v285 = vmul.f32 %v283, 1.442695
  %v286 = vpow.pop %v285
  %v287 = vmul.f32 %v284, 1.442695
  %v288 = vpow.pop %v287
  %v289 = vadd.f32 %v286, 1.0
  %v290 = vadd.f32 %v288, 1.0
  %v291 = vrcp.pop %v289
  %v292 = vmul.f32 1.0, %v291
  %v293 = vrcp.pop %v290
  %v294 = vmul.f32 1.0, %v293
  %v297 = vrot.slane %v62, 4
  %v298 = vrot.slane %v64, 4
  %v301 = vunpack.c.l.bf16 %v297
  %v302 = vunpack.c.l.bf16 %v298
  %v303 = vadd.f32 %v301, %v232
  %v304 = vadd.f32 %v302, %v236
  %v305 = vxor.u32 %v303, 2147483648
  %v306 = vxor.u32 %v304, 2147483648
  %v307 = vmul.f32 %v305, 1.442695
  %v308 = vpow.pop %v307
  %v309 = vmul.f32 %v306, 1.442695
  %v310 = vpow.pop %v309
  %v311 = vadd.f32 %v308, 1.0
  %v312 = vadd.f32 %v310, 1.0
  %v313 = vrcp.pop %v311
  %v314 = vmul.f32 1.0, %v313
  %v315 = vrcp.pop %v312
  %v316 = vmul.f32 1.0, %v315
  %v317 = vunpack.c.l.bf16 %v63
  %v318 = vunpack.c.l.bf16 %v65
  %v319 = vadd.f32 %v273, %v58
  %v320 = vadd.f32 %v276, %v58
  %v321 = vmul.f32 %v292, %v319
  %v322 = vmul.f32 %v294, %v320
  %v323 = vadd.f32 %v317, %v321
  %v324 = vadd.f32 %v318, %v322
  %v325 = vtanh.pop %v323
  %v326 = vtanh.pop %v324
  %v327 = vsub.f32 %v60, %v325
  %v328 = vsub.f32 %v61, %v326
  %v329 = vmul.f32 %v314, %v327
  %v330 = vmul.f32 %v316, %v328
  %v331 = vadd.f32 %v325, %v329
  %v332 = vadd.f32 %v326, %v330
  %v333 = vpack.c.bf16 %v332, %v331
  %v335 = vunpack.c.l.b16 %v333
  %v336 = vunpack.c.h.b16 %v333
  %v337 = vpack.c.b16 %v335, %v335
  %v338 = vpack.c.b16 %v336, %v336
  %341 = vst [vmem:[%s3] sm:$0xf] %v337
  %342 = vst [vmem:[%s3 + $0x4] sm:$0xf] %v338
  %s343 = scalar_lea.vmem %s0, 24
  %v344 = vld [vmem:[%s343] sm:$0xff]
  %v345 = vld [vmem:[%s343 + $0x8] sm:$0xf]
  %v346 = vld [vmem:[%s343 + $0xc] sm:$0xff]
  %v347 = vld [vmem:[%s343 + $0x14] sm:$0xf]
  %348 = vmatprep.subr.bf16.mxu0 %v169
  %349 = vmatpush1.bf16.msra.mxu0 %v168
  %350 = vmatprep.subr.bf16.mxu0 %v166
  %351 = vmatpush1.bf16.msra.mxu0 %v165
  %352 = vmatprep.subr.bf16.mxu0 %v163
  %353 = vmatpush1.bf16.msra.mxu0 %v162
  %354 = vmatprep.subr.bf16.mxu0 %v160
  %355 = vmatpush1.bf16.msra.mxu0 %v159
  %356 = vmatprep.subr.bf16.mxu0 %v157
  %357 = vmatpush1.bf16.msra.mxu0 %v156
  %358 = vmatprep.subr.bf16.mxu0 %v154
  %359 = vmatpush1.bf16.msra.mxu0 %v153
  %360 = vmatprep.subr.bf16.mxu0 %v151
  %361 = vmatpush1.bf16.msra.mxu0 %v150
  %362 = vmatprep.subr.bf16.mxu0 %v148
  %363 = vmatpush1.bf16.msra.mxu0 %v147
  %364 = vmatprep.subr.bf16.mxu0 0
  %365 = vmatpush2.bf16.msra.mxu0 0
  %366 = vmatprep.subr.bf16.mxu0 0
  %367 = vmatpush2.bf16.msra.mxu0 0
  %368 = vmatprep.subr.bf16.mxu0 0
  %369 = vmatpush2.bf16.msra.mxu0 0
  %370 = vmatprep.subr.bf16.mxu0 0
  %371 = vmatpush2.bf16.msra.mxu0 0
  %372 = vmatprep.subr.bf16.mxu0 0
  %373 = vmatpush2.bf16.msra.mxu0 0
  %374 = vmatprep.subr.bf16.mxu0 0
  %375 = vmatpush2.bf16.msra.mxu0 0
  %376 = vmatprep.subr.bf16.mxu0 0
  %377 = vmatpush2.bf16.msra.mxu0 0
  %378 = vmatprep.subr.bf16.mxu0 0
  %379 = vmatpush2.bf16.msra.mxu0 0
  %380 = vmatprep.mubr.bf16.mxu0 0
  %381 = vmatmul.mubr.bf16.gmra.mxu0 %v333
  %v382 = vpop.f32.mrf.mxu0
  %v383 = vadd.f32 0.0, %v382
  %v384 = vpop.f32.mrf.mxu0
  %v385 = vadd.f32 0.0, %v384
  %v386 = vpop.f32.mrf.mxu0
  %v387 = vadd.f32 0.0, %v386
  %v388 = vpop.f32.mrf.mxu0
  %v389 = vadd.f32 0.0, %v388
  %390 = vdwg.mxu0
  %391 = vmatprep.subr.bf16.mxu0 0
  %392 = vmatpush1.bf16.msra.mxu0 %v170
  %393 = vmatprep.subr.bf16.mxu0 0
  %394 = vmatpush1.bf16.msra.mxu0 %v167
  %395 = vmatprep.subr.bf16.mxu0 0
  %396 = vmatpush1.bf16.msra.mxu0 %v164
  %397 = vmatprep.subr.bf16.mxu0 0
  %398 = vmatpush1.bf16.msra.mxu0 %v161
  %399 = vmatprep.subr.bf16.mxu0 0
  %400 = vmatpush1.bf16.msra.mxu0 %v158
  %401 = vmatprep.subr.bf16.mxu0 0
  %402 = vmatpush1.bf16.msra.mxu0 %v155
  %403 = vmatprep.subr.bf16.mxu0 0
  %404 = vmatpush1.bf16.msra.mxu0 %v152
  %405 = vmatprep.subr.bf16.mxu0 0
  %406 = vmatpush1.bf16.msra.mxu0 %v149
  %407 = vmatprep.subr.bf16.mxu0 0
  %408 = vmatpush2.bf16.msra.mxu0 0
  %409 = vmatprep.subr.bf16.mxu0 0
  %410 = vmatpush2.bf16.msra.mxu0 0
  %411 = vmatprep.subr.bf16.mxu0 0
  %412 = vmatpush2.bf16.msra.mxu0 0
  %413 = vmatprep.subr.bf16.mxu0 0
  %414 = vmatpush2.bf16.msra.mxu0 0
  %415 = vmatprep.subr.bf16.mxu0 0
  %416 = vmatpush2.bf16.msra.mxu0 0
  %417 = vmatprep.subr.bf16.mxu0 0
  %418 = vmatpush2.bf16.msra.mxu0 0
  %419 = vmatprep.subr.bf16.mxu0 0
  %420 = vmatpush2.bf16.msra.mxu0 0
  %421 = vmatprep.subr.bf16.mxu0 0
  %422 = vmatpush2.bf16.msra.mxu0 0
  %423 = vmatprep.mubr.bf16.mxu0 0
  %424 = vmatmul.mubr.bf16.gmra.mxu0 %v333
  %v425 = vpop.f32.mrf.mxu0
  %v426 = vadd.f32 0.0, %v425
  %v427 = vpop.f32.mrf.mxu0
  %v428 = vpop.f32.mrf.mxu0
  %v429 = vadd.f32 0.0, %v428
  %v430 = vpop.f32.mrf.mxu0
  %431 = vdwg.mxu0
  %v432 = vunpack.c.l.bf16 %v344
  %v433 = vunpack.c.l.bf16 %v346
  %v434 = vadd.f32 %v432, %v383
  %v435 = vadd.f32 %v433, %v387
  %v436 = vxor.u32 %v434, 2147483648
  %v437 = vxor.u32 %v435, 2147483648
  %v438 = vmul.f32 %v436, 1.442695
  %v439 = vpow.pop %v438
  %v440 = vmul.f32 %v437, 1.442695
  %v441 = vpow.pop %v440
  %v442 = vadd.f32 %v439, 1.0
  %v443 = vadd.f32 %v441, 1.0
  %v444 = vrcp.pop %v442
  %v445 = vmul.f32 1.0, %v444
  %v446 = vrcp.pop %v443
  %v447 = vmul.f32 1.0, %v446
  %v450 = vrot.slane %v344, 4
  %v451 = vrot.slane %v346, 4
  %v454 = vunpack.c.l.bf16 %v450
  %v455 = vunpack.c.l.bf16 %v451
  %v456 = vadd.f32 %v454, %v385
  %v457 = vadd.f32 %v455, %v389
  %v458 = vxor.u32 %v456, 2147483648
  %v459 = vxor.u32 %v457, 2147483648
  %v460 = vmul.f32 %v458, 1.442695
  %v461 = vpow.pop %v460
  %v462 = vmul.f32 %v459, 1.442695
  %v463 = vpow.pop %v462
  %v464 = vadd.f32 %v461, 1.0
  %v465 = vadd.f32 %v463, 1.0
  %v466 = vrcp.pop %v464
  %v467 = vmul.f32 1.0, %v466
  %v468 = vrcp.pop %v465
  %v469 = vmul.f32 1.0, %v468
  %v470 = vunpack.c.l.bf16 %v345
  %v471 = vunpack.c.l.bf16 %v347
  %v472 = vadd.f32 %v426, %v58
  %v473 = vadd.f32 %v429, %v58
  %v474 = vmul.f32 %v445, %v472
  %v475 = vmul.f32 %v447, %v473
  %v476 = vadd.f32 %v470, %v474
  %v477 = vadd.f32 %v471, %v475
  %v478 = vtanh.pop %v476
  %v479 = vtanh.pop %v477
  %v480 = vsub.f32 %v331, %v478
  %v481 = vsub.f32 %v332, %v479
  %v482 = vmul.f32 %v467, %v480
  %v483 = vmul.f32 %v469, %v481
  %v484 = vadd.f32 %v478, %v482
  %v485 = vadd.f32 %v479, %v483
  %v486 = vpack.c.bf16 %v485, %v484
  %v488 = vunpack.c.l.b16 %v486
  %v489 = vunpack.c.h.b16 %v486
  %v490 = vpack.c.b16 %v488, %v488
  %v491 = vpack.c.b16 %v489, %v489
  %s494 = scalar_lea.vmem %s3, 8
  %495 = vst [vmem:[%s494] sm:$0xf] %v490
  %496 = vst [vmem:[%s494 + $0x4] sm:$0xf] %v491
  %s497 = scalar_lea.vmem %s0, 48
  %v498 = vld [vmem:[%s497] sm:$0xff]
  %v499 = vld [vmem:[%s497 + $0x8] sm:$0xf]
  %v500 = vld [vmem:[%s497 + $0xc] sm:$0xff]
  %v501 = vld [vmem:[%s497 + $0x14] sm:$0xf]
  %502 = vmatprep.subr.bf16.mxu0 %v169
  %503 = vmatpush1.bf16.msra.mxu0 %v168
  %504 = vmatprep.subr.bf16.mxu0 %v166
  %505 = vmatpush1.bf16.msra.mxu0 %v165
  %506 = vmatprep.subr.bf16.mxu0 %v163
  %507 = vmatpush1.bf16.msra.mxu0 %v162
  %508 = vmatprep.subr.bf16.mxu0 %v160
  %509 = vmatpush1.bf16.msra.mxu0 %v159
  %510 = vmatprep.subr.bf16.mxu0 %v157
  %511 = vmatpush1.bf16.msra.mxu0 %v156
  %512 = vmatprep.subr.bf16.mxu0 %v154
  %513 = vmatpush1.bf16.msra.mxu0 %v153
  %514 = vmatprep.subr.bf16.mxu0 %v151
  %515 = vmatpush1.bf16.msra.mxu0 %v150
  %516 = vmatprep.subr.bf16.mxu0 %v148
  %517 = vmatpush1.bf16.msra.mxu0 %v147
  %518 = vmatprep.subr.bf16.mxu0 0
  %519 = vmatpush2.bf16.msra.mxu0 0
  %520 = vmatprep.subr.bf16.mxu0 0
  %521 = vmatpush2.bf16.msra.mxu0 0
  %522 = vmatprep.subr.bf16.mxu0 0
  %523 = vmatpush2.bf16.msra.mxu0 0
  %524 = vmatprep.subr.bf16.mxu0 0
  %525 = vmatpush2.bf16.msra.mxu0 0
  %526 = vmatprep.subr.bf16.mxu0 0
  %527 = vmatpush2.bf16.msra.mxu0 0
  %528 = vmatprep.subr.bf16.mxu0 0
  %529 = vmatpush2.bf16.msra.mxu0 0
  %530 = vmatprep.subr.bf16.mxu0 0
  %531 = vmatpush2.bf16.msra.mxu0 0
  %532 = vmatprep.subr.bf16.mxu0 0
  %533 = vmatpush2.bf16.msra.mxu0 0
  %534 = vmatprep.mubr.bf16.mxu0 0
  %535 = vmatmul.mubr.bf16.gmra.mxu0 %v486
  %v536 = vpop.f32.mrf.mxu0
  %v537 = vadd.f32 0.0, %v536
  %v538 = vpop.f32.mrf.mxu0
  %v539 = vadd.f32 0.0, %v538
  %v540 = vpop.f32.mrf.mxu0
  %v541 = vadd.f32 0.0, %v540
  %v542 = vpop.f32.mrf.mxu0
  %v543 = vadd.f32 0.0, %v542
  %544 = vdwg.mxu0
  %545 = vmatprep.subr.bf16.mxu0 0
  %546 = vmatpush1.bf16.msra.mxu0 %v170
  %547 = vmatprep.subr.bf16.mxu0 0
  %548 = vmatpush1.bf16.msra.mxu0 %v167
  %549 = vmatprep.subr.bf16.mxu0 0
  %550 = vmatpush1.bf16.msra.mxu0 %v164
  %551 = vmatprep.subr.bf16.mxu0 0
  %552 = vmatpush1.bf16.msra.mxu0 %v161
  %553 = vmatprep.subr.bf16.mxu0 0
  %554 = vmatpush1.bf16.msra.mxu0 %v158
  %555 = vmatprep.subr.bf16.mxu0 0
  %556 = vmatpush1.bf16.msra.mxu0 %v155
  %557 = vmatprep.subr.bf16.mxu0 0
  %558 = vmatpush1.bf16.msra.mxu0 %v152
  %559 = vmatprep.subr.bf16.mxu0 0
  %560 = vmatpush1.bf16.msra.mxu0 %v149
  %561 = vmatprep.subr.bf16.mxu0 0
  %562 = vmatpush2.bf16.msra.mxu0 0
  %563 = vmatprep.subr.bf16.mxu0 0
  %564 = vmatpush2.bf16.msra.mxu0 0
  %565 = vmatprep.subr.bf16.mxu0 0
  %566 = vmatpush2.bf16.msra.mxu0 0
  %567 = vmatprep.subr.bf16.mxu0 0
  %568 = vmatpush2.bf16.msra.mxu0 0
  %569 = vmatprep.subr.bf16.mxu0 0
  %570 = vmatpush2.bf16.msra.mxu0 0
  %571 = vmatprep.subr.bf16.mxu0 0
  %572 = vmatpush2.bf16.msra.mxu0 0
  %573 = vmatprep.subr.bf16.mxu0 0
  %574 = vmatpush2.bf16.msra.mxu0 0
  %575 = vmatprep.subr.bf16.mxu0 0
  %576 = vmatpush2.bf16.msra.mxu0 0
  %577 = vmatprep.mubr.bf16.mxu0 0
  %578 = vmatmul.mubr.bf16.gmra.mxu0 %v486
  %v579 = vpop.f32.mrf.mxu0
  %v580 = vadd.f32 0.0, %v579
  %v581 = vpop.f32.mrf.mxu0
  %v582 = vpop.f32.mrf.mxu0
  %v583 = vadd.f32 0.0, %v582
  %v584 = vpop.f32.mrf.mxu0
  %585 = vdwg.mxu0
  %v586 = vunpack.c.l.bf16 %v498
  %v587 = vunpack.c.l.bf16 %v500
  %v588 = vadd.f32 %v586, %v537
  %v589 = vadd.f32 %v587, %v541
  %v590 = vxor.u32 %v588, 2147483648
  %v591 = vxor.u32 %v589, 2147483648
  %v592 = vmul.f32 %v590, 1.442695
  %v593 = vpow.pop %v592
  %v594 = vmul.f32 %v591, 1.442695
  %v595 = vpow.pop %v594
  %v596 = vadd.f32 %v593, 1.0
  %v597 = vadd.f32 %v595, 1.0
  %v598 = vrcp.pop %v596
  %v599 = vmul.f32 1.0, %v598
  %v600 = vrcp.pop %v597
  %v601 = vmul.f32 1.0, %v600
  %v604 = vrot.slane %v498, 4
  %v605 = vrot.slane %v500, 4
  %v608 = vunpack.c.l.bf16 %v604
  %v609 = vunpack.c.l.bf16 %v605
  %v610 = vadd.f32 %v608, %v539
  %v611 = vadd.f32 %v609, %v543
  %v612 = vxor.u32 %v610, 2147483648
  %v613 = vxor.u32 %v611, 2147483648
  %v614 = vmul.f32 %v612, 1.442695
  %v615 = vpow.pop %v614
  %v616 = vmul.f32 %v613, 1.442695
  %v617 = vpow.pop %v616
  %v618 = vadd.f32 %v615, 1.0
  %v619 = vadd.f32 %v617, 1.0
  %v620 = vrcp.pop %v618
  %v621 = vmul.f32 1.0, %v620
  %v622 = vrcp.pop %v619
  %v623 = vmul.f32 1.0, %v622
  %v624 = vunpack.c.l.bf16 %v499
  %v625 = vunpack.c.l.bf16 %v501
  %v626 = vadd.f32 %v580, %v58
  %v627 = vadd.f32 %v583, %v58
  %v628 = vmul.f32 %v599, %v626
  %v629 = vmul.f32 %v601, %v627
  %v630 = vadd.f32 %v624, %v628
  %v631 = vadd.f32 %v625, %v629
  %v632 = vtanh.pop %v630
  %v633 = vtanh.pop %v631
  %v634 = vsub.f32 %v484, %v632
  %v635 = vsub.f32 %v485, %v633
  %v636 = vmul.f32 %v621, %v634
  %v637 = vmul.f32 %v623, %v635
  %v638 = vadd.f32 %v632, %v636
  %v639 = vadd.f32 %v633, %v637
  %v640 = vpack.c.bf16 %v639, %v638
  %v642 = vunpack.c.l.b16 %v640
  %v643 = vunpack.c.h.b16 %v640
  %v644 = vpack.c.b16 %v642, %v642
  %v645 = vpack.c.b16 %v643, %v643
  %s648 = scalar_lea.vmem %s3, 16
  %649 = vst [vmem:[%s648] sm:$0xf] %v644
  %650 = vst [vmem:[%s648 + $0x4] sm:$0xf] %v645
  %s651 = scalar_lea.vmem %s0, 72
  %v652 = vld [vmem:[%s651] sm:$0xff]
  %v653 = vld [vmem:[%s651 + $0x8] sm:$0xf]
  %v654 = vld [vmem:[%s651 + $0xc] sm:$0xff]
  %v655 = vld [vmem:[%s651 + $0x14] sm:$0xf]
  %656 = vmatprep.subr.bf16.mxu0 %v169
  %657 = vmatpush1.bf16.msra.mxu0 %v168
  %658 = vmatprep.subr.bf16.mxu0 %v166
  %659 = vmatpush1.bf16.msra.mxu0 %v165
  %660 = vmatprep.subr.bf16.mxu0 %v163
  %661 = vmatpush1.bf16.msra.mxu0 %v162
  %662 = vmatprep.subr.bf16.mxu0 %v160
  %663 = vmatpush1.bf16.msra.mxu0 %v159
  %664 = vmatprep.subr.bf16.mxu0 %v157
  %665 = vmatpush1.bf16.msra.mxu0 %v156
  %666 = vmatprep.subr.bf16.mxu0 %v154
  %667 = vmatpush1.bf16.msra.mxu0 %v153
  %668 = vmatprep.subr.bf16.mxu0 %v151
  %669 = vmatpush1.bf16.msra.mxu0 %v150
  %670 = vmatprep.subr.bf16.mxu0 %v148
  %671 = vmatpush1.bf16.msra.mxu0 %v147
  %672 = vmatprep.subr.bf16.mxu0 0
  %673 = vmatpush2.bf16.msra.mxu0 0
  %674 = vmatprep.subr.bf16.mxu0 0
  %675 = vmatpush2.bf16.msra.mxu0 0
  %676 = vmatprep.subr.bf16.mxu0 0
  %677 = vmatpush2.bf16.msra.mxu0 0
  %678 = vmatprep.subr.bf16.mxu0 0
  %679 = vmatpush2.bf16.msra.mxu0 0
  %680 = vmatprep.subr.bf16.mxu0 0
  %681 = vmatpush2.bf16.msra.mxu0 0
  %682 = vmatprep.subr.bf16.mxu0 0
  %683 = vmatpush2.bf16.msra.mxu0 0
  %684 = vmatprep.subr.bf16.mxu0 0
  %685 = vmatpush2.bf16.msra.mxu0 0
  %686 = vmatprep.subr.bf16.mxu0 0
  %687 = vmatpush2.bf16.msra.mxu0 0
  %688 = vmatprep.mubr.bf16.mxu0 0
  %689 = vmatmul.mubr.bf16.gmra.mxu0 %v640
  %v690 = vpop.f32.mrf.mxu0
  %v691 = vadd.f32 0.0, %v690
  %v692 = vpop.f32.mrf.mxu0
  %v693 = vadd.f32 0.0, %v692
  %v694 = vpop.f32.mrf.mxu0
  %v695 = vadd.f32 0.0, %v694
  %v696 = vpop.f32.mrf.mxu0
  %v697 = vadd.f32 0.0, %v696
  %698 = vdwg.mxu0
  %699 = vmatprep.subr.bf16.mxu0 0
  %700 = vmatpush1.bf16.msra.mxu0 %v170
  %701 = vmatprep.subr.bf16.mxu0 0
  %702 = vmatpush1.bf16.msra.mxu0 %v167
  %703 = vmatprep.subr.bf16.mxu0 0
  %704 = vmatpush1.bf16.msra.mxu0 %v164
  %705 = vmatprep.subr.bf16.mxu0 0
  %706 = vmatpush1.bf16.msra.mxu0 %v161
  %707 = vmatprep.subr.bf16.mxu0 0
  %708 = vmatpush1.bf16.msra.mxu0 %v158
  %709 = vmatprep.subr.bf16.mxu0 0
  %710 = vmatpush1.bf16.msra.mxu0 %v155
  %711 = vmatprep.subr.bf16.mxu0 0
  %712 = vmatpush1.bf16.msra.mxu0 %v152
  %713 = vmatprep.subr.bf16.mxu0 0
  %714 = vmatpush1.bf16.msra.mxu0 %v149
  %715 = vmatprep.subr.bf16.mxu0 0
  %716 = vmatpush2.bf16.msra.mxu0 0
  %717 = vmatprep.subr.bf16.mxu0 0
  %718 = vmatpush2.bf16.msra.mxu0 0
  %719 = vmatprep.subr.bf16.mxu0 0
  %720 = vmatpush2.bf16.msra.mxu0 0
  %721 = vmatprep.subr.bf16.mxu0 0
  %722 = vmatpush2.bf16.msra.mxu0 0
  %723 = vmatprep.subr.bf16.mxu0 0
  %724 = vmatpush2.bf16.msra.mxu0 0
  %725 = vmatprep.subr.bf16.mxu0 0
  %726 = vmatpush2.bf16.msra.mxu0 0
  %727 = vmatprep.subr.bf16.mxu0 0
  %728 = vmatpush2.bf16.msra.mxu0 0
  %729 = vmatprep.subr.bf16.mxu0 0
  %730 = vmatpush2.bf16.msra.mxu0 0
  %731 = vmatprep.mubr.bf16.mxu0 0
  %732 = vmatmul.mubr.bf16.gmra.mxu0 %v640
  %v733 = vpop.f32.mrf.mxu0
  %v734 = vadd.f32 0.0, %v733
  %v735 = vpop.f32.mrf.mxu0
  %v736 = vpop.f32.mrf.mxu0
  %v737 = vadd.f32 0.0, %v736
  %v738 = vpop.f32.mrf.mxu0
  %739 = vdwg.mxu0
  %v740 = vunpack.c.l.bf16 %v652
  %v741 = vunpack.c.l.bf16 %v654
  %v742 = vadd.f32 %v740, %v691
  %v743 = vadd.f32 %v741, %v695
  %v744 = vxor.u32 %v742, 2147483648
  %v745 = vxor.u32 %v743, 2147483648
  %v746 = vmul.f32 %v744, 1.442695
  %v747 = vpow.pop %v746
  %v748 = vmul.f32 %v745, 1.442695
  %v749 = vpow.pop %v748
  %v750 = vadd.f32 %v747, 1.0
  %v751 = vadd.f32 %v749, 1.0
  %v752 = vrcp.pop %v750
  %v753 = vmul.f32 1.0, %v752
  %v754 = vrcp.pop %v751
  %v755 = vmul.f32 1.0, %v754
  %v758 = vrot.slane %v652, 4
  %v759 = vrot.slane %v654, 4
  %v762 = vunpack.c.l.bf16 %v758
  %v763 = vunpack.c.l.bf16 %v759
  %v764 = vadd.f32 %v762, %v693
  %v765 = vadd.f32 %v763, %v697
  %v766 = vxor.u32 %v764, 2147483648
  %v767 = vxor.u32 %v765, 2147483648
  %v768 = vmul.f32 %v766, 1.442695
  %v769 = vpow.pop %v768
  %v770 = vmul.f32 %v767, 1.442695
  %v771 = vpow.pop %v770
  %v772 = vadd.f32 %v769, 1.0
  %v773 = vadd.f32 %v771, 1.0
  %v774 = vrcp.pop %v772
  %v775 = vmul.f32 1.0, %v774
  %v776 = vrcp.pop %v773
  %v777 = vmul.f32 1.0, %v776
  %v778 = vunpack.c.l.bf16 %v653
  %v779 = vunpack.c.l.bf16 %v655
  %v780 = vadd.f32 %v734, %v58
  %v781 = vadd.f32 %v737, %v58
  %v782 = vmul.f32 %v753, %v780
  %v783 = vmul.f32 %v755, %v781
  %v784 = vadd.f32 %v778, %v782
  %v785 = vadd.f32 %v779, %v783
  %v786 = vtanh.pop %v784
  %v787 = vtanh.pop %v785
  %v788 = vsub.f32 %v638, %v786
  %v789 = vsub.f32 %v639, %v787
  %v790 = vmul.f32 %v775, %v788
  %v791 = vmul.f32 %v777, %v789
  %v792 = vadd.f32 %v786, %v790
  %v793 = vadd.f32 %v787, %v791
  %v794 = vpack.c.bf16 %v793, %v792
  %v796 = vunpack.c.l.b16 %v794
  %v797 = vunpack.c.h.b16 %v794
  %v798 = vpack.c.b16 %v796, %v796
  %v799 = vpack.c.b16 %v797, %v797
  %s802 = scalar_lea.vmem %s3, 24
  %803 = vst [vmem:[%s802] sm:$0xf] %v798
  %804 = vst [vmem:[%s802 + $0x4] sm:$0xf] %v799
  %s805 = scalar_lea.vmem %s0, 96
  %v806 = vld [vmem:[%s805] sm:$0xff]
  %v807 = vld [vmem:[%s805 + $0x8] sm:$0xf]
  %v808 = vld [vmem:[%s805 + $0xc] sm:$0xff]
  %v809 = vld [vmem:[%s805 + $0x14] sm:$0xf]
  %810 = vmatprep.subr.bf16.mxu0 %v169
  %811 = vmatpush1.bf16.msra.mxu0 %v168
  %812 = vmatprep.subr.bf16.mxu0 %v166
  %813 = vmatpush1.bf16.msra.mxu0 %v165
  %814 = vmatprep.subr.bf16.mxu0 %v163
  %815 = vmatpush1.bf16.msra.mxu0 %v162
  %816 = vmatprep.subr.bf16.mxu0 %v160
  %817 = vmatpush1.bf16.msra.mxu0 %v159
  %818 = vmatprep.subr.bf16.mxu0 %v157
  %819 = vmatpush1.bf16.msra.mxu0 %v156
  %820 = vmatprep.subr.bf16.mxu0 %v154
  %821 = vmatpush1.bf16.msra.mxu0 %v153
  %822 = vmatprep.subr.bf16.mxu0 %v151
  %823 = vmatpush1.bf16.msra.mxu0 %v150
  %824 = vmatprep.subr.bf16.mxu0 %v148
  %825 = vmatpush1.bf16.msra.mxu0 %v147
  %826 = vmatprep.subr.bf16.mxu0 0
  %827 = vmatpush2.bf16.msra.mxu0 0
  %828 = vmatprep.subr.bf16.mxu0 0
  %829 = vmatpush2.bf16.msra.mxu0 0
  %830 = vmatprep.subr.bf16.mxu0 0
  %831 = vmatpush2.bf16.msra.mxu0 0
  %832 = vmatprep.subr.bf16.mxu0 0
  %833 = vmatpush2.bf16.msra.mxu0 0
  %834 = vmatprep.subr.bf16.mxu0 0
  %835 = vmatpush2.bf16.msra.mxu0 0
  %836 = vmatprep.subr.bf16.mxu0 0
  %837 = vmatpush2.bf16.msra.mxu0 0
  %838 = vmatprep.subr.bf16.mxu0 0
  %839 = vmatpush2.bf16.msra.mxu0 0
  %840 = vmatprep.subr.bf16.mxu0 0
  %841 = vmatpush2.bf16.msra.mxu0 0
  %842 = vmatprep.mubr.bf16.mxu0 0
  %843 = vmatmul.mubr.bf16.gmra.mxu0 %v794
  %v844 = vpop.f32.mrf.mxu0
  %v845 = vadd.f32 0.0, %v844
  %v846 = vpop.f32.mrf.mxu0
  %v847 = vadd.f32 0.0, %v846
  %v848 = vpop.f32.mrf.mxu0
  %v849 = vadd.f32 0.0, %v848
  %v850 = vpop.f32.mrf.mxu0
  %v851 = vadd.f32 0.0, %v850
  %852 = vdwg.mxu0
  %853 = vmatprep.subr.bf16.mxu0 0
  %854 = vmatpush1.bf16.msra.mxu0 %v170
  %855 = vmatprep.subr.bf16.mxu0 0
  %856 = vmatpush1.bf16.msra.mxu0 %v167
  %857 = vmatprep.subr.bf16.mxu0 0
  %858 = vmatpush1.bf16.msra.mxu0 %v164
  %859 = vmatprep.subr.bf16.mxu0 0
  %860 = vmatpush1.bf16.msra.mxu0 %v161
  %861 = vmatprep.subr.bf16.mxu0 0
  %862 = vmatpush1.bf16.msra.mxu0 %v158
  %863 = vmatprep.subr.bf16.mxu0 0
  %864 = vmatpush1.bf16.msra.mxu0 %v155
  %865 = vmatprep.subr.bf16.mxu0 0
  %866 = vmatpush1.bf16.msra.mxu0 %v152
  %867 = vmatprep.subr.bf16.mxu0 0
  %868 = vmatpush1.bf16.msra.mxu0 %v149
  %869 = vmatprep.subr.bf16.mxu0 0
  %870 = vmatpush2.bf16.msra.mxu0 0
  %871 = vmatprep.subr.bf16.mxu0 0
  %872 = vmatpush2.bf16.msra.mxu0 0
  %873 = vmatprep.subr.bf16.mxu0 0
  %874 = vmatpush2.bf16.msra.mxu0 0
  %875 = vmatprep.subr.bf16.mxu0 0
  %876 = vmatpush2.bf16.msra.mxu0 0
  %877 = vmatprep.subr.bf16.mxu0 0
  %878 = vmatpush2.bf16.msra.mxu0 0
  %879 = vmatprep.subr.bf16.mxu0 0
  %880 = vmatpush2.bf16.msra.mxu0 0
  %881 = vmatprep.subr.bf16.mxu0 0
  %882 = vmatpush2.bf16.msra.mxu0 0
  %883 = vmatprep.subr.bf16.mxu0 0
  %884 = vmatpush2.bf16.msra.mxu0 0
  %885 = vmatprep.mubr.bf16.mxu0 0
  %886 = vmatmul.mubr.bf16.gmra.mxu0 %v794
  %v887 = vpop.f32.mrf.mxu0
  %v888 = vadd.f32 0.0, %v887
  %v889 = vpop.f32.mrf.mxu0
  %v890 = vpop.f32.mrf.mxu0
  %v891 = vadd.f32 0.0, %v890
  %v892 = vpop.f32.mrf.mxu0
  %893 = vdwg.mxu0
  %v894 = vunpack.c.l.bf16 %v806
  %v895 = vunpack.c.l.bf16 %v808
  %v896 = vadd.f32 %v894, %v845
  %v897 = vadd.f32 %v895, %v849
  %v898 = vxor.u32 %v896, 2147483648
  %v899 = vxor.u32 %v897, 2147483648
  %v900 = vmul.f32 %v898, 1.442695
  %v901 = vpow.pop %v900
  %v902 = vmul.f32 %v899, 1.442695
  %v903 = vpow.pop %v902
  %v904 = vadd.f32 %v901, 1.0
  %v905 = vadd.f32 %v903, 1.0
  %v906 = vrcp.pop %v904
  %v907 = vmul.f32 1.0, %v906
  %v908 = vrcp.pop %v905
  %v909 = vmul.f32 1.0, %v908
  %v912 = vrot.slane %v806, 4
  %v913 = vrot.slane %v808, 4
  %v916 = vunpack.c.l.bf16 %v912
  %v917 = vunpack.c.l.bf16 %v913
  %v918 = vadd.f32 %v916, %v847
  %v919 = vadd.f32 %v917, %v851
  %v920 = vxor.u32 %v918, 2147483648
  %v921 = vxor.u32 %v919, 2147483648
  %v922 = vmul.f32 %v920, 1.442695
  %v923 = vpow.pop %v922
  %v924 = vmul.f32 %v921, 1.442695
  %v925 = vpow.pop %v924
  %v926 = vadd.f32 %v923, 1.0
  %v927 = vadd.f32 %v925, 1.0
  %v928 = vrcp.pop %v926
  %v929 = vmul.f32 1.0, %v928
  %v930 = vrcp.pop %v927
  %v931 = vmul.f32 1.0, %v930
  %v932 = vunpack.c.l.bf16 %v807
  %v933 = vunpack.c.l.bf16 %v809
  %v934 = vadd.f32 %v888, %v58
  %v935 = vadd.f32 %v891, %v58
  %v936 = vmul.f32 %v907, %v934
  %v937 = vmul.f32 %v909, %v935
  %v938 = vadd.f32 %v932, %v936
  %v939 = vadd.f32 %v933, %v937
  %v940 = vtanh.pop %v938
  %v941 = vtanh.pop %v939
  %v942 = vsub.f32 %v792, %v940
  %v943 = vsub.f32 %v793, %v941
  %v944 = vmul.f32 %v929, %v942
  %v945 = vmul.f32 %v931, %v943
  %v946 = vadd.f32 %v940, %v944
  %v947 = vadd.f32 %v941, %v945
  %v948 = vpack.c.bf16 %v947, %v946
  %v950 = vunpack.c.l.b16 %v948
  %v951 = vunpack.c.h.b16 %v948
  %v952 = vpack.c.b16 %v950, %v950
  %v953 = vpack.c.b16 %v951, %v951
  %s956 = scalar_lea.vmem %s3, 32
  %957 = vst [vmem:[%s956] sm:$0xf] %v952
  %958 = vst [vmem:[%s956 + $0x4] sm:$0xf] %v953
  %s959 = scalar_lea.vmem %s0, 120
  %v960 = vld [vmem:[%s959] sm:$0xff]
  %v961 = vld [vmem:[%s959 + $0x8] sm:$0xf]
  %v962 = vld [vmem:[%s959 + $0xc] sm:$0xff]
  %v963 = vld [vmem:[%s959 + $0x14] sm:$0xf]
  %964 = vmatprep.subr.bf16.mxu0 %v169
  %965 = vmatpush1.bf16.msra.mxu0 %v168
  %966 = vmatprep.subr.bf16.mxu0 %v166
  %967 = vmatpush1.bf16.msra.mxu0 %v165
  %968 = vmatprep.subr.bf16.mxu0 %v163
  %969 = vmatpush1.bf16.msra.mxu0 %v162
  %970 = vmatprep.subr.bf16.mxu0 %v160
  %971 = vmatpush1.bf16.msra.mxu0 %v159
  %972 = vmatprep.subr.bf16.mxu0 %v157
  %973 = vmatpush1.bf16.msra.mxu0 %v156
  %974 = vmatprep.subr.bf16.mxu0 %v154
  %975 = vmatpush1.bf16.msra.mxu0 %v153
  %976 = vmatprep.subr.bf16.mxu0 %v151
  %977 = vmatpush1.bf16.msra.mxu0 %v150
  %978 = vmatprep.subr.bf16.mxu0 %v148
  %979 = vmatpush1.bf16.msra.mxu0 %v147
  %980 = vmatprep.subr.bf16.mxu0 0
  %981 = vmatpush2.bf16.msra.mxu0 0
  %982 = vmatprep.subr.bf16.mxu0 0
  %983 = vmatpush2.bf16.msra.mxu0 0
  %984 = vmatprep.subr.bf16.mxu0 0
  %985 = vmatpush2.bf16.msra.mxu0 0
  %986 = vmatprep.subr.bf16.mxu0 0
  %987 = vmatpush2.bf16.msra.mxu0 0
  %988 = vmatprep.subr.bf16.mxu0 0
  %989 = vmatpush2.bf16.msra.mxu0 0
  %990 = vmatprep.subr.bf16.mxu0 0
  %991 = vmatpush2.bf16.msra.mxu0 0
  %992 = vmatprep.subr.bf16.mxu0 0
  %993 = vmatpush2.bf16.msra.mxu0 0
  %994 = vmatprep.subr.bf16.mxu0 0
  %995 = vmatpush2.bf16.msra.mxu0 0
  %996 = vmatprep.mubr.bf16.mxu0 0
  %997 = vmatmul.mubr.bf16.gmra.mxu0 %v948
  %v998 = vpop.f32.mrf.mxu0
  %v999 = vadd.f32 0.0, %v998
  %v1000 = vpop.f32.mrf.mxu0
  %v1001 = vadd.f32 0.0, %v1000
  %v1002 = vpop.f32.mrf.mxu0
  %v1003 = vadd.f32 0.0, %v1002
  %v1004 = vpop.f32.mrf.mxu0
  %v1005 = vadd.f32 0.0, %v1004
  %1006 = vdwg.mxu0
  %1007 = vmatprep.subr.bf16.mxu0 0
  %1008 = vmatpush1.bf16.msra.mxu0 %v170
  %1009 = vmatprep.subr.bf16.mxu0 0
  %1010 = vmatpush1.bf16.msra.mxu0 %v167
  %1011 = vmatprep.subr.bf16.mxu0 0
  %1012 = vmatpush1.bf16.msra.mxu0 %v164
  %1013 = vmatprep.subr.bf16.mxu0 0
  %1014 = vmatpush1.bf16.msra.mxu0 %v161
  %1015 = vmatprep.subr.bf16.mxu0 0
  %1016 = vmatpush1.bf16.msra.mxu0 %v158
  %1017 = vmatprep.subr.bf16.mxu0 0
  %1018 = vmatpush1.bf16.msra.mxu0 %v155
  %1019 = vmatprep.subr.bf16.mxu0 0
  %1020 = vmatpush1.bf16.msra.mxu0 %v152
  %1021 = vmatprep.subr.bf16.mxu0 0
  %1022 = vmatpush1.bf16.msra.mxu0 %v149
  %1023 = vmatprep.subr.bf16.mxu0 0
  %1024 = vmatpush2.bf16.msra.mxu0 0
  %1025 = vmatprep.subr.bf16.mxu0 0
  %1026 = vmatpush2.bf16.msra.mxu0 0
  %1027 = vmatprep.subr.bf16.mxu0 0
  %1028 = vmatpush2.bf16.msra.mxu0 0
  %1029 = vmatprep.subr.bf16.mxu0 0
  %1030 = vmatpush2.bf16.msra.mxu0 0
  %1031 = vmatprep.subr.bf16.mxu0 0
  %1032 = vmatpush2.bf16.msra.mxu0 0
  %1033 = vmatprep.subr.bf16.mxu0 0
  %1034 = vmatpush2.bf16.msra.mxu0 0
  %1035 = vmatprep.subr.bf16.mxu0 0
  %1036 = vmatpush2.bf16.msra.mxu0 0
  %1037 = vmatprep.subr.bf16.mxu0 0
  %1038 = vmatpush2.bf16.msra.mxu0 0
  %1039 = vmatprep.mubr.bf16.mxu0 0
  %1040 = vmatmul.mubr.bf16.gmra.mxu0 %v948
  %v1041 = vpop.f32.mrf.mxu0
  %v1042 = vadd.f32 0.0, %v1041
  %v1043 = vpop.f32.mrf.mxu0
  %v1044 = vpop.f32.mrf.mxu0
  %v1045 = vadd.f32 0.0, %v1044
  %v1046 = vpop.f32.mrf.mxu0
  %1047 = vdwg.mxu0
  %v1048 = vunpack.c.l.bf16 %v960
  %v1049 = vunpack.c.l.bf16 %v962
  %v1050 = vadd.f32 %v1048, %v999
  %v1051 = vadd.f32 %v1049, %v1003
  %v1052 = vxor.u32 %v1050, 2147483648
  %v1053 = vxor.u32 %v1051, 2147483648
  %v1054 = vmul.f32 %v1052, 1.442695
  %v1055 = vpow.pop %v1054
  %v1056 = vmul.f32 %v1053, 1.442695
  %v1057 = vpow.pop %v1056
  %v1058 = vadd.f32 %v1055, 1.0
  %v1059 = vadd.f32 %v1057, 1.0
  %v1060 = vrcp.pop %v1058
  %v1061 = vmul.f32 1.0, %v1060
  %v1062 = vrcp.pop %v1059
  %v1063 = vmul.f32 1.0, %v1062
  %v1066 = vrot.slane %v960, 4
  %v1067 = vrot.slane %v962, 4
  %v1070 = vunpack.c.l.bf16 %v1066
  %v1071 = vunpack.c.l.bf16 %v1067
  %v1072 = vadd.f32 %v1070, %v1001
  %v1073 = vadd.f32 %v1071, %v1005
  %v1074 = vxor.u32 %v1072, 2147483648
  %v1075 = vxor.u32 %v1073, 2147483648
  %v1076 = vmul.f32 %v1074, 1.442695
  %v1077 = vpow.pop %v1076
  %v1078 = vmul.f32 %v1075, 1.442695
  %v1079 = vpow.pop %v1078
  %v1080 = vadd.f32 %v1077, 1.0
  %v1081 = vadd.f32 %v1079, 1.0
  %v1082 = vrcp.pop %v1080
  %v1083 = vmul.f32 1.0, %v1082
  %v1084 = vrcp.pop %v1081
  %v1085 = vmul.f32 1.0, %v1084
  %v1086 = vunpack.c.l.bf16 %v961
  %v1087 = vunpack.c.l.bf16 %v963
  %v1088 = vadd.f32 %v1042, %v58
  %v1089 = vadd.f32 %v1045, %v58
  %v1090 = vmul.f32 %v1061, %v1088
  %v1091 = vmul.f32 %v1063, %v1089
  %v1092 = vadd.f32 %v1086, %v1090
  %v1093 = vadd.f32 %v1087, %v1091
  %v1094 = vtanh.pop %v1092
  %v1095 = vtanh.pop %v1093
  %v1096 = vsub.f32 %v946, %v1094
  %v1097 = vsub.f32 %v947, %v1095
  %v1098 = vmul.f32 %v1083, %v1096
  %v1099 = vmul.f32 %v1085, %v1097
  %v1100 = vadd.f32 %v1094, %v1098
  %v1101 = vadd.f32 %v1095, %v1099
  %v1102 = vpack.c.bf16 %v1101, %v1100
  %v1104 = vunpack.c.l.b16 %v1102
  %v1105 = vunpack.c.h.b16 %v1102
  %v1106 = vpack.c.b16 %v1104, %v1104
  %v1107 = vpack.c.b16 %v1105, %v1105
  %s1110 = scalar_lea.vmem %s3, 40
  %1111 = vst [vmem:[%s1110] sm:$0xf] %v1106
  %1112 = vst [vmem:[%s1110 + $0x4] sm:$0xf] %v1107
  %s1113 = scalar_lea.vmem %s0, 144
  %v1114 = vld [vmem:[%s1113] sm:$0xff]
  %v1115 = vld [vmem:[%s1113 + $0x8] sm:$0xf]
  %v1116 = vld [vmem:[%s1113 + $0xc] sm:$0xff]
  %v1117 = vld [vmem:[%s1113 + $0x14] sm:$0xf]
  %1118 = vmatprep.subr.bf16.mxu0 %v169
  %1119 = vmatpush1.bf16.msra.mxu0 %v168
  %1120 = vmatprep.subr.bf16.mxu0 %v166
  %1121 = vmatpush1.bf16.msra.mxu0 %v165
  %1122 = vmatprep.subr.bf16.mxu0 %v163
  %1123 = vmatpush1.bf16.msra.mxu0 %v162
  %1124 = vmatprep.subr.bf16.mxu0 %v160
  %1125 = vmatpush1.bf16.msra.mxu0 %v159
  %1126 = vmatprep.subr.bf16.mxu0 %v157
  %1127 = vmatpush1.bf16.msra.mxu0 %v156
  %1128 = vmatprep.subr.bf16.mxu0 %v154
  %1129 = vmatpush1.bf16.msra.mxu0 %v153
  %1130 = vmatprep.subr.bf16.mxu0 %v151
  %1131 = vmatpush1.bf16.msra.mxu0 %v150
  %1132 = vmatprep.subr.bf16.mxu0 %v148
  %1133 = vmatpush1.bf16.msra.mxu0 %v147
  %1134 = vmatprep.subr.bf16.mxu0 0
  %1135 = vmatpush2.bf16.msra.mxu0 0
  %1136 = vmatprep.subr.bf16.mxu0 0
  %1137 = vmatpush2.bf16.msra.mxu0 0
  %1138 = vmatprep.subr.bf16.mxu0 0
  %1139 = vmatpush2.bf16.msra.mxu0 0
  %1140 = vmatprep.subr.bf16.mxu0 0
  %1141 = vmatpush2.bf16.msra.mxu0 0
  %1142 = vmatprep.subr.bf16.mxu0 0
  %1143 = vmatpush2.bf16.msra.mxu0 0
  %1144 = vmatprep.subr.bf16.mxu0 0
  %1145 = vmatpush2.bf16.msra.mxu0 0
  %1146 = vmatprep.subr.bf16.mxu0 0
  %1147 = vmatpush2.bf16.msra.mxu0 0
  %1148 = vmatprep.subr.bf16.mxu0 0
  %1149 = vmatpush2.bf16.msra.mxu0 0
  %1150 = vmatprep.mubr.bf16.mxu0 0
  %1151 = vmatmul.mubr.bf16.gmra.mxu0 %v1102
  %v1152 = vpop.f32.mrf.mxu0
  %v1153 = vadd.f32 0.0, %v1152
  %v1154 = vpop.f32.mrf.mxu0
  %v1155 = vadd.f32 0.0, %v1154
  %v1156 = vpop.f32.mrf.mxu0
  %v1157 = vadd.f32 0.0, %v1156
  %v1158 = vpop.f32.mrf.mxu0
  %v1159 = vadd.f32 0.0, %v1158
  %1160 = vdwg.mxu0
  %1161 = vmatprep.subr.bf16.mxu0 0
  %1162 = vmatpush1.bf16.msra.mxu0 %v170
  %1163 = vmatprep.subr.bf16.mxu0 0
  %1164 = vmatpush1.bf16.msra.mxu0 %v167
  %1165 = vmatprep.subr.bf16.mxu0 0
  %1166 = vmatpush1.bf16.msra.mxu0 %v164
  %1167 = vmatprep.subr.bf16.mxu0 0
  %1168 = vmatpush1.bf16.msra.mxu0 %v161
  %1169 = vmatprep.subr.bf16.mxu0 0
  %1170 = vmatpush1.bf16.msra.mxu0 %v158
  %1171 = vmatprep.subr.bf16.mxu0 0
  %1172 = vmatpush1.bf16.msra.mxu0 %v155
  %1173 = vmatprep.subr.bf16.mxu0 0
  %1174 = vmatpush1.bf16.msra.mxu0 %v152
  %1175 = vmatprep.subr.bf16.mxu0 0
  %1176 = vmatpush1.bf16.msra.mxu0 %v149
  %1177 = vmatprep.subr.bf16.mxu0 0
  %1178 = vmatpush2.bf16.msra.mxu0 0
  %1179 = vmatprep.subr.bf16.mxu0 0
  %1180 = vmatpush2.bf16.msra.mxu0 0
  %1181 = vmatprep.subr.bf16.mxu0 0
  %1182 = vmatpush2.bf16.msra.mxu0 0
  %1183 = vmatprep.subr.bf16.mxu0 0
  %1184 = vmatpush2.bf16.msra.mxu0 0
  %1185 = vmatprep.subr.bf16.mxu0 0
  %1186 = vmatpush2.bf16.msra.mxu0 0
  %1187 = vmatprep.subr.bf16.mxu0 0
  %1188 = vmatpush2.bf16.msra.mxu0 0
  %1189 = vmatprep.subr.bf16.mxu0 0
  %1190 = vmatpush2.bf16.msra.mxu0 0
  %1191 = vmatprep.subr.bf16.mxu0 0
  %1192 = vmatpush2.bf16.msra.mxu0 0
  %1193 = vmatprep.mubr.bf16.mxu0 0
  %1194 = vmatmul.mubr.bf16.gmra.mxu0 %v1102
  %v1195 = vpop.f32.mrf.mxu0
  %v1196 = vadd.f32 0.0, %v1195
  %v1197 = vpop.f32.mrf.mxu0
  %v1198 = vpop.f32.mrf.mxu0
  %v1199 = vadd.f32 0.0, %v1198
  %v1200 = vpop.f32.mrf.mxu0
  %1201 = vdwg.mxu0
  %v1202 = vunpack.c.l.bf16 %v1114
  %v1203 = vunpack.c.l.bf16 %v1116
  %v1204 = vadd.f32 %v1202, %v1153
  %v1205 = vadd.f32 %v1203, %v1157
  %v1206 = vxor.u32 %v1204, 2147483648
  %v1207 = vxor.u32 %v1205, 2147483648
  %v1208 = vmul.f32 %v1206, 1.442695
  %v1209 = vpow.pop %v1208
  %v1210 = vmul.f32 %v1207, 1.442695
  %v1211 = vpow.pop %v1210
  %v1212 = vadd.f32 %v1209, 1.0
  %v1213 = vadd.f32 %v1211, 1.0
  %v1214 = vrcp.pop %v1212
  %v1215 = vmul.f32 1.0, %v1214
  %v1216 = vrcp.pop %v1213
  %v1217 = vmul.f32 1.0, %v1216
  %v1220 = vrot.slane %v1114, 4
  %v1221 = vrot.slane %v1116, 4
  %v1224 = vunpack.c.l.bf16 %v1220
  %v1225 = vunpack.c.l.bf16 %v1221
  %v1226 = vadd.f32 %v1224, %v1155
  %v1227 = vadd.f32 %v1225, %v1159
  %v1228 = vxor.u32 %v1226, 2147483648
  %v1229 = vxor.u32 %v1227, 2147483648
  %v1230 = vmul.f32 %v1228, 1.442695
  %v1231 = vpow.pop %v1230
  %v1232 = vmul.f32 %v1229, 1.442695
  %v1233 = vpow.pop %v1232
  %v1234 = vadd.f32 %v1231, 1.0
  %v1235 = vadd.f32 %v1233, 1.0
  %v1236 = vrcp.pop %v1234
  %v1237 = vmul.f32 1.0, %v1236
  %v1238 = vrcp.pop %v1235
  %v1239 = vmul.f32 1.0, %v1238
  %v1240 = vunpack.c.l.bf16 %v1115
  %v1241 = vunpack.c.l.bf16 %v1117
  %v1242 = vadd.f32 %v1196, %v58
  %v1243 = vadd.f32 %v1199, %v58
  %v1244 = vmul.f32 %v1215, %v1242
  %v1245 = vmul.f32 %v1217, %v1243
  %v1246 = vadd.f32 %v1240, %v1244
  %v1247 = vadd.f32 %v1241, %v1245
  %v1248 = vtanh.pop %v1246
  %v1249 = vtanh.pop %v1247
  %v1250 = vsub.f32 %v1100, %v1248
  %v1251 = vsub.f32 %v1101, %v1249
  %v1252 = vmul.f32 %v1237, %v1250
  %v1253 = vmul.f32 %v1239, %v1251
  %v1254 = vadd.f32 %v1248, %v1252
  %v1255 = vadd.f32 %v1249, %v1253
  %v1256 = vpack.c.bf16 %v1255, %v1254
  %v1258 = vunpack.c.l.b16 %v1256
  %v1259 = vunpack.c.h.b16 %v1256
  %v1260 = vpack.c.b16 %v1258, %v1258
  %v1261 = vpack.c.b16 %v1259, %v1259
  %s1264 = scalar_lea.vmem %s3, 48
  %1265 = vst [vmem:[%s1264] sm:$0xf] %v1260
  %1266 = vst [vmem:[%s1264 + $0x4] sm:$0xf] %v1261
  %s1267 = scalar_lea.vmem %s0, 168
  %v1268 = vld [vmem:[%s1267] sm:$0xff]
  %v1269 = vld [vmem:[%s1267 + $0x8] sm:$0xf]
  %v1270 = vld [vmem:[%s1267 + $0xc] sm:$0xff]
  %v1271 = vld [vmem:[%s1267 + $0x14] sm:$0xf]
  %1272 = vmatprep.subr.bf16.mxu0 %v169
  %1273 = vmatpush1.bf16.msra.mxu0 %v168
  %1274 = vmatprep.subr.bf16.mxu0 %v166
  %1275 = vmatpush1.bf16.msra.mxu0 %v165
  %1276 = vmatprep.subr.bf16.mxu0 %v163
  %1277 = vmatpush1.bf16.msra.mxu0 %v162
  %1278 = vmatprep.subr.bf16.mxu0 %v160
  %1279 = vmatpush1.bf16.msra.mxu0 %v159
  %1280 = vmatprep.subr.bf16.mxu0 %v157
  %1281 = vmatpush1.bf16.msra.mxu0 %v156
  %1282 = vmatprep.subr.bf16.mxu0 %v154
  %1283 = vmatpush1.bf16.msra.mxu0 %v153
  %1284 = vmatprep.subr.bf16.mxu0 %v151
  %1285 = vmatpush1.bf16.msra.mxu0 %v150
  %1286 = vmatprep.subr.bf16.mxu0 %v148
  %1287 = vmatpush1.bf16.msra.mxu0 %v147
  %1288 = vmatprep.subr.bf16.mxu0 0
  %1289 = vmatpush2.bf16.msra.mxu0 0
  %1290 = vmatprep.subr.bf16.mxu0 0
  %1291 = vmatpush2.bf16.msra.mxu0 0
  %1292 = vmatprep.subr.bf16.mxu0 0
  %1293 = vmatpush2.bf16.msra.mxu0 0
  %1294 = vmatprep.subr.bf16.mxu0 0
  %1295 = vmatpush2.bf16.msra.mxu0 0
  %1296 = vmatprep.subr.bf16.mxu0 0
  %1297 = vmatpush2.bf16.msra.mxu0 0
  %1298 = vmatprep.subr.bf16.mxu0 0
  %1299 = vmatpush2.bf16.msra.mxu0 0
  %1300 = vmatprep.subr.bf16.mxu0 0
  %1301 = vmatpush2.bf16.msra.mxu0 0
  %1302 = vmatprep.subr.bf16.mxu0 0
  %1303 = vmatpush2.bf16.msra.mxu0 0
  %1304 = vmatprep.mubr.bf16.mxu0 0
  %1305 = vmatmul.mubr.bf16.gmra.mxu0 %v1256
  %v1306 = vpop.f32.mrf.mxu0
  %v1307 = vadd.f32 0.0, %v1306
  %v1308 = vpop.f32.mrf.mxu0
  %v1309 = vadd.f32 0.0, %v1308
  %v1310 = vpop.f32.mrf.mxu0
  %v1311 = vadd.f32 0.0, %v1310
  %v1312 = vpop.f32.mrf.mxu0
  %v1313 = vadd.f32 0.0, %v1312
  %1314 = vdwg.mxu0
  %1315 = vmatprep.subr.bf16.mxu0 0
  %1316 = vmatpush1.bf16.msra.mxu0 %v170
  %1317 = vmatprep.subr.bf16.mxu0 0
  %1318 = vmatpush1.bf16.msra.mxu0 %v167
  %1319 = vmatprep.subr.bf16.mxu0 0
  %1320 = vmatpush1.bf16.msra.mxu0 %v164
  %1321 = vmatprep.subr.bf16.mxu0 0
  %1322 = vmatpush1.bf16.msra.mxu0 %v161
  %1323 = vmatprep.subr.bf16.mxu0 0
  %1324 = vmatpush1.bf16.msra.mxu0 %v158
  %1325 = vmatprep.subr.bf16.mxu0 0
  %1326 = vmatpush1.bf16.msra.mxu0 %v155
  %1327 = vmatprep.subr.bf16.mxu0 0
  %1328 = vmatpush1.bf16.msra.mxu0 %v152
  %1329 = vmatprep.subr.bf16.mxu0 0
  %1330 = vmatpush1.bf16.msra.mxu0 %v149
  %1331 = vmatprep.subr.bf16.mxu0 0
  %1332 = vmatpush2.bf16.msra.mxu0 0
  %1333 = vmatprep.subr.bf16.mxu0 0
  %1334 = vmatpush2.bf16.msra.mxu0 0
  %1335 = vmatprep.subr.bf16.mxu0 0
  %1336 = vmatpush2.bf16.msra.mxu0 0
  %1337 = vmatprep.subr.bf16.mxu0 0
  %1338 = vmatpush2.bf16.msra.mxu0 0
  %1339 = vmatprep.subr.bf16.mxu0 0
  %1340 = vmatpush2.bf16.msra.mxu0 0
  %1341 = vmatprep.subr.bf16.mxu0 0
  %1342 = vmatpush2.bf16.msra.mxu0 0
  %1343 = vmatprep.subr.bf16.mxu0 0
  %1344 = vmatpush2.bf16.msra.mxu0 0
  %1345 = vmatprep.subr.bf16.mxu0 0
  %1346 = vmatpush2.bf16.msra.mxu0 0
  %1347 = vmatprep.mubr.bf16.mxu0 0
  %1348 = vmatmul.mubr.bf16.gmra.mxu0 %v1256
  %v1349 = vpop.f32.mrf.mxu0
  %v1350 = vadd.f32 0.0, %v1349
  %v1351 = vpop.f32.mrf.mxu0
  %v1352 = vpop.f32.mrf.mxu0
  %v1353 = vadd.f32 0.0, %v1352
  %v1354 = vpop.f32.mrf.mxu0
  %1355 = vdwg.mxu0
  %v1356 = vunpack.c.l.bf16 %v1268
  %v1357 = vunpack.c.l.bf16 %v1270
  %v1358 = vadd.f32 %v1356, %v1307
  %v1359 = vadd.f32 %v1357, %v1311
  %v1360 = vxor.u32 %v1358, 2147483648
  %v1361 = vxor.u32 %v1359, 2147483648
  %v1362 = vmul.f32 %v1360, 1.442695
  %v1363 = vpow.pop %v1362
  %v1364 = vmul.f32 %v1361, 1.442695
  %v1365 = vpow.pop %v1364
  %v1366 = vadd.f32 %v1363, 1.0
  %v1367 = vadd.f32 %v1365, 1.0
  %v1368 = vrcp.pop %v1366
  %v1369 = vmul.f32 1.0, %v1368
  %v1370 = vrcp.pop %v1367
  %v1371 = vmul.f32 1.0, %v1370
  %v1374 = vrot.slane %v1268, 4
  %v1375 = vrot.slane %v1270, 4
  %v1378 = vunpack.c.l.bf16 %v1374
  %v1379 = vunpack.c.l.bf16 %v1375
  %v1380 = vadd.f32 %v1378, %v1309
  %v1381 = vadd.f32 %v1379, %v1313
  %v1382 = vxor.u32 %v1380, 2147483648
  %v1383 = vxor.u32 %v1381, 2147483648
  %v1384 = vmul.f32 %v1382, 1.442695
  %v1385 = vpow.pop %v1384
  %v1386 = vmul.f32 %v1383, 1.442695
  %v1387 = vpow.pop %v1386
  %v1388 = vadd.f32 %v1385, 1.0
  %v1389 = vadd.f32 %v1387, 1.0
  %v1390 = vrcp.pop %v1388
  %v1391 = vmul.f32 1.0, %v1390
  %v1392 = vrcp.pop %v1389
  %v1393 = vmul.f32 1.0, %v1392
  %v1394 = vunpack.c.l.bf16 %v1269
  %v1395 = vunpack.c.l.bf16 %v1271
  %v1396 = vadd.f32 %v1350, %v58
  %v1397 = vadd.f32 %v1353, %v58
  %v1398 = vmul.f32 %v1369, %v1396
  %v1399 = vmul.f32 %v1371, %v1397
  %v1400 = vadd.f32 %v1394, %v1398
  %v1401 = vadd.f32 %v1395, %v1399
  %v1402 = vtanh.pop %v1400
  %v1403 = vtanh.pop %v1401
  %v1404 = vsub.f32 %v1254, %v1402
  %v1405 = vsub.f32 %v1255, %v1403
  %v1406 = vmul.f32 %v1391, %v1404
  %v1407 = vmul.f32 %v1393, %v1405
  %v1408 = vadd.f32 %v1402, %v1406
  %v1409 = vadd.f32 %v1403, %v1407
  %v1410 = vpack.c.bf16 %v1409, %v1408
  %v1412 = vunpack.c.l.b16 %v1410
  %v1413 = vunpack.c.h.b16 %v1410
  %v1414 = vpack.c.b16 %v1412, %v1412
  %v1415 = vpack.c.b16 %v1413, %v1413
  %s1418 = scalar_lea.vmem %s3, 56
  %1419 = vst [vmem:[%s1418] sm:$0xf] %v1414
  %1420 = vst [vmem:[%s1418 + $0x4] sm:$0xf] %v1415
  %1421 = vst [vmem:[#allocation2] sm:$0xff] %v1408
  %1422 = vst [vmem:[#allocation2 + $0x8] sm:$0xff] %v1409
  // Predicated region
  $region18: #{gru_model_forward.6} parent=0 // pred_check
    _
  $region19: #{gru_model_forward.6} parent=0 // pred_check_branch
    %1424 = sbr.rel (0) target = $region21
  $region20: #{gru_model_forward.6} parent=0 // pred_region
    _
  $region21: #{gru_model_forward.6} parent=0 // pred_fallthru
    _
  // Predicated region
  $region22: #{gru_model_forward.6} parent=0 // pred_check
    _
  $region23: #{gru_model_forward.6} parent=0 // pred_check_branch
    %1426 = sbr.rel (0) target = $region25
  $region24: #{gru_model_forward.6} parent=0 // pred_region
    _
  $region25: #{gru_model_forward.6} parent=0 // pred_fallthru
    _

// kernel: gru_model_forward.9
$region0: #{gru_model_forward.9}
  #allocation0 [shape = 'u32[]', space=smem, size = 0x4, offset = 0x4, fixed_abs, tag = 'smem constant byte address 0x4 - core index']
  #allocation1 [shape = 'u32[144,128]{1,0:T(1,128)}', space=vmem, size = 0x12000, scoped, tag = 'internal scratch']
  %s0 = inlined_call_operand.vmem [shape: bf16[8,16,128], index: 0, kind: input, shape index: {}]
  %s1 = inlined_call_operand.vmem [shape: bf16[8,128,128], index: 1, kind: input, shape index: {}]
  %s2 = inlined_call_operand.vmem [shape: f32[1,128], index: 2, kind: input, shape index: {}]
  %s3 = inlined_call_operand.vmem [shape: f32[16,128], index: 3, kind: output, shape index: {}]
  %s4 = sld [smem:[#allocation0]]
  $region49: #{gru_model_forward.9} parent=0
    _
  %s6 = ssub.s32 1, %s4
  %s7 = scalar_select 0, %s6, %s4
  loop: start=0, step=1, limit=10
  $region2: #{gru_model_forward.9} parent=0 // loop_pre_header
    _
  $region3: #{gru_model_forward.9} parent=0 // loop_header
    %s9 = sphi 0, %s13
    %p10 = scmp.ge.s32.totalorder %s9, 10
    %s19 = sphi 0, %s21
    %s22 = sphi 0, %s19
    %s23 = sphi 0, %s22
    %s39 = sphi 0, %s23
    %s45 = sphi 0, %s47
    %s48 = sphi 0, %s45
    %s49 = sphi 0, %s48
    %s65 = sphi 0, %s49
    %s69 = sphi 0, %s69
    %s71 = sphi 0, %s69
    %s72 = sphi 0, %s71
    %s86 = sphi 0, %s72
    %s90 = sphi 0, %s90
    %s92 = sphi 0, %s90
    %s93 = sphi 0, %s92
    %s107 = sphi 0, %s93
  $region4: #{gru_model_forward.9} parent=0 // loop_header_branch
    %12 = sbr.rel (%p10) target = $region8
  $region5: #{gru_model_forward.9} parent=0 // loop_body
    %s14 = ssub.s32 %s9, 1
    %s15 = ssub.s32 %s9, 2
    %s16 = sadd.s32 %s9, 1
    %s17 = ssub.s32 %s9, %s16
    %p18 = scmp.eq.s32.totalorder %s17, 0
    %s20 = sadd.s32 %s19, 1
    %s21 = scalar_select %p18, %s19, %s20
    %p24 = pneg %p18
    %p25 = scmp.eq.s32.totalorder %s9, 7
    %p26 = por %p24, %p25
    %p27 = scmp.ne.s32.totalorder %s19, %s22
    %p28 = scmp.eq.s32.totalorder %s9, 0
    %p29 = por %p27, %p28
    %p30 = scmp.ne.s32.totalorder %s19, %s22
    %p31 = scmp.eq.s32.totalorder %s14, 7
    %p32 = por %p30, %p31
    %p33 = scmp.ne.s32.totalorder %s22, %s23
    %p34 = scmp.eq.s32.totalorder %s14, 0
    %p35 = por %p33, %p34
    %p36 = scmp.ne.s32.totalorder %s22, %s23
    %p37 = scmp.eq.s32.totalorder %s15, 7
    %p38 = por %p36, %p37
    %p40 = scmp.ne.s32.totalorder %s23, %s39
    %p41 = scmp.eq.s32.totalorder %s15, 0
    %p42 = por %p40, %p41
    %s43 = ssub.s32 %s9, %s16
    %p44 = scmp.eq.s32.totalorder %s43, 0
    %s46 = sadd.s32 %s45, 1
    %s47 = scalar_select %p44, %s45, %s46
    %p50 = pneg %p44
    %p51 = scmp.eq.s32.totalorder %s9, 7
    %p52 = por %p50, %p51
    %p53 = scmp.ne.s32.totalorder %s45, %s48
    %p54 = scmp.eq.s32.totalorder %s9, 0
    %p55 = por %p53, %p54
    %p56 = scmp.ne.s32.totalorder %s45, %s48
    %p57 = scmp.eq.s32.totalorder %s14, 7
    %p58 = por %p56, %p57
    %p59 = scmp.ne.s32.totalorder %s48, %s49
    %p60 = scmp.eq.s32.totalorder %s14, 0
    %p61 = por %p59, %p60
    %p62 = scmp.ne.s32.totalorder %s48, %s49
    %p63 = scmp.eq.s32.totalorder %s15, 7
    %p64 = por %p62, %p63
    %p66 = scmp.ne.s32.totalorder %s49, %s65
    %p67 = scmp.eq.s32.totalorder %s15, 0
    %p68 = por %p66, %p67
    %s70 = sadd.s32 %s69, 1
    %p73 = scmp.eq.s32.totalorder %s9, 7
    %p74 = scmp.ne.s32.totalorder %s69, %s71
    %p75 = scmp.eq.s32.totalorder %s9, 0
    %p76 = por %p74, %p75
    %p77 = scmp.ne.s32.totalorder %s69, %s71
    %p78 = scmp.eq.s32.totalorder %s14, 7
    %p79 = por %p77, %p78
    %p80 = scmp.ne.s32.totalorder %s71, %s72
    %p81 = scmp.eq.s32.totalorder %s14, 0
    %p82 = por %p80, %p81
    %p83 = scmp.ne.s32.totalorder %s71, %s72
    %p84 = scmp.eq.s32.totalorder %s15, 7
    %p85 = por %p83, %p84
    %p87 = scmp.ne.s32.totalorder %s72, %s86
    %p88 = scmp.eq.s32.totalorder %s15, 0
    %p89 = por %p87, %p88
    %s91 = sadd.s32 %s90, 1
    %p94 = scmp.eq.s32.totalorder %s9, 7
    %p95 = scmp.ne.s32.totalorder %s90, %s92
    %p96 = scmp.eq.s32.totalorder %s9, 0
    %p97 = por %p95, %p96
    %p98 = scmp.ne.s32.totalorder %s90, %s92
    %p99 = scmp.eq.s32.totalorder %s14, 7
    %p100 = por %p98, %p99
    %p101 = scmp.ne.s32.totalorder %s92, %s93
    %p102 = scmp.eq.s32.totalorder %s14, 0
    %p103 = por %p101, %p102
    %p104 = scmp.ne.s32.totalorder %s92, %s93
    %p105 = scmp.eq.s32.totalorder %s15, 7
    %p106 = por %p104, %p105
    %p108 = scmp.ne.s32.totalorder %s93, %s107
    %p109 = scmp.eq.s32.totalorder %s15, 0
    %p110 = por %p108, %p109
    %p111 = scmp.le.s32.totalorder 1, %s9
    %p112 = scmp.lt.s32.totalorder %s9, 9
    %p113 = pnand %p111, %p112
    %p114 = pneg %p113
    // Predicated region
    $region9: #{gru_model_forward.9} parent=5 // pred_check
      _
    $region10: #{gru_model_forward.9} parent=5 // pred_check_branch
      %116 = sbr.rel (%p113) target = $region12
    $region11: #{gru_model_forward.9} parent=5 // pred_region
      %s117 = ssub.s32 %s9, 1
      // Predicated region
      $region13: #{gru_model_forward.9} parent=11 // pred_check
        %p118 = pneg %p82
      $region14: #{gru_model_forward.9} parent=11 // pred_check_branch
        %120 = sbr.rel (%p118) target = $region16
      $region15: #{gru_model_forward.9} parent=11 // pred_region
        _
      $region16: #{gru_model_forward.9} parent=11 // pred_fallthru
        _
    $region12: #{gru_model_forward.9} parent=5 // pred_fallthru
      _
    %p121 = scmp.lt.s32.totalorder %s9, 8
    // Predicated region
    $region17: #{gru_model_forward.9} parent=5 // pred_check
      %p122 = pneg %p121
    $region18: #{gru_model_forward.9} parent=5 // pred_check_branch
      %124 = sbr.rel (%p122) target = $region20
    $region19: #{gru_model_forward.9} parent=5 // pred_region
      // Predicated region
      $region21: #{gru_model_forward.9} parent=19 // pred_check
        %p125 = pneg %p29
      $region22: #{gru_model_forward.9} parent=19 // pred_check_branch
        %127 = sbr.rel (%p125) target = $region24
      $region23: #{gru_model_forward.9} parent=19 // pred_region
        %p128 = scmp.lt.s32.totalorder %s9, 7
        %s129 = scalar_select %p128, %s9, 7
        %s130 = smul.addr %s129, 2
        %s131 = smul.addr %s130, 4
        %s132 = scalar_lea.vmem %s0, %s131
      $region24: #{gru_model_forward.9} parent=19 // pred_fallthru
        _
      // Predicated region
      $region25: #{gru_model_forward.9} parent=19 // pred_check
        %p133 = pneg %p55
      $region26: #{gru_model_forward.9} parent=19 // pred_check_branch
        %135 = sbr.rel (%p133) target = $region28
      $region27: #{gru_model_forward.9} parent=19 // pred_region
        %p136 = scmp.lt.s32.totalorder %s9, 7
        %s137 = scalar_select %p136, %s9, 7
        %s138 = smul.addr %s137, 16
        %s139 = smul.addr %s138, 4
        %s140 = scalar_lea.vmem %s1, %s139
      $region28: #{gru_model_forward.9} parent=19 // pred_fallthru
        _
    $region20: #{gru_model_forward.9} parent=5 // pred_fallthru
      _
    %p141 = scmp.le.s32.totalorder 1, %s9
    %p142 = scmp.lt.s32.totalorder %s9, 9
    %p143 = pnand %p141, %p142
    %p144 = pneg %p143
    // Predicated region
    $region29: #{gru_model_forward.9} parent=5 // pred_check
      _
    $region30: #{gru_model_forward.9} parent=5 // pred_check_branch
      %146 = sbr.rel (%p143) target = $region32
    $region31: #{gru_model_forward.9} parent=5 // pred_region
      %s147 = ssub.s32 %s9, 1
      %p148 = scmp.lt.s32.totalorder %s14, 7
      %s149 = scalar_select %p148, %s14, 7
      %s150 = smul.addr %s149, 2
      %s151 = smul.addr %s150, 4
      %s152 = scalar_lea.vmem %s0, %s151
      %p153 = pneg %p35
      %p154 = pneg %p32
      %p155 = scmp.lt.s32.totalorder %s14, 7
      %s156 = scalar_select %p155, %s14, 7
      %s157 = smul.addr %s156, 16
      %s158 = smul.addr %s157, 4
      %s159 = scalar_lea.vmem %s1, %s158
      %p160 = pneg %p61
      %p161 = pneg %p58
      %p162 = pneg %p82
      %p163 = pneg %p79
      %p164 = pneg %p103
      %p165 = pneg %p100
      %p166 = scmp.lt.s32.totalorder %s14, 7
      %s167 = scalar_select %p166, %s14, 7
      %s168 = smul.addr %s167, 2
      %s169 = smul.addr %s168, 4
      %s170 = scalar_lea.vmem %s0, %s169
      %p171 = scmp.lt.s32.totalorder %s14, 7
      %s172 = scalar_select %p171, %s14, 7
      %s173 = smul.addr %s172, 16
      %s174 = smul.addr %s173, 4
      %s175 = scalar_lea.vmem %s1, %s174
      %p177 = scmp.eq.s32.totalorder %s14, 0
      // Predicated region
      $region33: #{gru_model_forward.9} parent=31 // pred_check
        %p178 = pneg %p177
      $region34: #{gru_model_forward.9} parent=31 // pred_check_branch
        %180 = sbr.rel (%p178) target = $region36
      $region35: #{gru_model_forward.9} parent=31 // pred_region
        %v181 = vld [vmem:[%s2] sm:$0x1]
        %v183 = vlaneseq
        %v184 = vshrl.u32 %v183, 7
        %v185 = vsub.s32 0, %v184
        %v186 = vrot.slane %v181, %v185
        %188 = vst [vmem:[%s3] sm:$0xff] %v186
        %189 = vst [vmem:[%s3 + $0x8] sm:$0xff] %v186
      $region36: #{gru_model_forward.9} parent=31 // pred_fallthru
        _
      %v190 = vld [vmem:[%s3] sm:$0xff]
      %v191 = vld [vmem:[%s3 + $0x8] sm:$0xff]
      %v192 = vld [vmem:[%s170] sm:$0xf]
      %v193 = vld [vmem:[%s170 + $0x4] sm:$0xf]
      %v194 = vld [vmem:[%s175] sm:$0xf]
      %v195 = vld [vmem:[%s175 + $0x4] sm:$0xf]
      %v196 = vld [vmem:[%s175 + $0x8] sm:$0xf]
      %v197 = vld [vmem:[%s175 + $0xc] sm:$0xf]
      %v198 = vld [vmem:[%s175 + $0x10] sm:$0xf]
      %v199 = vld [vmem:[%s175 + $0x14] sm:$0xf]
      %v200 = vld [vmem:[%s175 + $0x18] sm:$0xf]
      %v201 = vld [vmem:[%s175 + $0x1c] sm:$0xf]
      %v202 = vld [vmem:[%s175 + $0x20] sm:$0xf]
      %v203 = vld [vmem:[%s175 + $0x24] sm:$0xf]
      %v204 = vld [vmem:[%s175 + $0x28] sm:$0xf]
      %v205 = vld [vmem:[%s175 + $0x2c] sm:$0xf]
      %v206 = vld [vmem:[%s175 + $0x30] sm:$0xf]
      %v207 = vld [vmem:[%s175 + $0x34] sm:$0xf]
      %v208 = vld [vmem:[%s175 + $0x38] sm:$0xf]
      %v209 = vld [vmem:[%s175 + $0x3c] sm:$0xf]
      %v212 = vunpack.c.l.b16 %v192
      %v213 = vunpack.c.l.b16 %v193
      %v214 = vpack.c.b16 %v213, %v212
      %v232 = vunpack.c.l.b16 %v194
      %v233 = vunpack.c.l.b16 %v195
      %v234 = vunpack.c.l.b16 %v196
      %v235 = vunpack.c.l.b16 %v197
      %v236 = vunpack.c.l.b16 %v198
      %v237 = vunpack.c.l.b16 %v199
      %v238 = vunpack.c.l.b16 %v200
      %v239 = vunpack.c.l.b16 %v201
      %v240 = vunpack.c.l.b16 %v202
      %v241 = vunpack.c.l.b16 %v203
      %v242 = vunpack.c.l.b16 %v204
      %v243 = vunpack.c.l.b16 %v205
      %v244 = vunpack.c.l.b16 %v206
      %v245 = vunpack.c.l.b16 %v207
      %v246 = vunpack.c.l.b16 %v208
      %v247 = vunpack.c.l.b16 %v209
      %v248 = vpack.c.b16 %v233, %v232
      %v249 = vpack.c.b16 %v235, %v234
      %v250 = vpack.c.b16 %v237, %v236
      %v251 = vpack.c.b16 %v239, %v238
      %v252 = vpack.c.b16 %v241, %v240
      %v253 = vpack.c.b16 %v243, %v242
      %v254 = vpack.c.b16 %v245, %v244
      %v255 = vpack.c.b16 %v247, %v246
      %264 = vmatprep.subr.bf16.mxu0 0
      %265 = vmatpush1.bf16.msra.mxu0 %v255
      %266 = vmatprep.subr.bf16.mxu0 0
      %267 = vmatpush1.bf16.msra.mxu0 %v254
      %268 = vmatprep.subr.bf16.mxu0 0
      %269 = vmatpush1.bf16.msra.mxu0 %v253
      %270 = vmatprep.subr.bf16.mxu0 0
      %271 = vmatpush1.bf16.msra.mxu0 %v252
      %272 = vmatprep.subr.bf16.mxu0 0
      %273 = vmatpush1.bf16.msra.mxu0 %v251
      %274 = vmatprep.subr.bf16.mxu0 0
      %275 = vmatpush1.bf16.msra.mxu0 %v250
      %276 = vmatprep.subr.bf16.mxu0 0
      %277 = vmatpush1.bf16.msra.mxu0 %v249
      %278 = vmatprep.subr.bf16.mxu0 0
      %279 = vmatpush1.bf16.msra.mxu0 %v248
      %280 = vmatprep.subr.bf16.mxu0 0
      %281 = vmatpush2.bf16.msra.mxu0 0
      %282 = vmatprep.subr.bf16.mxu0 0
      %283 = vmatpush2.bf16.msra.mxu0 0
      %284 = vmatprep.subr.bf16.mxu0 0
      %285 = vmatpush2.bf16.msra.mxu0 0
      %286 = vmatprep.subr.bf16.mxu0 0
      %287 = vmatpush2.bf16.msra.mxu0 0
      %288 = vmatprep.subr.bf16.mxu0 0
      %289 = vmatpush2.bf16.msra.mxu0 0
      %290 = vmatprep.subr.bf16.mxu0 0
      %291 = vmatpush2.bf16.msra.mxu0 0
      %292 = vmatprep.subr.bf16.mxu0 0
      %293 = vmatpush2.bf16.msra.mxu0 0
      %294 = vmatprep.subr.bf16.mxu0 0
      %295 = vmatpush2.bf16.msra.mxu0 0
      %296 = vmatprep.mubr.bf16.mxu0 0
      %297 = vmatmul.mubr.bf16.gmra.mxu0 %v214
      %v298 = vpop.f32.mrf.mxu0
      %v299 = vadd.f32 0.0, %v298
      %v300 = vpop.f32.mrf.mxu0
      %v301 = vpop.f32.mrf.mxu0
      %v302 = vadd.f32 0.0, %v301
      %v303 = vpop.f32.mrf.mxu0
      %304 = vdwg.mxu0
      %v305 = vadd.f32 %v190, %v299
      %v306 = vadd.f32 %v191, %v302
      %307 = vst [vmem:[%s3] sm:$0xff] %v305
      %308 = vst [vmem:[%s3 + $0x8] sm:$0xff] %v306
      // Predicated region
      $region37: #{gru_model_forward.9} parent=31 // pred_check
        %p309 = pneg %p100
      $region38: #{gru_model_forward.9} parent=31 // pred_check_branch
        %311 = sbr.rel (%p309) target = $region40
      $region39: #{gru_model_forward.9} parent=31 // pred_region
        _
      $region40: #{gru_model_forward.9} parent=31 // pred_fallthru
        _
      // Predicated region
      $region41: #{gru_model_forward.9} parent=31 // pred_check
        %p312 = pneg %p100
      $region42: #{gru_model_forward.9} parent=31 // pred_check_branch
        %314 = sbr.rel (%p312) target = $region44
      $region43: #{gru_model_forward.9} parent=31 // pred_region
        _
      $region44: #{gru_model_forward.9} parent=31 // pred_fallthru
        _
    $region32: #{gru_model_forward.9} parent=5 // pred_fallthru
      _
    %p315 = scmp.le.s32.totalorder 2, %s9
    // Predicated region
    $region45: #{gru_model_forward.9} parent=5 // pred_check
      %p316 = pneg %p315
    $region46: #{gru_model_forward.9} parent=5 // pred_check_branch
      %318 = sbr.rel (%p316) target = $region48
    $region47: #{gru_model_forward.9} parent=5 // pred_region
      %s319 = ssub.s32 %s9, 2
    $region48: #{gru_model_forward.9} parent=5 // pred_fallthru
      _
  $region6: #{gru_model_forward.9} parent=0 // loop_footer
    %s13 = sadd.s32 1, %s9
  $region7: #{gru_model_forward.9} parent=0 // loop_footer_branch
    %8 = sbr.rel target = $region3
  $region8: #{gru_model_forward.9} parent=0 // loop_exit
    _

</llo_original>
